<compile_context>
chip_gen: v5e
topology: v5e:2x2
jax: 0.10.0
libtpu: 0.0.40
codegen_flags: <defaults>
</compile_context>

<pallas_src>
import functools

import jax
import jax.numpy as jnp
from jax import lax
from jax.experimental import pallas as pl
from jax.experimental.pallas import tpu as pltpu


VMEM_LIMIT_BYTES = 48 * 1024 * 1024   # scoped limit, safe on v5e/v6e/v7x
VMEM_BUDGET_BYTES = 40 * 1024 * 1024  # working-set budget used to size block_t


def _round_up(x, m):
    return (x + m - 1) // m * m


def _row_tile(n, tile_m):
    # >= 2 row blocks whenever possible (v7x megacore), 16-aligned for bf16 tiles,
    # and never padded far past the real row count for tiny batches.
    return min(tile_m, max(16, _round_up(pl.cdiv(n, 2), 16)))


# ----------------------------------------------------------------------------
# Kernel 1: translate Linear + ReLU  (bf16 operands, f32 accumulate, bf16 out)
# ----------------------------------------------------------------------------
def _translate_kernel(e_ref, wt_ref, bt_ref, o_ref):
    h = jnp.maximum(
        jnp.dot(e_ref[...], wt_ref[...], preferred_element_type=jnp.float32)
        + bt_ref[...], 0.0)
    o_ref[...] = h.astype(jnp.bfloat16)


def translate(e_flat, w_tr, b_tr, *, tile_m=1024):
    n, emb = e_flat.shape
    tm = _row_tile(n, tile_m)
    n_pad = _round_up(n, tm)
    if n_pad != n:
        e_flat = jnp.pad(e_flat, ((0, n_pad - n), (0, 0)))
    out = pl.pallas_call(
        _translate_kernel,
        out_shape=jax.ShapeDtypeStruct((n_pad, emb), jnp.bfloat16),
        grid=(n_pad // tm,),
        in_specs=[
            pl.BlockSpec((tm, emb), lambda i: (i, 0)),
            pl.BlockSpec((emb, emb), lambda i: (0, 0)),
            pl.BlockSpec((1, emb), lambda i: (0, 0)),
        ],
        out_specs=pl.BlockSpec((tm, emb), lambda i: (i, 0)),
        compiler_params=pltpu.CompilerParams(
            dimension_semantics=("parallel",),
            vmem_limit_bytes=VMEM_LIMIT_BYTES),
    )(e_flat, w_tr, b_tr.reshape(1, emb))
    return out[:n]


# ----------------------------------------------------------------------------
# Kernel 2: fused input projection + LSTM recurrence + mean/max pooling.
# grid = (batch_blocks [parallel], time_blocks [arbitrary]).
# Per grid step: gates_x for all Tb timesteps is computed up-front (no serial
# dependence) into VMEM scratch; the unrolled recurrence then only needs
# h @ W_hh per step.  h/c/sum/max live in VMEM scratch across time blocks.
# ----------------------------------------------------------------------------
def _lstm_pool_kernel(x_ref, wih_ref, whh_ref, b_ref, o_ref,
                      gx_sc, h_sc, c_sc, sum_sc, max_sc,
                      *, hidden_p, seq_len, block_t):
    t_blk = pl.program_id(1)

    @pl.when(t_blk == 0)
    def _():
        h_sc[...] = jnp.zeros_like(h_sc)
        c_sc[...] = jnp.zeros_like(c_sc)
        sum_sc[...] = jnp.zeros_like(sum_sc)
        max_sc[...] = jnp.full_like(max_sc, -jnp.inf)

    # Hoisted input projection for the whole (Tb, Bb) tile: bf16 MXU matmuls
    # with f32 accumulation, parked in VMEM scratch before the serial chain.
    for t in range(block_t):
        gx_sc[t] = (jnp.dot(x_ref[t], wih_ref[...],
                            preferred_element_type=jnp.float32) + b_ref[...])

    def step(i, carry):
        # W_hh is NOT hoisted into a named value: each dot streams it from
        # VMEM so the 16-step unroll does not pin a huge weight in vregs.
        gates = gx_sc[i] + jnp.dot(h_sc[...].astype(jnp.bfloat16), whh_ref[...],
                                   preferred_element_type=jnp.float32)
        # PyTorch gate order: i, f, g, o  (slices are 128-lane aligned: Hp%128==0)
        # TODO(synk): bf16 gate nonlinearities (faster EUP on v6e/v7x) skipped to
        # keep recurrence error growth minimal; revisit with validation.
        i_g = jax.nn.sigmoid(gates[:, 0 * hidden_p:1 * hidden_p])
        f_g = jax.nn.sigmoid(gates[:, 1 * hidden_p:2 * hidden_p])
        g_g = jnp.tanh(gates[:, 2 * hidden_p:3 * hidden_p])
        o_g = jax.nn.sigmoid(gates[:, 3 * hidden_p:4 * hidden_p])
        c_new = f_g * c_sc[...] + i_g * g_g
        h_new = o_g * jnp.tanh(c_new)
        c_sc[...] = c_new
        h_sc[...] = h_new
        sum_sc[...] = sum_sc[...] + h_new
        max_sc[...] = jnp.maximum(max_sc[...], h_new)
        return carry

    lax.fori_loop(0, block_t, step, 0, unroll=True)

    @pl.when(t_blk == pl.num_programs(1) - 1)
    def _():
        o_ref[:, :hidden_p] = sum_sc[...] * (1.0 / seq_len)   # compile-time scale
        o_ref[:, hidden_p:] = max_sc[...]


def _pick_block_t(seq_len, block_b, emb, hidden_p):
    """Largest divisor of seq_len whose recurrence working set fits the budget."""
    g4 = 4 * hidden_p
    for cand in (32, 16, 8, 4, 2, 1):
        if seq_len % cand:
            continue
        need = (2 * cand * block_b * emb * 2          # double-buffered bf16 x block
                + cand * block_b * g4 * 4             # gates_x VMEM scratch (f32)
                + emb * g4 * 2 + hidden_p * g4 * 2    # W_ih, W_hh (bf16)
                + g4 * 4                              # bias
                + 4 * block_b * hidden_p * 4          # h / c / sum / max scratch
                + 2 * block_b * 2 * hidden_p * 4)     # double-buffered output
        if need <= VMEM_BUDGET_BYTES:
            return cand
    return 1


def lstm_pool(x_tr, w_ih_p, w_hh_p, b_lstm_p, hidden_p, *, block_b, block_t):
    seq_len, bp, emb = x_tr.shape
    g4 = 4 * hidden_p
    kernel = functools.partial(_lstm_pool_kernel, hidden_p=hidden_p,
                               seq_len=seq_len, block_t=block_t)
    return pl.pallas_call(
        kernel,
        out_shape=jax.ShapeDtypeStruct((bp, 2 * hidden_p), jnp.float32),
        grid_spec=pltpu.PrefetchScalarGridSpec(
            num_scalar_prefetch=0,
            grid=(bp // block_b, seq_len // block_t),
            in_specs=[
                pl.BlockSpec((block_t, block_b, emb), lambda b, t: (t, b, 0)),
                pl.BlockSpec((emb, g4), lambda b, t: (0, 0)),
                pl.BlockSpec((hidden_p, g4), lambda b, t: (0, 0)),
                pl.BlockSpec((1, g4), lambda b, t: (0, 0)),
            ],
            out_specs=pl.BlockSpec((block_b, 2 * hidden_p), lambda b, t: (b, 0)),
            scratch_shapes=[
                pltpu.VMEM((block_t, block_b, g4), jnp.float32),  # gates_x
                pltpu.VMEM((block_b, hidden_p), jnp.float32),     # h
                pltpu.VMEM((block_b, hidden_p), jnp.float32),     # c
                pltpu.VMEM((block_b, hidden_p), jnp.float32),     # running sum
                pltpu.VMEM((block_b, hidden_p), jnp.float32),     # running max
            ],
        ),
        compiler_params=pltpu.CompilerParams(
            dimension_semantics=("parallel", "arbitrary"),
            vmem_limit_bytes=VMEM_LIMIT_BYTES),
    )(x_tr, w_ih_p, w_hh_p, b_lstm_p.reshape(1, g4))


# ----------------------------------------------------------------------------
# Kernel 3: MLP head  l_1 -> ReLU -> l_2 -> ReLU -> l_3 -> ReLU -> l_out -> softmax
# (row-tiled "parallel" grid; dropout is identity in eval mode)
# ----------------------------------------------------------------------------
def _mlp_head_kernel(x_ref, w1_ref, b1_ref, w2_ref, b2_ref, w3_ref, b3_ref,
                     wo_ref, o_ref):
    h1 = jnp.maximum(
        jnp.dot(x_ref[...], w1_ref[...], preferred_element_type=jnp.float32)
        + b1_ref[...], 0.0)
    # TODO(synk): nn.Dropout(p=0.35) implemented as identity (eval semantics).
    h2 = jnp.maximum(
        jnp.dot(h1.astype(jnp.bfloat16), w2_ref[...],
                preferred_element_type=jnp.float32) + b2_ref[...], 0.0)
    h3 = jnp.maximum(
        jnp.dot(h2.astype(jnp.bfloat16), w3_ref[...],
                preferred_element_type=jnp.float32) + b3_ref[...], 0.0)
    logits = jnp.dot(h3.astype(jnp.bfloat16), wo_ref[...],
                     preferred_element_type=jnp.float32)
    m = jnp.max(logits, axis=1, keepdims=True)
    e = jnp.exp(logits - m)
    s = jnp.sum(e, axis=1, keepdims=True)
    o_ref[...] = e * pl.reciprocal(s, approx=True)   # EUP reciprocal, no divide


def mlp_head(x, w1, b1, w2, b2, w3, b3, wo, *, tile_m=512):
    n, d_in = x.shape
    c = wo.shape[1]
    tm = _row_tile(n, tile_m)
    n_pad = _round_up(n, tm)
    if n_pad != n:
        x = jnp.pad(x, ((0, n_pad - n), (0, 0)))
    out = pl.pallas_call(
        _mlp_head_kernel,
        out_shape=jax.ShapeDtypeStruct((n_pad, c), jnp.float32),
        grid=(n_pad // tm,),
        in_specs=[
            pl.BlockSpec((tm, d_in), lambda i: (i, 0)),
            pl.BlockSpec(w1.shape, lambda i: (0, 0)),
            pl.BlockSpec((1, w1.shape[1]), lambda i: (0, 0)),
            pl.BlockSpec(w2.shape, lambda i: (0, 0)),
            pl.BlockSpec((1, w2.shape[1]), lambda i: (0, 0)),
            pl.BlockSpec(w3.shape, lambda i: (0, 0)),
            pl.BlockSpec((1, w3.shape[1]), lambda i: (0, 0)),
            pl.BlockSpec(wo.shape, lambda i: (0, 0)),
        ],
        out_specs=pl.BlockSpec((tm, c), lambda i: (i, 0)),
        compiler_params=pltpu.CompilerParams(
            dimension_semantics=("parallel",),
            vmem_limit_bytes=VMEM_LIMIT_BYTES),
    )(x, w1, b1.reshape(1, -1), w2, b2.reshape(1, -1), w3, b3.reshape(1, -1), wo)
    return out[:n]


# ----------------------------------------------------------------------------
# Full forward pass
# ----------------------------------------------------------------------------
def forward(params, premise, hypothesis):
    T, B = premise.shape
    E = params["emb"].shape[1]
    H = params["w_hh"].shape[0]
    Hp = _round_up(H, 128)          # lane-aligned hidden size
    bf16 = jnp.bfloat16

    # --- zero-pad LSTM weights per gate so gate slices are lane-aligned.
    # Padded gate columns produce h_pad == 0 for all t, so padding is exact
    # (relies on the padded b_lstm entries and padded w_hh rows being zero —
    # this helper is the only way those weights are constructed).
    def pad_gate_cols(w):
        lead = w.shape[:-1]
        w4 = w.reshape(lead + (4, H))
        w4 = jnp.pad(w4, [(0, 0)] * len(lead) + [(0, 0), (0, Hp - H)])
        return w4.reshape(lead + (4 * Hp,))

    w_ih_p = pad_gate_cols(params["w_ih"]).astype(bf16)                        # (E, 4Hp)
    w_hh_p = pad_gate_cols(
        jnp.pad(params["w_hh"], ((0, Hp - H), (0, 0)))).astype(bf16)           # (Hp, 4Hp)
    b_lstm_p = pad_gate_cols(params["b_lstm"])                                 # (4Hp,) f32

    # --- stack premise + hypothesis along the batch axis -> one encoder pass.
    tokens = jnp.concatenate([premise, hypothesis], axis=1)                    # (T, 2B)
    two_b = 2 * B
    # Batch blocking: 16-aligned (bf16 sublane tile) and >=2 blocks whenever
    # the batch allows it so v7x's second TensorCore gets work.
    if two_b <= 16:
        Bb = 16
    else:
        Bb = min(256, _round_up(pl.cdiv(_round_up(two_b, 16), 2), 16))
    Bp = _round_up(two_b, Bb)
    if Bp != two_b:
        tokens = jnp.pad(tokens, ((0, 0), (0, Bp - two_b)))

    # VMEM-aware timestep blocking for the recurrence grid.
    Tb = _pick_block_t(T, Bb, E, Hp)

    # embedding gather (glue); activations flow in bf16 from here on.
    # TODO(synk): emb table kept f32 for parity with the reference; a bf16
    # table (or a fused scalar-prefetch row gather) would halve gather traffic.
    e = jnp.take(params["emb"], tokens, axis=0).astype(bf16)                   # (T, Bp, E)

    # translate Linear + ReLU for all T*Bp rows (bf16 intermediate).
    x_tr = translate(e.reshape(T * Bp, E),
                     params["w_tr"].astype(bf16),
                     params["b_tr"]).reshape(T, Bp, E)

    # fused input projection + recurrence + pooling.
    pooled = lstm_pool(x_tr, w_ih_p, w_hh_p, b_lstm_p, Hp,
                       block_b=Bb, block_t=Tb)                                 # (Bp, 2Hp)

    def real_feat(rows):  # (n, 2Hp) -> (n, 2H): drop hidden padding
        return jnp.concatenate([rows[:, :H], rows[:, Hp:Hp + H]], axis=1)

    p_feat = real_feat(pooled[:B])
    h_feat = real_feat(pooled[B:two_b])
    x = jnp.concatenate([p_feat, h_feat], axis=1).astype(bf16)                 # (B, 4H)

    return mlp_head(x,
                    params["w1"].astype(bf16), params["b1"],
                    params["w2"].astype(bf16), params["b2"],
                    params["w3"].astype(bf16), params["b3"],
                    params["wo"].astype(bf16))


# ----------------------------------------------------------------------------
# Pure-JAX reference (f32, for correctness check)
# ----------------------------------------------------------------------------
def forward_ref(params, premise, hypothesis):
    T, B = premise.shape
    H = params["w_hh"].shape[0]

    def encode(tokens):
        e = jnp.take(params["emb"], tokens, axis=0)
        e = jnp.maximum(e @ params["w_tr"] + params["b_tr"], 0.0)

        def step(carry, x_t):
            h, c = carry
            gates = x_t @ params["w_ih"] + h @ params["w_hh"] + params["b_lstm"]
            i = jax.nn.sigmoid(gates[:, 0 * H:1 * H])
            f = jax.nn.sigmoid(gates[:, 1 * H:2 * H])
            g = jnp.tanh(gates[:, 2 * H:3 * H])
            o = jax.nn.sigmoid(gates[:, 3 * H:4 * H])
            c = f * c + i * g
            h = o * jnp.tanh(c)
            return (h, c), h

        init = (jnp.zeros((B, H)), jnp.zeros((B, H)))
        _, hs = jax.lax.scan(step, init, e)                              # (T, B, H)
        return jnp.concatenate([jnp.mean(hs, 0), jnp.max(hs, 0)], axis=1)

    x = jnp.concatenate([encode(premise), encode(hypothesis)], axis=1)
    h1 = jnp.maximum(x @ params["w1"] + params["b1"], 0.0)
    h2 = jnp.maximum(h1 @ params["w2"] + params["b2"], 0.0)
    h3 = jnp.maximum(h2 @ params["w3"] + params["b3"], 0.0)
    return jax.nn.softmax(h3 @ params["wo"], axis=1)


# ----------------------------------------------------------------------------
# Deterministic parameter init + test
# ----------------------------------------------------------------------------
def init_params(key, vocab, emb_dim, hidden, num_classes):
    ks = jax.random.split(key, 12)
    u = lambda k, shape, s=0.1: jax.random.uniform(k, shape, jnp.float32, -s, s)
    return {
        "emb": u(ks[0], (vocab, emb_dim), 1.0),
        "w_tr": u(ks[1], (emb_dim, emb_dim)),
        "b_tr": u(ks[2], (emb_dim,)),
        "w_ih": u(ks[3], (emb_dim, 4 * hidden)),
        "w_hh": u(ks[4], (hidden, 4 * hidden)),
        "b_lstm": u(ks[5], (4 * hidden,)),       # b_ih + b_hh combined (sum on import)
        "w1": u(ks[6], (4 * hidden, 2 * hidden)),
        "b1": u(ks[7], (2 * hidden,)),
        "w2": u(ks[8], (2 * hidden, hidden)),
        "b2": u(ks[9], (hidden,)),
        "w3": u(ks[10], (hidden, hidden)),
        "b3": u(ks[11], (hidden,)),
        "wo": u(jax.random.fold_in(key, 99), (hidden, num_classes)),
    }


if __name__ == "__main__":
    VOCAB, EMB, HIDDEN, NUM_CLASSES = 50, 16, 32, 4
    T, B = 8, 2

    key = jax.random.PRNGKey(0)
    k_par, k_p, k_h = jax.random.split(key, 3)
    params = init_params(k_par, VOCAB, EMB, HIDDEN, NUM_CLASSES)

    premise = jax.random.randint(k_p, (T, B), 0, VOCAB, dtype=jnp.int32)
    hypothesis = jax.random.randint(k_h, (T, B), 0, VOCAB, dtype=jnp.int32)

    fwd = jax.jit(forward)
    out = jax.block_until_ready(fwd(params, premise, hypothesis))
    ref = jax.block_until_ready(forward_ref(params, premise, hypothesis))

    assert out.shape == (B, NUM_CLASSES)
    # Tolerances account for bf16 MXU operands / bf16 intermediates and the
    # approximate EUP reciprocal in the softmax epilogue (f32 reference).
    assert jnp.allclose(jnp.sum(out, axis=1), 1.0, atol=1e-2)
    assert jnp.allclose(out, ref, atol=2e-2, rtol=2e-2)

    print("KERNEL_OK")
</pallas_src>

<mosaic_0001>
module attributes {stable_mosaic.version = 11 : i64} {
  func.func @_translate_kernel(%arg0: i32, %arg1: memref<64x16xbf16, #tpu.memory_space<vmem>>, %arg2: memref<16x16xbf16, #tpu.memory_space<vmem>>, %arg3: memref<1x16xf32, #tpu.memory_space<vmem>>, %arg4: memref<64x16xbf16, #tpu.memory_space<vmem>>) attributes {dimension_semantics = [#tpu.dimension_semantics<parallel>], iteration_bounds = array<i64: 2>, scalar_prefetch = 0 : i64, scratch_operands = 0 : i64, tpu.core_type = #tpu.core_type<tc>, window_params = [{transform_indices = @transform_0, window_bounds = array<i64: 64, 16>}, {pipeline_mode = #tpu.pipeline_mode<synchronous>, transform_indices = @transform_1, window_bounds = array<i64: 16, 16>}, {pipeline_mode = #tpu.pipeline_mode<synchronous>, transform_indices = @transform_2, window_bounds = array<i64: 1, 16>}, {transform_indices = @transform_3, window_bounds = array<i64: 64, 16>}]} {
    %c0 = arith.constant 0 : index
    %c0_0 = arith.constant 0 : index
    %0 = vector.load %arg1[%c0, %c0_0] : memref<64x16xbf16, #tpu.memory_space<vmem>>, vector<64x16xbf16>
    %c0_1 = arith.constant 0 : index
    %c0_2 = arith.constant 0 : index
    %1 = vector.load %arg2[%c0_1, %c0_2] : memref<16x16xbf16, #tpu.memory_space<vmem>>, vector<16x16xbf16>
    %cst = arith.constant dense<0.000000e+00> : vector<64x16xf32>
    %2 = tpu.matmul %0, %1, %cst {dimension_numbers = #tpu.dot_dimension_numbers<[1], [0], [0], [1], [0, 0, 1, 1], [], []>} : vector<64x16xbf16>, vector<16x16xbf16>, vector<64x16xf32> -> vector<64x16xf32>
    %c0_3 = arith.constant 0 : index
    %c0_4 = arith.constant 0 : index
    %3 = vector.load %arg3[%c0_3, %c0_4] : memref<1x16xf32, #tpu.memory_space<vmem>>, vector<1x16xf32>
    %4 = vector.broadcast %3 : vector<1x16xf32> to vector<64x16xf32>
    %5 = arith.addf %2, %4 : vector<64x16xf32>
    %cst_5 = arith.constant 0.000000e+00 : f32
    %6 = vector.broadcast %cst_5 : f32 to vector<64x16xf32>
    %7 = arith.maximumf %5, %6 : vector<64x16xf32>
    %8 = arith.truncf %7 : vector<64x16xf32> to vector<64x16xbf16>
    %c0_6 = arith.constant 0 : index
    %c0_7 = arith.constant 0 : index
    %9 = vector.load %arg4[%c0_6, %c0_7] : memref<64x16xbf16, #tpu.memory_space<vmem>>, vector<64x16xbf16>
    tpu.vector_store %arg4[%c0_6, %c0_7], %8 {strides = array<i32>} : memref<64x16xbf16, #tpu.memory_space<vmem>>, vector<64x16xbf16>,
    return
  }
  func.func @transform_0(%arg0: i32) -> (i32, i32) {
    %c0_i32 = arith.constant 0 : i32
    %c0_i32_0 = arith.constant 0 : i32
    return %arg0, %c0_i32 : i32, i32
  }
  func.func @transform_1(%arg0: i32) -> (i32, i32) {
    %c0_i32 = arith.constant 0 : i32
    %c0_i32_0 = arith.constant 0 : i32
    %c0_i32_1 = arith.constant 0 : i32
    return %c0_i32, %c0_i32_0 : i32, i32
  }
  func.func @transform_2(%arg0: i32) -> (i32, i32) {
    %c0_i32 = arith.constant 0 : i32
    %c0_i32_0 = arith.constant 0 : i32
    %c0_i32_1 = arith.constant 0 : i32
    return %c0_i32, %c0_i32_0 : i32, i32
  }
  func.func @transform_3(%arg0: i32) -> (i32, i32) {
    %c0_i32 = arith.constant 0 : i32
    %c0_i32_0 = arith.constant 0 : i32
    return %arg0, %c0_i32 : i32, i32
  }
}

module attributes {stable_mosaic.version = 11 : i64} {
  func.func @_lstm_pool_kernel(%arg0: i32, %arg1: i32, %arg2: memref<8x16x16xbf16, #tpu.memory_space<vmem>>, %arg3: memref<16x512xbf16, #tpu.memory_space<vmem>>, %arg4: memref<128x512xbf16, #tpu.memory_space<vmem>>, %arg5: memref<1x512xf32, #tpu.memory_space<vmem>>, %arg6: memref<16x256xf32, #tpu.memory_space<vmem>>, %arg7: memref<8x16x512xf32, #tpu.memory_space<vmem>>, %arg8: memref<16x128xf32, #tpu.memory_space<vmem>>, %arg9: memref<16x128xf32, #tpu.memory_space<vmem>>, %arg10: memref<16x128xf32, #tpu.memory_space<vmem>>, %arg11: memref<16x128xf32, #tpu.memory_space<vmem>>) attributes {dimension_semantics = [#tpu.dimension_semantics<parallel>, #tpu.dimension_semantics<arbitrary>], iteration_bounds = array<i64: 1, 1>, scalar_prefetch = 0 : i64, scratch_operands = 5 : i64, tpu.core_type = #tpu.core_type<tc>, window_params = [{transform_indices = @transform_0, window_bounds = array<i64: 8, 16, 16>}, {pipeline_mode = #tpu.pipeline_mode<synchronous>, transform_indices = @transform_1, window_bounds = array<i64: 16, 512>}, {pipeline_mode = #tpu.pipeline_mode<synchronous>, transform_indices = @transform_2, window_bounds = array<i64: 128, 512>}, {pipeline_mode = #tpu.pipeline_mode<synchronous>, transform_indices = @transform_3, window_bounds = array<i64: 1, 512>}, {transform_indices = @transform_4, window_bounds = array<i64: 16, 256>}]} {
    %c0_i32 = arith.constant 0 : i32
    %0 = arith.cmpi eq, %arg1, %c0_i32 : i32
    %1 = arith.extui %0 : i1 to i32
    %c0_i32_0 = arith.constant 0 : i32
    %2 = arith.cmpi ne, %1, %c0_i32_0 : i32
    scf.if %2 {
      %cst_275 = arith.constant 0.000000e+00 : f32
      %422 = vector.broadcast %cst_275 : f32 to vector<16x128xf32>
      %c0_276 = arith.constant 0 : index
      %c0_277 = arith.constant 0 : index
      %423 = vector.load %arg8[%c0_276, %c0_277] : memref<16x128xf32, #tpu.memory_space<vmem>>, vector<16x128xf32>
      tpu.vector_store %arg8[%c0_276, %c0_277], %422 {strides = array<i32>} : memref<16x128xf32, #tpu.memory_space<vmem>>, vector<16x128xf32>,
      %cst_278 = arith.constant 0.000000e+00 : f32
      %424 = vector.broadcast %cst_278 : f32 to vector<16x128xf32>
      %c0_279 = arith.constant 0 : index
      %c0_280 = arith.constant 0 : index
      %425 = vector.load %arg9[%c0_279, %c0_280] : memref<16x128xf32, #tpu.memory_space<vmem>>, vector<16x128xf32>
      tpu.vector_store %arg9[%c0_279, %c0_280], %424 {strides = array<i32>} : memref<16x128xf32, #tpu.memory_space<vmem>>, vector<16x128xf32>,
      %cst_281 = arith.constant 0.000000e+00 : f32
      %426 = vector.broadcast %cst_281 : f32 to vector<16x128xf32>
      %c0_282 = arith.constant 0 : index
      %c0_283 = arith.constant 0 : index
      %427 = vector.load %arg10[%c0_282, %c0_283] : memref<16x128xf32, #tpu.memory_space<vmem>>, vector<16x128xf32>
      tpu.vector_store %arg10[%c0_282, %c0_283], %426 {strides = array<i32>} : memref<16x128xf32, #tpu.memory_space<vmem>>, vector<16x128xf32>,
      %cst_284 = arith.constant 0xFF800000 : f32
      %428 = vector.broadcast %cst_284 : f32 to vector<16x128xf32>
      %c0_285 = arith.constant 0 : index
      %c0_286 = arith.constant 0 : index
      %429 = vector.load %arg11[%c0_285, %c0_286] : memref<16x128xf32, #tpu.memory_space<vmem>>, vector<16x128xf32>
      tpu.vector_store %arg11[%c0_285, %c0_286], %428 {strides = array<i32>} : memref<16x128xf32, #tpu.memory_space<vmem>>, vector<16x128xf32>,
    } else {
    }
    %c0 = arith.constant 0 : index
    %c0_1 = arith.constant 0 : index
    %c0_2 = arith.constant 0 : index
    %3 = vector.load %arg2[%c0, %c0_1, %c0_2] : memref<8x16x16xbf16, #tpu.memory_space<vmem>>, vector<1x16x16xbf16>
    %4 = vector.shape_cast %3 : vector<1x16x16xbf16> to vector<16x16xbf16>
    %c0_3 = arith.constant 0 : index
    %c0_4 = arith.constant 0 : index
    %5 = vector.load %arg3[%c0_3, %c0_4] : memref<16x512xbf16, #tpu.memory_space<vmem>>, vector<16x512xbf16>
    %cst = arith.constant dense<0.000000e+00> : vector<16x512xf32>
    %6 = tpu.matmul %4, %5, %cst {dimension_numbers = #tpu.dot_dimension_numbers<[1], [0], [0], [1], [0, 0, 1, 1], [], []>} : vector<16x16xbf16>, vector<16x512xbf16>, vector<16x512xf32> -> vector<16x512xf32>
    %c0_5 = arith.constant 0 : index
    %c0_6 = arith.constant 0 : index
    %7 = vector.load %arg5[%c0_5, %c0_6] : memref<1x512xf32, #tpu.memory_space<vmem>>, vector<1x512xf32>
    %8 = vector.broadcast %7 : vector<1x512xf32> to vector<16x512xf32>
    %9 = arith.addf %6, %8 : vector<16x512xf32>
    %c0_7 = arith.constant 0 : index
    %c0_8 = arith.constant 0 : index
    %c0_9 = arith.constant 0 : index
    %10 = vector.load %arg7[%c0_7, %c0_8, %c0_9] : memref<8x16x512xf32, #tpu.memory_space<vmem>>, vector<1x16x512xf32>
    %11 = vector.shape_cast %10 : vector<1x16x512xf32> to vector<16x512xf32>
    %12 = vector.shape_cast %9 : vector<16x512xf32> to vector<1x16x512xf32>
    tpu.vector_store %arg7[%c0_7, %c0_8, %c0_9], %12 {strides = array<i32>} : memref<8x16x512xf32, #tpu.memory_space<vmem>>, vector<1x16x512xf32>,
    %c1 = arith.constant 1 : index
    %c0_10 = arith.constant 0 : index
    %c0_11 = arith.constant 0 : index
    %13 = vector.load %arg2[%c1, %c0_10, %c0_11] : memref<8x16x16xbf16, #tpu.memory_space<vmem>>, vector<1x16x16xbf16>
    %14 = vector.shape_cast %13 : vector<1x16x16xbf16> to vector<16x16xbf16>
    %c0_12 = arith.constant 0 : index
    %c0_13 = arith.constant 0 : index
    %15 = vector.load %arg3[%c0_12, %c0_13] : memref<16x512xbf16, #tpu.memory_space<vmem>>, vector<16x512xbf16>
    %cst_14 = arith.constant dense<0.000000e+00> : vector<16x512xf32>
    %16 = tpu.matmul %14, %15, %cst_14 {dimension_numbers = #tpu.dot_dimension_numbers<[1], [0], [0], [1], [0, 0, 1, 1], [], []>} : vector<16x16xbf16>, vector<16x512xbf16>, vector<16x512xf32> -> vector<16x512xf32>
    %c0_15 = arith.constant 0 : index
    %c0_16 = arith.constant 0 : index
    %17 = vector.load %arg5[%c0_15, %c0_16] : memref<1x512xf32, #tpu.memory_space<vmem>>, vector<1x512xf32>
    %18 = vector.broadcast %17 : vector<1x512xf32> to vector<16x512xf32>
    %19 = arith.addf %16, %18 : vector<16x512xf32>
    %c1_17 = arith.constant 1 : index
    %c0_18 = arith.constant 0 : index
    %c0_19 = arith.constant 0 : index
    %20 = vector.load %arg7[%c1_17, %c0_18, %c0_19] : memref<8x16x512xf32, #tpu.memory_space<vmem>>, vector<1x16x512xf32>
    %21 = vector.shape_cast %20 : vector<1x16x512xf32> to vector<16x512xf32>
    %22 = vector.shape_cast %19 : vector<16x512xf32> to vector<1x16x512xf32>
    tpu.vector_store %arg7[%c1_17, %c0_18, %c0_19], %22 {strides = array<i32>} : memref<8x16x512xf32, #tpu.memory_space<vmem>>, vector<1x16x512xf32>,
    %c2 = arith.constant 2 : index
    %c0_20 = arith.constant 0 : index
    %c0_21 = arith.constant 0 : index
    %23 = vector.load %arg2[%c2, %c0_20, %c0_21] : memref<8x16x16xbf16, #tpu.memory_space<vmem>>, vector<1x16x16xbf16>
    %24 = vector.shape_cast %23 : vector<1x16x16xbf16> to vector<16x16xbf16>
    %c0_22 = arith.constant 0 : index
    %c0_23 = arith.constant 0 : index
    %25 = vector.load %arg3[%c0_22, %c0_23] : memref<16x512xbf16, #tpu.memory_space<vmem>>, vector<16x512xbf16>
    %cst_24 = arith.constant dense<0.000000e+00> : vector<16x512xf32>
    %26 = tpu.matmul %24, %25, %cst_24 {dimension_numbers = #tpu.dot_dimension_numbers<[1], [0], [0], [1], [0, 0, 1, 1], [], []>} : vector<16x16xbf16>, vector<16x512xbf16>, vector<16x512xf32> -> vector<16x512xf32>
    %c0_25 = arith.constant 0 : index
    %c0_26 = arith.constant 0 : index
    %27 = vector.load %arg5[%c0_25, %c0_26] : memref<1x512xf32, #tpu.memory_space<vmem>>, vector<1x512xf32>
    %28 = vector.broadcast %27 : vector<1x512xf32> to vector<16x512xf32>
    %29 = arith.addf %26, %28 : vector<16x512xf32>
    %c2_27 = arith.constant 2 : index
    %c0_28 = arith.constant 0 : index
    %c0_29 = arith.constant 0 : index
    %30 = vector.load %arg7[%c2_27, %c0_28, %c0_29] : memref<8x16x512xf32, #tpu.memory_space<vmem>>, vector<1x16x512xf32>
    %31 = vector.shape_cast %30 : vector<1x16x512xf32> to vector<16x512xf32>
    %32 = vector.shape_cast %29 : vector<16x512xf32> to vector<1x16x512xf32>
    tpu.vector_store %arg7[%c2_27, %c0_28, %c0_29], %32 {strides = array<i32>} : memref<8x16x512xf32, #tpu.memory_space<vmem>>, vector<1x16x512xf32>,
    %c3 = arith.constant 3 : index
    %c0_30 = arith.constant 0 : index
    %c0_31 = arith.constant 0 : index
    %33 = vector.load %arg2[%c3, %c0_30, %c0_31] : memref<8x16x16xbf16, #tpu.memory_space<vmem>>, vector<1x16x16xbf16>
    %34 = vector.shape_cast %33 : vector<1x16x16xbf16> to vector<16x16xbf16>
    %c0_32 = arith.constant 0 : index
    %c0_33 = arith.constant 0 : index
    %35 = vector.load %arg3[%c0_32, %c0_33] : memref<16x512xbf16, #tpu.memory_space<vmem>>, vector<16x512xbf16>
    %cst_34 = arith.constant dense<0.000000e+00> : vector<16x512xf32>
    %36 = tpu.matmul %34, %35, %cst_34 {dimension_numbers = #tpu.dot_dimension_numbers<[1], [0], [0], [1], [0, 0, 1, 1], [], []>} : vector<16x16xbf16>, vector<16x512xbf16>, vector<16x512xf32> -> vector<16x512xf32>
    %c0_35 = arith.constant 0 : index
    %c0_36 = arith.constant 0 : index
    %37 = vector.load %arg5[%c0_35, %c0_36] : memref<1x512xf32, #tpu.memory_space<vmem>>, vector<1x512xf32>
    %38 = vector.broadcast %37 : vector<1x512xf32> to vector<16x512xf32>
    %39 = arith.addf %36, %38 : vector<16x512xf32>
    %c3_37 = arith.constant 3 : index
    %c0_38 = arith.constant 0 : index
    %c0_39 = arith.constant 0 : index
    %40 = vector.load %arg7[%c3_37, %c0_38, %c0_39] : memref<8x16x512xf32, #tpu.memory_space<vmem>>, vector<1x16x512xf32>
    %41 = vector.shape_cast %40 : vector<1x16x512xf32> to vector<16x512xf32>
    %42 = vector.shape_cast %39 : vector<16x512xf32> to vector<1x16x512xf32>
    tpu.vector_store %arg7[%c3_37, %c0_38, %c0_39], %42 {strides = array<i32>} : memref<8x16x512xf32, #tpu.memory_space<vmem>>, vector<1x16x512xf32>,
    %c4 = arith.constant 4 : index
    %c0_40 = arith.constant 0 : index
    %c0_41 = arith.constant 0 : index
    %43 = vector.load %arg2[%c4, %c0_40, %c0_41] : memref<8x16x16xbf16, #tpu.memory_space<vmem>>, vector<1x16x16xbf16>
    %44 = vector.shape_cast %43 : vector<1x16x16xbf16> to vector<16x16xbf16>
    %c0_42 = arith.constant 0 : index
    %c0_43 = arith.constant 0 : index
    %45 = vector.load %arg3[%c0_42, %c0_43] : memref<16x512xbf16, #tpu.memory_space<vmem>>, vector<16x512xbf16>
    %cst_44 = arith.constant dense<0.000000e+00> : vector<16x512xf32>
    %46 = tpu.matmul %44, %45, %cst_44 {dimension_numbers = #tpu.dot_dimension_numbers<[1], [0], [0], [1], [0, 0, 1, 1], [], []>} : vector<16x16xbf16>, vector<16x512xbf16>, vector<16x512xf32> -> vector<16x512xf32>
    %c0_45 = arith.constant 0 : index
    %c0_46 = arith.constant 0 : index
    %47 = vector.load %arg5[%c0_45, %c0_46] : memref<1x512xf32, #tpu.memory_space<vmem>>, vector<1x512xf32>
    %48 = vector.broadcast %47 : vector<1x512xf32> to vector<16x512xf32>
    %49 = arith.addf %46, %48 : vector<16x512xf32>
    %c4_47 = arith.constant 4 : index
    %c0_48 = arith.constant 0 : index
    %c0_49 = arith.constant 0 : index
    %50 = vector.load %arg7[%c4_47, %c0_48, %c0_49] : memref<8x16x512xf32, #tpu.memory_space<vmem>>, vector<1x16x512xf32>
    %51 = vector.shape_cast %50 : vector<1x16x512xf32> to vector<16x512xf32>
    %52 = vector.shape_cast %49 : vector<16x512xf32> to vector<1x16x512xf32>
    tpu.vector_store %arg7[%c4_47, %c0_48, %c0_49], %52 {strides = array<i32>} : memref<8x16x512xf32, #tpu.memory_space<vmem>>, vector<1x16x512xf32>,
    %c5 = arith.constant 5 : index
    %c0_50 = arith.constant 0 : index
    %c0_51 = arith.constant 0 : index
    %53 = vector.load %arg2[%c5, %c0_50, %c0_51] : memref<8x16x16xbf16, #tpu.memory_space<vmem>>, vector<1x16x16xbf16>
    %54 = vector.shape_cast %53 : vector<1x16x16xbf16> to vector<16x16xbf16>
    %c0_52 = arith.constant 0 : index
    %c0_53 = arith.constant 0 : index
    %55 = vector.load %arg3[%c0_52, %c0_53] : memref<16x512xbf16, #tpu.memory_space<vmem>>, vector<16x512xbf16>
    %cst_54 = arith.constant dense<0.000000e+00> : vector<16x512xf32>
    %56 = tpu.matmul %54, %55, %cst_54 {dimension_numbers = #tpu.dot_dimension_numbers<[1], [0], [0], [1], [0, 0, 1, 1], [], []>} : vector<16x16xbf16>, vector<16x512xbf16>, vector<16x512xf32> -> vector<16x512xf32>
    %c0_55 = arith.constant 0 : index
    %c0_56 = arith.constant 0 : index
    %57 = vector.load %arg5[%c0_55, %c0_56] : memref<1x512xf32, #tpu.memory_space<vmem>>, vector<1x512xf32>
    %58 = vector.broadcast %57 : vector<1x512xf32> to vector<16x512xf32>
    %59 = arith.addf %56, %58 : vector<16x512xf32>
    %c5_57 = arith.constant 5 : index
    %c0_58 = arith.constant 0 : index
    %c0_59 = arith.constant 0 : index
    %60 = vector.load %arg7[%c5_57, %c0_58, %c0_59] : memref<8x16x512xf32, #tpu.memory_space<vmem>>, vector<1x16x512xf32>
    %61 = vector.shape_cast %60 : vector<1x16x512xf32> to vector<16x512xf32>
    %62 = vector.shape_cast %59 : vector<16x512xf32> to vector<1x16x512xf32>
    tpu.vector_store %arg7[%c5_57, %c0_58, %c0_59], %62 {strides = array<i32>} : memref<8x16x512xf32, #tpu.memory_space<vmem>>, vector<1x16x512xf32>,
    %c6 = arith.constant 6 : index
    %c0_60 = arith.constant 0 : index
    %c0_61 = arith.constant 0 : index
    %63 = vector.load %arg2[%c6, %c0_60, %c0_61] : memref<8x16x16xbf16, #tpu.memory_space<vmem>>, vector<1x16x16xbf16>
    %64 = vector.shape_cast %63 : vector<1x16x16xbf16> to vector<16x16xbf16>
    %c0_62 = arith.constant 0 : index
    %c0_63 = arith.constant 0 : index
    %65 = vector.load %arg3[%c0_62, %c0_63] : memref<16x512xbf16, #tpu.memory_space<vmem>>, vector<16x512xbf16>
    %cst_64 = arith.constant dense<0.000000e+00> : vector<16x512xf32>
    %66 = tpu.matmul %64, %65, %cst_64 {dimension_numbers = #tpu.dot_dimension_numbers<[1], [0], [0], [1], [0, 0, 1, 1], [], []>} : vector<16x16xbf16>, vector<16x512xbf16>, vector<16x512xf32> -> vector<16x512xf32>
    %c0_65 = arith.constant 0 : index
    %c0_66 = arith.constant 0 : index
    %67 = vector.load %arg5[%c0_65, %c0_66] : memref<1x512xf32, #tpu.memory_space<vmem>>, vector<1x512xf32>
    %68 = vector.broadcast %67 : vector<1x512xf32> to vector<16x512xf32>
    %69 = arith.addf %66, %68 : vector<16x512xf32>
    %c6_67 = arith.constant 6 : index
    %c0_68 = arith.constant 0 : index
    %c0_69 = arith.constant 0 : index
    %70 = vector.load %arg7[%c6_67, %c0_68, %c0_69] : memref<8x16x512xf32, #tpu.memory_space<vmem>>, vector<1x16x512xf32>
    %71 = vector.shape_cast %70 : vector<1x16x512xf32> to vector<16x512xf32>
    %72 = vector.shape_cast %69 : vector<16x512xf32> to vector<1x16x512xf32>
    tpu.vector_store %arg7[%c6_67, %c0_68, %c0_69], %72 {strides = array<i32>} : memref<8x16x512xf32, #tpu.memory_space<vmem>>, vector<1x16x512xf32>,
    %c7 = arith.constant 7 : index
    %c0_70 = arith.constant 0 : index
    %c0_71 = arith.constant 0 : index
    %73 = vector.load %arg2[%c7, %c0_70, %c0_71] : memref<8x16x16xbf16, #tpu.memory_space<vmem>>, vector<1x16x16xbf16>
    %74 = vector.shape_cast %73 : vector<1x16x16xbf16> to vector<16x16xbf16>
    %c0_72 = arith.constant 0 : index
    %c0_73 = arith.constant 0 : index
    %75 = vector.load %arg3[%c0_72, %c0_73] : memref<16x512xbf16, #tpu.memory_space<vmem>>, vector<16x512xbf16>
    %cst_74 = arith.constant dense<0.000000e+00> : vector<16x512xf32>
    %76 = tpu.matmul %74, %75, %cst_74 {dimension_numbers = #tpu.dot_dimension_numbers<[1], [0], [0], [1], [0, 0, 1, 1], [], []>} : vector<16x16xbf16>, vector<16x512xbf16>, vector<16x512xf32> -> vector<16x512xf32>
    %c0_75 = arith.constant 0 : index
    %c0_76 = arith.constant 0 : index
    %77 = vector.load %arg5[%c0_75, %c0_76] : memref<1x512xf32, #tpu.memory_space<vmem>>, vector<1x512xf32>
    %78 = vector.broadcast %77 : vector<1x512xf32> to vector<16x512xf32>
    %79 = arith.addf %76, %78 : vector<16x512xf32>
    %c7_77 = arith.constant 7 : index
    %c0_78 = arith.constant 0 : index
    %c0_79 = arith.constant 0 : index
    %80 = vector.load %arg7[%c7_77, %c0_78, %c0_79] : memref<8x16x512xf32, #tpu.memory_space<vmem>>, vector<1x16x512xf32>
    %81 = vector.shape_cast %80 : vector<1x16x512xf32> to vector<16x512xf32>
    %82 = vector.shape_cast %79 : vector<16x512xf32> to vector<1x16x512xf32>
    tpu.vector_store %arg7[%c7_77, %c0_78, %c0_79], %82 {strides = array<i32>} : memref<8x16x512xf32, #tpu.memory_space<vmem>>, vector<1x16x512xf32>,
    %c0_i32_80 = arith.constant 0 : i32
    %83 = arith.index_cast %c0_i32_80 : i32 to index
    %c0_81 = arith.constant 0 : index
    %c0_82 = arith.constant 0 : index
    %84 = vector.load %arg7[%83, %c0_81, %c0_82] : memref<8x16x512xf32, #tpu.memory_space<vmem>>, vector<1x16x512xf32>
    %85 = vector.shape_cast %84 : vector<1x16x512xf32> to vector<16x512xf32>
    %c0_83 = arith.constant 0 : index
    %c0_84 = arith.constant 0 : index
    %86 = vector.load %arg8[%c0_83, %c0_84] : memref<16x128xf32, #tpu.memory_space<vmem>>, vector<16x128xf32>
    %87 = arith.truncf %86 : vector<16x128xf32> to vector<16x128xbf16>
    %c0_85 = arith.constant 0 : index
    %c0_86 = arith.constant 0 : index
    %88 = vector.load %arg4[%c0_85, %c0_86] : memref<128x512xbf16, #tpu.memory_space<vmem>>, vector<128x512xbf16>
    %cst_87 = arith.constant dense<0.000000e+00> : vector<16x512xf32>
    %89 = tpu.matmul %87, %88, %cst_87 {dimension_numbers = #tpu.dot_dimension_numbers<[1], [0], [0], [1], [0, 0, 1, 1], [], []>} : vector<16x128xbf16>, vector<128x512xbf16>, vector<16x512xf32> -> vector<16x512xf32>
    %90 = arith.addf %85, %89 : vector<16x512xf32>
    %91 = vector.extract_strided_slice %90 {offsets = [0, 0], sizes = [16, 128], strides = [1, 1]} : vector<16x512xf32> to vector<16x128xf32>
    %92 = arith.negf %91 : vector<16x128xf32>
    %93 = math.exp %92 : vector<16x128xf32>
    %cst_88 = arith.constant 1.000000e+00 : f32
    %94 = vector.broadcast %cst_88 : f32 to vector<16x128xf32>
    %95 = arith.addf %94, %93 : vector<16x128xf32>
    %96 = arith.divf %94, %95 : vector<16x128xf32>
    %97 = vector.extract_strided_slice %90 {offsets = [0, 128], sizes = [16, 128], strides = [1, 1]} : vector<16x512xf32> to vector<16x128xf32>
    %98 = arith.negf %97 : vector<16x128xf32>
    %99 = math.exp %98 : vector<16x128xf32>
    %cst_89 = arith.constant 1.000000e+00 : f32
    %100 = vector.broadcast %cst_89 : f32 to vector<16x128xf32>
    %101 = arith.addf %100, %99 : vector<16x128xf32>
    %102 = arith.divf %100, %101 : vector<16x128xf32>
    %103 = vector.extract_strided_slice %90 {offsets = [0, 256], sizes = [16, 128], strides = [1, 1]} : vector<16x512xf32> to vector<16x128xf32>
    %104 = math.tanh %103 : vector<16x128xf32>
    %105 = vector.extract_strided_slice %90 {offsets = [0, 384], sizes = [16, 128], strides = [1, 1]} : vector<16x512xf32> to vector<16x128xf32>
    %106 = arith.negf %105 : vector<16x128xf32>
    %107 = math.exp %106 : vector<16x128xf32>
    %cst_90 = arith.constant 1.000000e+00 : f32
    %108 = vector.broadcast %cst_90 : f32 to vector<16x128xf32>
    %109 = arith.addf %108, %107 : vector<16x128xf32>
    %110 = arith.divf %108, %109 : vector<16x128xf32>
    %c0_91 = arith.constant 0 : index
    %c0_92 = arith.constant 0 : index
    %111 = vector.load %arg9[%c0_91, %c0_92] : memref<16x128xf32, #tpu.memory_space<vmem>>, vector<16x128xf32>
    %112 = arith.mulf %102, %111 : vector<16x128xf32>
    %113 = arith.mulf %96, %104 : vector<16x128xf32>
    %114 = arith.addf %112, %113 : vector<16x128xf32>
    %115 = math.tanh %114 : vector<16x128xf32>
    %116 = arith.mulf %110, %115 : vector<16x128xf32>
    %c0_93 = arith.constant 0 : index
    %c0_94 = arith.constant 0 : index
    %117 = vector.load %arg9[%c0_93, %c0_94] : memref<16x128xf32, #tpu.memory_space<vmem>>, vector<16x128xf32>
    tpu.vector_store %arg9[%c0_93, %c0_94], %114 {strides = array<i32>} : memref<16x128xf32, #tpu.memory_space<vmem>>, vector<16x128xf32>,
    %c0_95 = arith.constant 0 : index
    %c0_96 = arith.constant 0 : index
    %118 = vector.load %arg8[%c0_95, %c0_96] : memref<16x128xf32, #tpu.memory_space<vmem>>, vector<16x128xf32>
    tpu.vector_store %arg8[%c0_95, %c0_96], %116 {strides = array<i32>} : memref<16x128xf32, #tpu.memory_space<vmem>>, vector<16x128xf32>,
    %c0_97 = arith.constant 0 : index
    %c0_98 = arith.constant 0 : index
    %119 = vector.load %arg10[%c0_97, %c0_98] : memref<16x128xf32, #tpu.memory_space<vmem>>, vector<16x128xf32>
    %120 = arith.addf %119, %116 : vector<16x128xf32>
    %c0_99 = arith.constant 0 : index
    %c0_100 = arith.constant 0 : index
    %121 = vector.load %arg10[%c0_99, %c0_100] : memref<16x128xf32, #tpu.memory_space<vmem>>, vector<16x128xf32>
    tpu.vector_store %arg10[%c0_99, %c0_100], %120 {strides = array<i32>} : memref<16x128xf32, #tpu.memory_space<vmem>>, vector<16x128xf32>,
    %c0_101 = arith.constant 0 : index
    %c0_102 = arith.constant 0 : index
    %122 = vector.load %arg11[%c0_101, %c0_102] : memref<16x128xf32, #tpu.memory_space<vmem>>, vector<16x128xf32>
    %123 = arith.maximumf %122, %116 : vector<16x128xf32>
    %c0_103 = arith.constant 0 : index
    %c0_104 = arith.constant 0 : index
    %124 = vector.load %arg11[%c0_103, %c0_104] : memref<16x128xf32, #tpu.memory_space<vmem>>, vector<16x128xf32>
    tpu.vector_store %arg11[%c0_103, %c0_104], %123 {strides = array<i32>} : memref<16x128xf32, #tpu.memory_space<vmem>>, vector<16x128xf32>,
    %c1_i32 = arith.constant 1 : i32
    %125 = arith.index_cast %c1_i32 : i32 to index
    %c0_105 = arith.constant 0 : index
    %c0_106 = arith.constant 0 : index
    %126 = vector.load %arg7[%125, %c0_105, %c0_106] : memref<8x16x512xf32, #tpu.memory_space<vmem>>, vector<1x16x512xf32>
    %127 = vector.shape_cast %126 : vector<1x16x512xf32> to vector<16x512xf32>
    %c0_107 = arith.constant 0 : index
    %c0_108 = arith.constant 0 : index
    %128 = vector.load %arg8[%c0_107, %c0_108] : memref<16x128xf32, #tpu.memory_space<vmem>>, vector<16x128xf32>
    %129 = arith.truncf %128 : vector<16x128xf32> to vector<16x128xbf16>
    %c0_109 = arith.constant 0 : index
    %c0_110 = arith.constant 0 : index
    %130 = vector.load %arg4[%c0_109, %c0_110] : memref<128x512xbf16, #tpu.memory_space<vmem>>, vector<128x512xbf16>
    %cst_111 = arith.constant dense<0.000000e+00> : vector<16x512xf32>
    %131 = tpu.matmul %129, %130, %cst_111 {dimension_numbers = #tpu.dot_dimension_numbers<[1], [0], [0], [1], [0, 0, 1, 1], [], []>} : vector<16x128xbf16>, vector<128x512xbf16>, vector<16x512xf32> -> vector<16x512xf32>
    %132 = arith.addf %127, %131 : vector<16x512xf32>
    %133 = vector.extract_strided_slice %132 {offsets = [0, 0], sizes = [16, 128], strides = [1, 1]} : vector<16x512xf32> to vector<16x128xf32>
    %134 = arith.negf %133 : vector<16x128xf32>
    %135 = math.exp %134 : vector<16x128xf32>
    %cst_112 = arith.constant 1.000000e+00 : f32
    %136 = vector.broadcast %cst_112 : f32 to vector<16x128xf32>
    %137 = arith.addf %136, %135 : vector<16x128xf32>
    %138 = arith.divf %136, %137 : vector<16x128xf32>
    %139 = vector.extract_strided_slice %132 {offsets = [0, 128], sizes = [16, 128], strides = [1, 1]} : vector<16x512xf32> to vector<16x128xf32>
    %140 = arith.negf %139 : vector<16x128xf32>
    %141 = math.exp %140 : vector<16x128xf32>
    %cst_113 = arith.constant 1.000000e+00 : f32
    %142 = vector.broadcast %cst_113 : f32 to vector<16x128xf32>
    %143 = arith.addf %142, %141 : vector<16x128xf32>
    %144 = arith.divf %142, %143 : vector<16x128xf32>
    %145 = vector.extract_strided_slice %132 {offsets = [0, 256], sizes = [16, 128], strides = [1, 1]} : vector<16x512xf32> to vector<16x128xf32>
    %146 = math.tanh %145 : vector<16x128xf32>
    %147 = vector.extract_strided_slice %132 {offsets = [0, 384], sizes = [16, 128], strides = [1, 1]} : vector<16x512xf32> to vector<16x128xf32>
    %148 = arith.negf %147 : vector<16x128xf32>
    %149 = math.exp %148 : vector<16x128xf32>
    %cst_114 = arith.constant 1.000000e+00 : f32
    %150 = vector.broadcast %cst_114 : f32 to vector<16x128xf32>
    %151 = arith.addf %150, %149 : vector<16x128xf32>
    %152 = arith.divf %150, %151 : vector<16x128xf32>
    %c0_115 = arith.constant 0 : index
    %c0_116 = arith.constant 0 : index
    %153 = vector.load %arg9[%c0_115, %c0_116] : memref<16x128xf32, #tpu.memory_space<vmem>>, vector<16x128xf32>
    %154 = arith.mulf %144, %153 : vector<16x128xf32>
    %155 = arith.mulf %138, %146 : vector<16x128xf32>
    %156 = arith.addf %154, %155 : vector<16x128xf32>
    %157 = math.tanh %156 : vector<16x128xf32>
    %158 = arith.mulf %152, %157 : vector<16x128xf32>
    %c0_117 = arith.constant 0 : index
    %c0_118 = arith.constant 0 : index
    %159 = vector.load %arg9[%c0_117, %c0_118] : memref<16x128xf32, #tpu.memory_space<vmem>>, vector<16x128xf32>
    tpu.vector_store %arg9[%c0_117, %c0_118], %156 {strides = array<i32>} : memref<16x128xf32, #tpu.memory_space<vmem>>, vector<16x128xf32>,
    %c0_119 = arith.constant 0 : index
    %c0_120 = arith.constant 0 : index
    %160 = vector.load %arg8[%c0_119, %c0_120] : memref<16x128xf32, #tpu.memory_space<vmem>>, vector<16x128xf32>
    tpu.vector_store %arg8[%c0_119, %c0_120], %158 {strides = array<i32>} : memref<16x128xf32, #tpu.memory_space<vmem>>, vector<16x128xf32>,
    %c0_121 = arith.constant 0 : index
    %c0_122 = arith.constant 0 : index
    %161 = vector.load %arg10[%c0_121, %c0_122] : memref<16x128xf32, #tpu.memory_space<vmem>>, vector<16x128xf32>
    %162 = arith.addf %161, %158 : vector<16x128xf32>
    %c0_123 = arith.constant 0 : index
    %c0_124 = arith.constant 0 : index
    %163 = vector.load %arg10[%c0_123, %c0_124] : memref<16x128xf32, #tpu.memory_space<vmem>>, vector<16x128xf32>
    tpu.vector_store %arg10[%c0_123, %c0_124], %162 {strides = array<i32>} : memref<16x128xf32, #tpu.memory_space<vmem>>, vector<16x128xf32>,
    %c0_125 = arith.constant 0 : index
    %c0_126 = arith.constant 0 : index
    %164 = vector.load %arg11[%c0_125, %c0_126] : memref<16x128xf32, #tpu.memory_space<vmem>>, vector<16x128xf32>
    %165 = arith.maximumf %164, %158 : vector<16x128xf32>
    %c0_127 = arith.constant 0 : index
    %c0_128 = arith.constant 0 : index
    %166 = vector.load %arg11[%c0_127, %c0_128] : memref<16x128xf32, #tpu.memory_space<vmem>>, vector<16x128xf32>
    tpu.vector_store %arg11[%c0_127, %c0_128], %165 {strides = array<i32>} : memref<16x128xf32, #tpu.memory_space<vmem>>, vector<16x128xf32>,
    %c2_i32 = arith.constant 2 : i32
    %167 = arith.index_cast %c2_i32 : i32 to index
    %c0_129 = arith.constant 0 : index
    %c0_130 = arith.constant 0 : index
    %168 = vector.load %arg7[%167, %c0_129, %c0_130] : memref<8x16x512xf32, #tpu.memory_space<vmem>>, vector<1x16x512xf32>
    %169 = vector.shape_cast %168 : vector<1x16x512xf32> to vector<16x512xf32>
    %c0_131 = arith.constant 0 : index
    %c0_132 = arith.constant 0 : index
    %170 = vector.load %arg8[%c0_131, %c0_132] : memref<16x128xf32, #tpu.memory_space<vmem>>, vector<16x128xf32>
    %171 = arith.truncf %170 : vector<16x128xf32> to vector<16x128xbf16>
    %c0_133 = arith.constant 0 : index
    %c0_134 = arith.constant 0 : index
    %172 = vector.load %arg4[%c0_133, %c0_134] : memref<128x512xbf16, #tpu.memory_space<vmem>>, vector<128x512xbf16>
    %cst_135 = arith.constant dense<0.000000e+00> : vector<16x512xf32>
    %173 = tpu.matmul %171, %172, %cst_135 {dimension_numbers = #tpu.dot_dimension_numbers<[1], [0], [0], [1], [0, 0, 1, 1], [], []>} : vector<16x128xbf16>, vector<128x512xbf16>, vector<16x512xf32> -> vector<16x512xf32>
    %174 = arith.addf %169, %173 : vector<16x512xf32>
    %175 = vector.extract_strided_slice %174 {offsets = [0, 0], sizes = [16, 128], strides = [1, 1]} : vector<16x512xf32> to vector<16x128xf32>
    %176 = arith.negf %175 : vector<16x128xf32>
    %177 = math.exp %176 : vector<16x128xf32>
    %cst_136 = arith.constant 1.000000e+00 : f32
    %178 = vector.broadcast %cst_136 : f32 to vector<16x128xf32>
    %179 = arith.addf %178, %177 : vector<16x128xf32>
    %180 = arith.divf %178, %179 : vector<16x128xf32>
    %181 = vector.extract_strided_slice %174 {offsets = [0, 128], sizes = [16, 128], strides = [1, 1]} : vector<16x512xf32> to vector<16x128xf32>
    %182 = arith.negf %181 : vector<16x128xf32>
    %183 = math.exp %182 : vector<16x128xf32>
    %cst_137 = arith.constant 1.000000e+00 : f32
    %184 = vector.broadcast %cst_137 : f32 to vector<16x128xf32>
    %185 = arith.addf %184, %183 : vector<16x128xf32>
    %186 = arith.divf %184, %185 : vector<16x128xf32>
    %187 = vector.extract_strided_slice %174 {offsets = [0, 256], sizes = [16, 128], strides = [1, 1]} : vector<16x512xf32> to vector<16x128xf32>
    %188 = math.tanh %187 : vector<16x128xf32>
    %189 = vector.extract_strided_slice %174 {offsets = [0, 384], sizes = [16, 128], strides = [1, 1]} : vector<16x512xf32> to vector<16x128xf32>
    %190 = arith.negf %189 : vector<16x128xf32>
    %191 = math.exp %190 : vector<16x128xf32>
    %cst_138 = arith.constant 1.000000e+00 : f32
    %192 = vector.broadcast %cst_138 : f32 to vector<16x128xf32>
    %193 = arith.addf %192, %191 : vector<16x128xf32>
    %194 = arith.divf %192, %193 : vector<16x128xf32>
    %c0_139 = arith.constant 0 : index
    %c0_140 = arith.constant 0 : index
    %195 = vector.load %arg9[%c0_139, %c0_140] : memref<16x128xf32, #tpu.memory_space<vmem>>, vector<16x128xf32>
    %196 = arith.mulf %186, %195 : vector<16x128xf32>
    %197 = arith.mulf %180, %188 : vector<16x128xf32>
    %198 = arith.addf %196, %197 : vector<16x128xf32>
    %199 = math.tanh %198 : vector<16x128xf32>
    %200 = arith.mulf %194, %199 : vector<16x128xf32>
    %c0_141 = arith.constant 0 : index
    %c0_142 = arith.constant 0 : index
    %201 = vector.load %arg9[%c0_141, %c0_142] : memref<16x128xf32, #tpu.memory_space<vmem>>, vector<16x128xf32>
    tpu.vector_store %arg9[%c0_141, %c0_142], %198 {strides = array<i32>} : memref<16x128xf32, #tpu.memory_space<vmem>>, vector<16x128xf32>,
    %c0_143 = arith.constant 0 : index
    %c0_144 = arith.constant 0 : index
    %202 = vector.load %arg8[%c0_143, %c0_144] : memref<16x128xf32, #tpu.memory_space<vmem>>, vector<16x128xf32>
    tpu.vector_store %arg8[%c0_143, %c0_144], %200 {strides = array<i32>} : memref<16x128xf32, #tpu.memory_space<vmem>>, vector<16x128xf32>,
    %c0_145 = arith.constant 0 : index
    %c0_146 = arith.constant 0 : index
    %203 = vector.load %arg10[%c0_145, %c0_146] : memref<16x128xf32, #tpu.memory_space<vmem>>, vector<16x128xf32>
    %204 = arith.addf %203, %200 : vector<16x128xf32>
    %c0_147 = arith.constant 0 : index
    %c0_148 = arith.constant 0 : index
    %205 = vector.load %arg10[%c0_147, %c0_148] : memref<16x128xf32, #tpu.memory_space<vmem>>, vector<16x128xf32>
    tpu.vector_store %arg10[%c0_147, %c0_148], %204 {strides = array<i32>} : memref<16x128xf32, #tpu.memory_space<vmem>>, vector<16x128xf32>,
    %c0_149 = arith.constant 0 : index
    %c0_150 = arith.constant 0 : index
    %206 = vector.load %arg11[%c0_149, %c0_150] : memref<16x128xf32, #tpu.memory_space<vmem>>, vector<16x128xf32>
    %207 = arith.maximumf %206, %200 : vector<16x128xf32>
    %c0_151 = arith.constant 0 : index
    %c0_152 = arith.constant 0 : index
    %208 = vector.load %arg11[%c0_151, %c0_152] : memref<16x128xf32, #tpu.memory_space<vmem>>, vector<16x128xf32>
    tpu.vector_store %arg11[%c0_151, %c0_152], %207 {strides = array<i32>} : memref<16x128xf32, #tpu.memory_space<vmem>>, vector<16x128xf32>,
    %c3_i32 = arith.constant 3 : i32
    %209 = arith.index_cast %c3_i32 : i32 to index
    %c0_153 = arith.constant 0 : index
    %c0_154 = arith.constant 0 : index
    %210 = vector.load %arg7[%209, %c0_153, %c0_154] : memref<8x16x512xf32, #tpu.memory_space<vmem>>, vector<1x16x512xf32>
    %211 = vector.shape_cast %210 : vector<1x16x512xf32> to vector<16x512xf32>
    %c0_155 = arith.constant 0 : index
    %c0_156 = arith.constant 0 : index
    %212 = vector.load %arg8[%c0_155, %c0_156] : memref<16x128xf32, #tpu.memory_space<vmem>>, vector<16x128xf32>
    %213 = arith.truncf %212 : vector<16x128xf32> to vector<16x128xbf16>
    %c0_157 = arith.constant 0 : index
    %c0_158 = arith.constant 0 : index
    %214 = vector.load %arg4[%c0_157, %c0_158] : memref<128x512xbf16, #tpu.memory_space<vmem>>, vector<128x512xbf16>
    %cst_159 = arith.constant dense<0.000000e+00> : vector<16x512xf32>
    %215 = tpu.matmul %213, %214, %cst_159 {dimension_numbers = #tpu.dot_dimension_numbers<[1], [0], [0], [1], [0, 0, 1, 1], [], []>} : vector<16x128xbf16>, vector<128x512xbf16>, vector<16x512xf32> -> vector<16x512xf32>
    %216 = arith.addf %211, %215 : vector<16x512xf32>
    %217 = vector.extract_strided_slice %216 {offsets = [0, 0], sizes = [16, 128], strides = [1, 1]} : vector<16x512xf32> to vector<16x128xf32>
    %218 = arith.negf %217 : vector<16x128xf32>
    %219 = math.exp %218 : vector<16x128xf32>
    %cst_160 = arith.constant 1.000000e+00 : f32
    %220 = vector.broadcast %cst_160 : f32 to vector<16x128xf32>
    %221 = arith.addf %220, %219 : vector<16x128xf32>
    %222 = arith.divf %220, %221 : vector<16x128xf32>
    %223 = vector.extract_strided_slice %216 {offsets = [0, 128], sizes = [16, 128], strides = [1, 1]} : vector<16x512xf32> to vector<16x128xf32>
    %224 = arith.negf %223 : vector<16x128xf32>
    %225 = math.exp %224 : vector<16x128xf32>
    %cst_161 = arith.constant 1.000000e+00 : f32
    %226 = vector.broadcast %cst_161 : f32 to vector<16x128xf32>
    %227 = arith.addf %226, %225 : vector<16x128xf32>
    %228 = arith.divf %226, %227 : vector<16x128xf32>
    %229 = vector.extract_strided_slice %216 {offsets = [0, 256], sizes = [16, 128], strides = [1, 1]} : vector<16x512xf32> to vector<16x128xf32>
    %230 = math.tanh %229 : vector<16x128xf32>
    %231 = vector.extract_strided_slice %216 {offsets = [0, 384], sizes = [16, 128], strides = [1, 1]} : vector<16x512xf32> to vector<16x128xf32>
    %232 = arith.negf %231 : vector<16x128xf32>
    %233 = math.exp %232 : vector<16x128xf32>
    %cst_162 = arith.constant 1.000000e+00 : f32
    %234 = vector.broadcast %cst_162 : f32 to vector<16x128xf32>
    %235 = arith.addf %234, %233 : vector<16x128xf32>
    %236 = arith.divf %234, %235 : vector<16x128xf32>
    %c0_163 = arith.constant 0 : index
    %c0_164 = arith.constant 0 : index
    %237 = vector.load %arg9[%c0_163, %c0_164] : memref<16x128xf32, #tpu.memory_space<vmem>>, vector<16x128xf32>
    %238 = arith.mulf %228, %237 : vector<16x128xf32>
    %239 = arith.mulf %222, %230 : vector<16x128xf32>
    %240 = arith.addf %238, %239 : vector<16x128xf32>
    %241 = math.tanh %240 : vector<16x128xf32>
    %242 = arith.mulf %236, %241 : vector<16x128xf32>
    %c0_165 = arith.constant 0 : index
    %c0_166 = arith.constant 0 : index
    %243 = vector.load %arg9[%c0_165, %c0_166] : memref<16x128xf32, #tpu.memory_space<vmem>>, vector<16x128xf32>
    tpu.vector_store %arg9[%c0_165, %c0_166], %240 {strides = array<i32>} : memref<16x128xf32, #tpu.memory_space<vmem>>, vector<16x128xf32>,
    %c0_167 = arith.constant 0 : index
    %c0_168 = arith.constant 0 : index
    %244 = vector.load %arg8[%c0_167, %c0_168] : memref<16x128xf32, #tpu.memory_space<vmem>>, vector<16x128xf32>
    tpu.vector_store %arg8[%c0_167, %c0_168], %242 {strides = array<i32>} : memref<16x128xf32, #tpu.memory_space<vmem>>, vector<16x128xf32>,
    %c0_169 = arith.constant 0 : index
    %c0_170 = arith.constant 0 : index
    %245 = vector.load %arg10[%c0_169, %c0_170] : memref<16x128xf32, #tpu.memory_space<vmem>>, vector<16x128xf32>
    %246 = arith.addf %245, %242 : vector<16x128xf32>
    %c0_171 = arith.constant 0 : index
    %c0_172 = arith.constant 0 : index
    %247 = vector.load %arg10[%c0_171, %c0_172] : memref<16x128xf32, #tpu.memory_space<vmem>>, vector<16x128xf32>
    tpu.vector_store %arg10[%c0_171, %c0_172], %246 {strides = array<i32>} : memref<16x128xf32, #tpu.memory_space<vmem>>, vector<16x128xf32>,
    %c0_173 = arith.constant 0 : index
    %c0_174 = arith.constant 0 : index
    %248 = vector.load %arg11[%c0_173, %c0_174] : memref<16x128xf32, #tpu.memory_space<vmem>>, vector<16x128xf32>
    %249 = arith.maximumf %248, %242 : vector<16x128xf32>
    %c0_175 = arith.constant 0 : index
    %c0_176 = arith.constant 0 : index
    %250 = vector.load %arg11[%c0_175, %c0_176] : memref<16x128xf32, #tpu.memory_space<vmem>>, vector<16x128xf32>
    tpu.vector_store %arg11[%c0_175, %c0_176], %249 {strides = array<i32>} : memref<16x128xf32, #tpu.memory_space<vmem>>, vector<16x128xf32>,
    %c4_i32 = arith.constant 4 : i32
    %251 = arith.index_cast %c4_i32 : i32 to index
    %c0_177 = arith.constant 0 : index
    %c0_178 = arith.constant 0 : index
    %252 = vector.load %arg7[%251, %c0_177, %c0_178] : memref<8x16x512xf32, #tpu.memory_space<vmem>>, vector<1x16x512xf32>
    %253 = vector.shape_cast %252 : vector<1x16x512xf32> to vector<16x512xf32>
    %c0_179 = arith.constant 0 : index
    %c0_180 = arith.constant 0 : index
    %254 = vector.load %arg8[%c0_179, %c0_180] : memref<16x128xf32, #tpu.memory_space<vmem>>, vector<16x128xf32>
    %255 = arith.truncf %254 : vector<16x128xf32> to vector<16x128xbf16>
    %c0_181 = arith.constant 0 : index
    %c0_182 = arith.constant 0 : index
    %256 = vector.load %arg4[%c0_181, %c0_182] : memref<128x512xbf16, #tpu.memory_space<vmem>>, vector<128x512xbf16>
    %cst_183 = arith.constant dense<0.000000e+00> : vector<16x512xf32>
    %257 = tpu.matmul %255, %256, %cst_183 {dimension_numbers = #tpu.dot_dimension_numbers<[1], [0], [0], [1], [0, 0, 1, 1], [], []>} : vector<16x128xbf16>, vector<128x512xbf16>, vector<16x512xf32> -> vector<16x512xf32>
    %258 = arith.addf %253, %257 : vector<16x512xf32>
    %259 = vector.extract_strided_slice %258 {offsets = [0, 0], sizes = [16, 128], strides = [1, 1]} : vector<16x512xf32> to vector<16x128xf32>
    %260 = arith.negf %259 : vector<16x128xf32>
    %261 = math.exp %260 : vector<16x128xf32>
    %cst_184 = arith.constant 1.000000e+00 : f32
    %262 = vector.broadcast %cst_184 : f32 to vector<16x128xf32>
    %263 = arith.addf %262, %261 : vector<16x128xf32>
    %264 = arith.divf %262, %263 : vector<16x128xf32>
    %265 = vector.extract_strided_slice %258 {offsets = [0, 128], sizes = [16, 128], strides = [1, 1]} : vector<16x512xf32> to vector<16x128xf32>
    %266 = arith.negf %265 : vector<16x128xf32>
    %267 = math.exp %266 : vector<16x128xf32>
    %cst_185 = arith.constant 1.000000e+00 : f32
    %268 = vector.broadcast %cst_185 : f32 to vector<16x128xf32>
    %269 = arith.addf %268, %267 : vector<16x128xf32>
    %270 = arith.divf %268, %269 : vector<16x128xf32>
    %271 = vector.extract_strided_slice %258 {offsets = [0, 256], sizes = [16, 128], strides = [1, 1]} : vector<16x512xf32> to vector<16x128xf32>
    %272 = math.tanh %271 : vector<16x128xf32>
    %273 = vector.extract_strided_slice %258 {offsets = [0, 384], sizes = [16, 128], strides = [1, 1]} : vector<16x512xf32> to vector<16x128xf32>
    %274 = arith.negf %273 : vector<16x128xf32>
    %275 = math.exp %274 : vector<16x128xf32>
    %cst_186 = arith.constant 1.000000e+00 : f32
    %276 = vector.broadcast %cst_186 : f32 to vector<16x128xf32>
    %277 = arith.addf %276, %275 : vector<16x128xf32>
    %278 = arith.divf %276, %277 : vector<16x128xf32>
    %c0_187 = arith.constant 0 : index
    %c0_188 = arith.constant 0 : index
    %279 = vector.load %arg9[%c0_187, %c0_188] : memref<16x128xf32, #tpu.memory_space<vmem>>, vector<16x128xf32>
    %280 = arith.mulf %270, %279 : vector<16x128xf32>
    %281 = arith.mulf %264, %272 : vector<16x128xf32>
    %282 = arith.addf %280, %281 : vector<16x128xf32>
    %283 = math.tanh %282 : vector<16x128xf32>
    %284 = arith.mulf %278, %283 : vector<16x128xf32>
    %c0_189 = arith.constant 0 : index
    %c0_190 = arith.constant 0 : index
    %285 = vector.load %arg9[%c0_189, %c0_190] : memref<16x128xf32, #tpu.memory_space<vmem>>, vector<16x128xf32>
    tpu.vector_store %arg9[%c0_189, %c0_190], %282 {strides = array<i32>} : memref<16x128xf32, #tpu.memory_space<vmem>>, vector<16x128xf32>,
    %c0_191 = arith.constant 0 : index
    %c0_192 = arith.constant 0 : index
    %286 = vector.load %arg8[%c0_191, %c0_192] : memref<16x128xf32, #tpu.memory_space<vmem>>, vector<16x128xf32>
    tpu.vector_store %arg8[%c0_191, %c0_192], %284 {strides = array<i32>} : memref<16x128xf32, #tpu.memory_space<vmem>>, vector<16x128xf32>,
    %c0_193 = arith.constant 0 : index
    %c0_194 = arith.constant 0 : index
    %287 = vector.load %arg10[%c0_193, %c0_194] : memref<16x128xf32, #tpu.memory_space<vmem>>, vector<16x128xf32>
    %288 = arith.addf %287, %284 : vector<16x128xf32>
    %c0_195 = arith.constant 0 : index
    %c0_196 = arith.constant 0 : index
    %289 = vector.load %arg10[%c0_195, %c0_196] : memref<16x128xf32, #tpu.memory_space<vmem>>, vector<16x128xf32>
    tpu.vector_store %arg10[%c0_195, %c0_196], %288 {strides = array<i32>} : memref<16x128xf32, #tpu.memory_space<vmem>>, vector<16x128xf32>,
    %c0_197 = arith.constant 0 : index
    %c0_198 = arith.constant 0 : index
    %290 = vector.load %arg11[%c0_197, %c0_198] : memref<16x128xf32, #tpu.memory_space<vmem>>, vector<16x128xf32>
    %291 = arith.maximumf %290, %284 : vector<16x128xf32>
    %c0_199 = arith.constant 0 : index
    %c0_200 = arith.constant 0 : index
    %292 = vector.load %arg11[%c0_199, %c0_200] : memref<16x128xf32, #tpu.memory_space<vmem>>, vector<16x128xf32>
    tpu.vector_store %arg11[%c0_199, %c0_200], %291 {strides = array<i32>} : memref<16x128xf32, #tpu.memory_space<vmem>>, vector<16x128xf32>,
    %c5_i32 = arith.constant 5 : i32
    %293 = arith.index_cast %c5_i32 : i32 to index
    %c0_201 = arith.constant 0 : index
    %c0_202 = arith.constant 0 : index
    %294 = vector.load %arg7[%293, %c0_201, %c0_202] : memref<8x16x512xf32, #tpu.memory_space<vmem>>, vector<1x16x512xf32>
    %295 = vector.shape_cast %294 : vector<1x16x512xf32> to vector<16x512xf32>
    %c0_203 = arith.constant 0 : index
    %c0_204 = arith.constant 0 : index
    %296 = vector.load %arg8[%c0_203, %c0_204] : memref<16x128xf32, #tpu.memory_space<vmem>>, vector<16x128xf32>
    %297 = arith.truncf %296 : vector<16x128xf32> to vector<16x128xbf16>
    %c0_205 = arith.constant 0 : index
    %c0_206 = arith.constant 0 : index
    %298 = vector.load %arg4[%c0_205, %c0_206] : memref<128x512xbf16, #tpu.memory_space<vmem>>, vector<128x512xbf16>
    %cst_207 = arith.constant dense<0.000000e+00> : vector<16x512xf32>
    %299 = tpu.matmul %297, %298, %cst_207 {dimension_numbers = #tpu.dot_dimension_numbers<[1], [0], [0], [1], [0, 0, 1, 1], [], []>} : vector<16x128xbf16>, vector<128x512xbf16>, vector<16x512xf32> -> vector<16x512xf32>
    %300 = arith.addf %295, %299 : vector<16x512xf32>
    %301 = vector.extract_strided_slice %300 {offsets = [0, 0], sizes = [16, 128], strides = [1, 1]} : vector<16x512xf32> to vector<16x128xf32>
    %302 = arith.negf %301 : vector<16x128xf32>
    %303 = math.exp %302 : vector<16x128xf32>
    %cst_208 = arith.constant 1.000000e+00 : f32
    %304 = vector.broadcast %cst_208 : f32 to vector<16x128xf32>
    %305 = arith.addf %304, %303 : vector<16x128xf32>
    %306 = arith.divf %304, %305 : vector<16x128xf32>
    %307 = vector.extract_strided_slice %300 {offsets = [0, 128], sizes = [16, 128], strides = [1, 1]} : vector<16x512xf32> to vector<16x128xf32>
    %308 = arith.negf %307 : vector<16x128xf32>
    %309 = math.exp %308 : vector<16x128xf32>
    %cst_209 = arith.constant 1.000000e+00 : f32
    %310 = vector.broadcast %cst_209 : f32 to vector<16x128xf32>
    %311 = arith.addf %310, %309 : vector<16x128xf32>
    %312 = arith.divf %310, %311 : vector<16x128xf32>
    %313 = vector.extract_strided_slice %300 {offsets = [0, 256], sizes = [16, 128], strides = [1, 1]} : vector<16x512xf32> to vector<16x128xf32>
    %314 = math.tanh %313 : vector<16x128xf32>
    %315 = vector.extract_strided_slice %300 {offsets = [0, 384], sizes = [16, 128], strides = [1, 1]} : vector<16x512xf32> to vector<16x128xf32>
    %316 = arith.negf %315 : vector<16x128xf32>
    %317 = math.exp %316 : vector<16x128xf32>
    %cst_210 = arith.constant 1.000000e+00 : f32
    %318 = vector.broadcast %cst_210 : f32 to vector<16x128xf32>
    %319 = arith.addf %318, %317 : vector<16x128xf32>
    %320 = arith.divf %318, %319 : vector<16x128xf32>
    %c0_211 = arith.constant 0 : index
    %c0_212 = arith.constant 0 : index
    %321 = vector.load %arg9[%c0_211, %c0_212] : memref<16x128xf32, #tpu.memory_space<vmem>>, vector<16x128xf32>
    %322 = arith.mulf %312, %321 : vector<16x128xf32>
    %323 = arith.mulf %306, %314 : vector<16x128xf32>
    %324 = arith.addf %322, %323 : vector<16x128xf32>
    %325 = math.tanh %324 : vector<16x128xf32>
    %326 = arith.mulf %320, %325 : vector<16x128xf32>
    %c0_213 = arith.constant 0 : index
    %c0_214 = arith.constant 0 : index
    %327 = vector.load %arg9[%c0_213, %c0_214] : memref<16x128xf32, #tpu.memory_space<vmem>>, vector<16x128xf32>
    tpu.vector_store %arg9[%c0_213, %c0_214], %324 {strides = array<i32>} : memref<16x128xf32, #tpu.memory_space<vmem>>, vector<16x128xf32>,
    %c0_215 = arith.constant 0 : index
    %c0_216 = arith.constant 0 : index
    %328 = vector.load %arg8[%c0_215, %c0_216] : memref<16x128xf32, #tpu.memory_space<vmem>>, vector<16x128xf32>
    tpu.vector_store %arg8[%c0_215, %c0_216], %326 {strides = array<i32>} : memref<16x128xf32, #tpu.memory_space<vmem>>, vector<16x128xf32>,
    %c0_217 = arith.constant 0 : index
    %c0_218 = arith.constant 0 : index
    %329 = vector.load %arg10[%c0_217, %c0_218] : memref<16x128xf32, #tpu.memory_space<vmem>>, vector<16x128xf32>
    %330 = arith.addf %329, %326 : vector<16x128xf32>
    %c0_219 = arith.constant 0 : index
    %c0_220 = arith.constant 0 : index
    %331 = vector.load %arg10[%c0_219, %c0_220] : memref<16x128xf32, #tpu.memory_space<vmem>>, vector<16x128xf32>
    tpu.vector_store %arg10[%c0_219, %c0_220], %330 {strides = array<i32>} : memref<16x128xf32, #tpu.memory_space<vmem>>, vector<16x128xf32>,
    %c0_221 = arith.constant 0 : index
    %c0_222 = arith.constant 0 : index
    %332 = vector.load %arg11[%c0_221, %c0_222] : memref<16x128xf32, #tpu.memory_space<vmem>>, vector<16x128xf32>
    %333 = arith.maximumf %332, %326 : vector<16x128xf32>
    %c0_223 = arith.constant 0 : index
    %c0_224 = arith.constant 0 : index
    %334 = vector.load %arg11[%c0_223, %c0_224] : memref<16x128xf32, #tpu.memory_space<vmem>>, vector<16x128xf32>
    tpu.vector_store %arg11[%c0_223, %c0_224], %333 {strides = array<i32>} : memref<16x128xf32, #tpu.memory_space<vmem>>, vector<16x128xf32>,
    %c6_i32 = arith.constant 6 : i32
    %335 = arith.index_cast %c6_i32 : i32 to index
    %c0_225 = arith.constant 0 : index
    %c0_226 = arith.constant 0 : index
    %336 = vector.load %arg7[%335, %c0_225, %c0_226] : memref<8x16x512xf32, #tpu.memory_space<vmem>>, vector<1x16x512xf32>
    %337 = vector.shape_cast %336 : vector<1x16x512xf32> to vector<16x512xf32>
    %c0_227 = arith.constant 0 : index
    %c0_228 = arith.constant 0 : index
    %338 = vector.load %arg8[%c0_227, %c0_228] : memref<16x128xf32, #tpu.memory_space<vmem>>, vector<16x128xf32>
    %339 = arith.truncf %338 : vector<16x128xf32> to vector<16x128xbf16>
    %c0_229 = arith.constant 0 : index
    %c0_230 = arith.constant 0 : index
    %340 = vector.load %arg4[%c0_229, %c0_230] : memref<128x512xbf16, #tpu.memory_space<vmem>>, vector<128x512xbf16>
    %cst_231 = arith.constant dense<0.000000e+00> : vector<16x512xf32>
    %341 = tpu.matmul %339, %340, %cst_231 {dimension_numbers = #tpu.dot_dimension_numbers<[1], [0], [0], [1], [0, 0, 1, 1], [], []>} : vector<16x128xbf16>, vector<128x512xbf16>, vector<16x512xf32> -> vector<16x512xf32>
    %342 = arith.addf %337, %341 : vector<16x512xf32>
    %343 = vector.extract_strided_slice %342 {offsets = [0, 0], sizes = [16, 128], strides = [1, 1]} : vector<16x512xf32> to vector<16x128xf32>
    %344 = arith.negf %343 : vector<16x128xf32>
    %345 = math.exp %344 : vector<16x128xf32>
    %cst_232 = arith.constant 1.000000e+00 : f32
    %346 = vector.broadcast %cst_232 : f32 to vector<16x128xf32>
    %347 = arith.addf %346, %345 : vector<16x128xf32>
    %348 = arith.divf %346, %347 : vector<16x128xf32>
    %349 = vector.extract_strided_slice %342 {offsets = [0, 128], sizes = [16, 128], strides = [1, 1]} : vector<16x512xf32> to vector<16x128xf32>
    %350 = arith.negf %349 : vector<16x128xf32>
    %351 = math.exp %350 : vector<16x128xf32>
    %cst_233 = arith.constant 1.000000e+00 : f32
    %352 = vector.broadcast %cst_233 : f32 to vector<16x128xf32>
    %353 = arith.addf %352, %351 : vector<16x128xf32>
    %354 = arith.divf %352, %353 : vector<16x128xf32>
    %355 = vector.extract_strided_slice %342 {offsets = [0, 256], sizes = [16, 128], strides = [1, 1]} : vector<16x512xf32> to vector<16x128xf32>
    %356 = math.tanh %355 : vector<16x128xf32>
    %357 = vector.extract_strided_slice %342 {offsets = [0, 384], sizes = [16, 128], strides = [1, 1]} : vector<16x512xf32> to vector<16x128xf32>
    %358 = arith.negf %357 : vector<16x128xf32>
    %359 = math.exp %358 : vector<16x128xf32>
    %cst_234 = arith.constant 1.000000e+00 : f32
    %360 = vector.broadcast %cst_234 : f32 to vector<16x128xf32>
    %361 = arith.addf %360, %359 : vector<16x128xf32>
    %362 = arith.divf %360, %361 : vector<16x128xf32>
    %c0_235 = arith.constant 0 : index
    %c0_236 = arith.constant 0 : index
    %363 = vector.load %arg9[%c0_235, %c0_236] : memref<16x128xf32, #tpu.memory_space<vmem>>, vector<16x128xf32>
    %364 = arith.mulf %354, %363 : vector<16x128xf32>
    %365 = arith.mulf %348, %356 : vector<16x128xf32>
    %366 = arith.addf %364, %365 : vector<16x128xf32>
    %367 = math.tanh %366 : vector<16x128xf32>
    %368 = arith.mulf %362, %367 : vector<16x128xf32>
    %c0_237 = arith.constant 0 : index
    %c0_238 = arith.constant 0 : index
    %369 = vector.load %arg9[%c0_237, %c0_238] : memref<16x128xf32, #tpu.memory_space<vmem>>, vector<16x128xf32>
    tpu.vector_store %arg9[%c0_237, %c0_238], %366 {strides = array<i32>} : memref<16x128xf32, #tpu.memory_space<vmem>>, vector<16x128xf32>,
    %c0_239 = arith.constant 0 : index
    %c0_240 = arith.constant 0 : index
    %370 = vector.load %arg8[%c0_239, %c0_240] : memref<16x128xf32, #tpu.memory_space<vmem>>, vector<16x128xf32>
    tpu.vector_store %arg8[%c0_239, %c0_240], %368 {strides = array<i32>} : memref<16x128xf32, #tpu.memory_space<vmem>>, vector<16x128xf32>,
    %c0_241 = arith.constant 0 : index
    %c0_242 = arith.constant 0 : index
    %371 = vector.load %arg10[%c0_241, %c0_242] : memref<16x128xf32, #tpu.memory_space<vmem>>, vector<16x128xf32>
    %372 = arith.addf %371, %368 : vector<16x128xf32>
    %c0_243 = arith.constant 0 : index
    %c0_244 = arith.constant 0 : index
    %373 = vector.load %arg10[%c0_243, %c0_244] : memref<16x128xf32, #tpu.memory_space<vmem>>, vector<16x128xf32>
    tpu.vector_store %arg10[%c0_243, %c0_244], %372 {strides = array<i32>} : memref<16x128xf32, #tpu.memory_space<vmem>>, vector<16x128xf32>,
    %c0_245 = arith.constant 0 : index
    %c0_246 = arith.constant 0 : index
    %374 = vector.load %arg11[%c0_245, %c0_246] : memref<16x128xf32, #tpu.memory_space<vmem>>, vector<16x128xf32>
    %375 = arith.maximumf %374, %368 : vector<16x128xf32>
    %c0_247 = arith.constant 0 : index
    %c0_248 = arith.constant 0 : index
    %376 = vector.load %arg11[%c0_247, %c0_248] : memref<16x128xf32, #tpu.memory_space<vmem>>, vector<16x128xf32>
    tpu.vector_store %arg11[%c0_247, %c0_248], %375 {strides = array<i32>} : memref<16x128xf32, #tpu.memory_space<vmem>>, vector<16x128xf32>,
    %c7_i32 = arith.constant 7 : i32
    %377 = arith.index_cast %c7_i32 : i32 to index
    %c0_249 = arith.constant 0 : index
    %c0_250 = arith.constant 0 : index
    %378 = vector.load %arg7[%377, %c0_249, %c0_250] : memref<8x16x512xf32, #tpu.memory_space<vmem>>, vector<1x16x512xf32>
    %379 = vector.shape_cast %378 : vector<1x16x512xf32> to vector<16x512xf32>
    %c0_251 = arith.constant 0 : index
    %c0_252 = arith.constant 0 : index
    %380 = vector.load %arg8[%c0_251, %c0_252] : memref<16x128xf32, #tpu.memory_space<vmem>>, vector<16x128xf32>
    %381 = arith.truncf %380 : vector<16x128xf32> to vector<16x128xbf16>
    %c0_253 = arith.constant 0 : index
    %c0_254 = arith.constant 0 : index
    %382 = vector.load %arg4[%c0_253, %c0_254] : memref<128x512xbf16, #tpu.memory_space<vmem>>, vector<128x512xbf16>
    %cst_255 = arith.constant dense<0.000000e+00> : vector<16x512xf32>
    %383 = tpu.matmul %381, %382, %cst_255 {dimension_numbers = #tpu.dot_dimension_numbers<[1], [0], [0], [1], [0, 0, 1, 1], [], []>} : vector<16x128xbf16>, vector<128x512xbf16>, vector<16x512xf32> -> vector<16x512xf32>
    %384 = arith.addf %379, %383 : vector<16x512xf32>
    %385 = vector.extract_strided_slice %384 {offsets = [0, 0], sizes = [16, 128], strides = [1, 1]} : vector<16x512xf32> to vector<16x128xf32>
    %386 = arith.negf %385 : vector<16x128xf32>
    %387 = math.exp %386 : vector<16x128xf32>
    %cst_256 = arith.constant 1.000000e+00 : f32
    %388 = vector.broadcast %cst_256 : f32 to vector<16x128xf32>
    %389 = arith.addf %388, %387 : vector<16x128xf32>
    %390 = arith.divf %388, %389 : vector<16x128xf32>
    %391 = vector.extract_strided_slice %384 {offsets = [0, 128], sizes = [16, 128], strides = [1, 1]} : vector<16x512xf32> to vector<16x128xf32>
    %392 = arith.negf %391 : vector<16x128xf32>
    %393 = math.exp %392 : vector<16x128xf32>
    %cst_257 = arith.constant 1.000000e+00 : f32
    %394 = vector.broadcast %cst_257 : f32 to vector<16x128xf32>
    %395 = arith.addf %394, %393 : vector<16x128xf32>
    %396 = arith.divf %394, %395 : vector<16x128xf32>
    %397 = vector.extract_strided_slice %384 {offsets = [0, 256], sizes = [16, 128], strides = [1, 1]} : vector<16x512xf32> to vector<16x128xf32>
    %398 = math.tanh %397 : vector<16x128xf32>
    %399 = vector.extract_strided_slice %384 {offsets = [0, 384], sizes = [16, 128], strides = [1, 1]} : vector<16x512xf32> to vector<16x128xf32>
    %400 = arith.negf %399 : vector<16x128xf32>
    %401 = math.exp %400 : vector<16x128xf32>
    %cst_258 = arith.constant 1.000000e+00 : f32
    %402 = vector.broadcast %cst_258 : f32 to vector<16x128xf32>
    %403 = arith.addf %402, %401 : vector<16x128xf32>
    %404 = arith.divf %402, %403 : vector<16x128xf32>
    %c0_259 = arith.constant 0 : index
    %c0_260 = arith.constant 0 : index
    %405 = vector.load %arg9[%c0_259, %c0_260] : memref<16x128xf32, #tpu.memory_space<vmem>>, vector<16x128xf32>
    %406 = arith.mulf %396, %405 : vector<16x128xf32>
    %407 = arith.mulf %390, %398 : vector<16x128xf32>
    %408 = arith.addf %406, %407 : vector<16x128xf32>
    %409 = math.tanh %408 : vector<16x128xf32>
    %410 = arith.mulf %404, %409 : vector<16x128xf32>
    %c0_261 = arith.constant 0 : index
    %c0_262 = arith.constant 0 : index
    %411 = vector.load %arg9[%c0_261, %c0_262] : memref<16x128xf32, #tpu.memory_space<vmem>>, vector<16x128xf32>
    tpu.vector_store %arg9[%c0_261, %c0_262], %408 {strides = array<i32>} : memref<16x128xf32, #tpu.memory_space<vmem>>, vector<16x128xf32>,
    %c0_263 = arith.constant 0 : index
    %c0_264 = arith.constant 0 : index
    %412 = vector.load %arg8[%c0_263, %c0_264] : memref<16x128xf32, #tpu.memory_space<vmem>>, vector<16x128xf32>
    tpu.vector_store %arg8[%c0_263, %c0_264], %410 {strides = array<i32>} : memref<16x128xf32, #tpu.memory_space<vmem>>, vector<16x128xf32>,
    %c0_265 = arith.constant 0 : index
    %c0_266 = arith.constant 0 : index
    %413 = vector.load %arg10[%c0_265, %c0_266] : memref<16x128xf32, #tpu.memory_space<vmem>>, vector<16x128xf32>
    %414 = arith.addf %413, %410 : vector<16x128xf32>
    %c0_267 = arith.constant 0 : index
    %c0_268 = arith.constant 0 : index
    %415 = vector.load %arg10[%c0_267, %c0_268] : memref<16x128xf32, #tpu.memory_space<vmem>>, vector<16x128xf32>
    tpu.vector_store %arg10[%c0_267, %c0_268], %414 {strides = array<i32>} : memref<16x128xf32, #tpu.memory_space<vmem>>, vector<16x128xf32>,
    %c0_269 = arith.constant 0 : index
    %c0_270 = arith.constant 0 : index
    %416 = vector.load %arg11[%c0_269, %c0_270] : memref<16x128xf32, #tpu.memory_space<vmem>>, vector<16x128xf32>
    %417 = arith.maximumf %416, %410 : vector<16x128xf32>
    %c0_271 = arith.constant 0 : index
    %c0_272 = arith.constant 0 : index
    %418 = vector.load %arg11[%c0_271, %c0_272] : memref<16x128xf32, #tpu.memory_space<vmem>>, vector<16x128xf32>
    tpu.vector_store %arg11[%c0_271, %c0_272], %417 {strides = array<i32>} : memref<16x128xf32, #tpu.memory_space<vmem>>, vector<16x128xf32>,
    %c8_i32 = arith.constant 8 : i32
    %c0_i32_273 = arith.constant 0 : i32
    %419 = arith.cmpi eq, %arg1, %c0_i32_273 : i32
    %420 = arith.extui %419 : i1 to i32
    %c0_i32_274 = arith.constant 0 : i32
    %421 = arith.cmpi ne, %420, %c0_i32_274 : i32
    scf.if %421 {
      %c0_275 = arith.constant 0 : index
      %c0_276 = arith.constant 0 : index
      %422 = vector.load %arg10[%c0_275, %c0_276] : memref<16x128xf32, #tpu.memory_space<vmem>>, vector<16x128xf32>
      %cst_277 = arith.constant 1.250000e-01 : f32
      %423 = vector.broadcast %cst_277 : f32 to vector<16x128xf32>
      %424 = arith.mulf %422, %423 : vector<16x128xf32>
      %c0_278 = arith.constant 0 : index
      %c0_279 = arith.constant 0 : index
      %425 = vector.load %arg6[%c0_278, %c0_279] : memref<16x256xf32, #tpu.memory_space<vmem>>, vector<16x128xf32>
      tpu.vector_store %arg6[%c0_278, %c0_279], %424 {strides = array<i32>} : memref<16x256xf32, #tpu.memory_space<vmem>>, vector<16x128xf32>,
      %c0_280 = arith.constant 0 : index
      %c0_281 = arith.constant 0 : index
      %426 = vector.load %arg11[%c0_280, %c0_281] : memref<16x128xf32, #tpu.memory_space<vmem>>, vector<16x128xf32>
      %c0_282 = arith.constant 0 : index
      %c128 = arith.constant 128 : index
      %427 = vector.load %arg6[%c0_282, %c128] : memref<16x256xf32, #tpu.memory_space<vmem>>, vector<16x128xf32>
      tpu.vector_store %arg6[%c0_282, %c128], %426 {strides = array<i32>} : memref<16x256xf32, #tpu.memory_space<vmem>>, vector<16x128xf32>,
    } else {
    }
    return
  }
  func.func @transform_0(%arg0: i32, %arg1: i32) -> (i32, i32, i32) {
    %c0_i32 = arith.constant 0 : i32
    %c0_i32_0 = arith.constant 0 : i32
    return %arg1, %arg0, %c0_i32 : i32, i32, i32
  }
  func.func @transform_1(%arg0: i32, %arg1: i32) -> (i32, i32) {
    %c0_i32 = arith.constant 0 : i32
    %c0_i32_0 = arith.constant 0 : i32
    %c0_i32_1 = arith.constant 0 : i32
    return %c0_i32, %c0_i32_0 : i32, i32
  }
  func.func @transform_2(%arg0: i32, %arg1: i32) -> (i32, i32) {
    %c0_i32 = arith.constant 0 : i32
    %c0_i32_0 = arith.constant 0 : i32
    %c0_i32_1 = arith.constant 0 : i32
    return %c0_i32, %c0_i32_0 : i32, i32
  }
  func.func @transform_3(%arg0: i32, %arg1: i32) -> (i32, i32) {
    %c0_i32 = arith.constant 0 : i32
    %c0_i32_0 = arith.constant 0 : i32
    %c0_i32_1 = arith.constant 0 : i32
    return %c0_i32, %c0_i32_0 : i32, i32
  }
  func.func @transform_4(%arg0: i32, %arg1: i32) -> (i32, i32) {
    %c0_i32 = arith.constant 0 : i32
    %c0_i32_0 = arith.constant 0 : i32
    return %arg0, %c0_i32 : i32, i32
  }
}

module attributes {stable_mosaic.version = 11 : i64} {
  func.func @_mlp_head_kernel(%arg0: i32, %arg1: memref<16x128xbf16, #tpu.memory_space<vmem>>, %arg2: memref<128x64xbf16, #tpu.memory_space<vmem>>, %arg3: memref<1x64xf32, #tpu.memory_space<vmem>>, %arg4: memref<64x32xbf16, #tpu.memory_space<vmem>>, %arg5: memref<1x32xf32, #tpu.memory_space<vmem>>, %arg6: memref<32x32xbf16, #tpu.memory_space<vmem>>, %arg7: memref<1x32xf32, #tpu.memory_space<vmem>>, %arg8: memref<32x4xbf16, #tpu.memory_space<vmem>>, %arg9: memref<16x4xf32, #tpu.memory_space<vmem>>) attributes {dimension_semantics = [#tpu.dimension_semantics<parallel>], iteration_bounds = array<i64: 1>, scalar_prefetch = 0 : i64, scratch_operands = 0 : i64, tpu.core_type = #tpu.core_type<tc>, window_params = [{transform_indices = @transform_0, window_bounds = array<i64: 16, 128>}, {pipeline_mode = #tpu.pipeline_mode<synchronous>, transform_indices = @transform_1, window_bounds = array<i64: 128, 64>}, {pipeline_mode = #tpu.pipeline_mode<synchronous>, transform_indices = @transform_2, window_bounds = array<i64: 1, 64>}, {pipeline_mode = #tpu.pipeline_mode<synchronous>, transform_indices = @transform_3, window_bounds = array<i64: 64, 32>}, {pipeline_mode = #tpu.pipeline_mode<synchronous>, transform_indices = @transform_4, window_bounds = array<i64: 1, 32>}, {pipeline_mode = #tpu.pipeline_mode<synchronous>, transform_indices = @transform_5, window_bounds = array<i64: 32, 32>}, {pipeline_mode = #tpu.pipeline_mode<synchronous>, transform_indices = @transform_6, window_bounds = array<i64: 1, 32>}, {pipeline_mode = #tpu.pipeline_mode<synchronous>, transform_indices = @transform_7, window_bounds = array<i64: 32, 4>}, {transform_indices = @transform_8, window_bounds = array<i64: 16, 4>}]} {
    %c0 = arith.constant 0 : index
    %c0_0 = arith.constant 0 : index
    %0 = vector.load %arg1[%c0, %c0_0] : memref<16x128xbf16, #tpu.memory_space<vmem>>, vector<16x128xbf16>
    %c0_1 = arith.constant 0 : index
    %c0_2 = arith.constant 0 : index
    %1 = vector.load %arg2[%c0_1, %c0_2] : memref<128x64xbf16, #tpu.memory_space<vmem>>, vector<128x64xbf16>
    %cst = arith.constant dense<0.000000e+00> : vector<16x64xf32>
    %2 = tpu.matmul %0, %1, %cst {dimension_numbers = #tpu.dot_dimension_numbers<[1], [0], [0], [1], [0, 0, 1, 1], [], []>} : vector<16x128xbf16>, vector<128x64xbf16>, vector<16x64xf32> -> vector<16x64xf32>
    %c0_3 = arith.constant 0 : index
    %c0_4 = arith.constant 0 : index
    %3 = vector.load %arg3[%c0_3, %c0_4] : memref<1x64xf32, #tpu.memory_space<vmem>>, vector<1x64xf32>
    %4 = vector.broadcast %3 : vector<1x64xf32> to vector<16x64xf32>
    %5 = arith.addf %2, %4 : vector<16x64xf32>
    %cst_5 = arith.constant 0.000000e+00 : f32
    %6 = vector.broadcast %cst_5 : f32 to vector<16x64xf32>
    %7 = arith.maximumf %5, %6 : vector<16x64xf32>
    %8 = arith.truncf %7 : vector<16x64xf32> to vector<16x64xbf16>
    %c0_6 = arith.constant 0 : index
    %c0_7 = arith.constant 0 : index
    %9 = vector.load %arg4[%c0_6, %c0_7] : memref<64x32xbf16, #tpu.memory_space<vmem>>, vector<64x32xbf16>
    %cst_8 = arith.constant dense<0.000000e+00> : vector<16x32xf32>
    %10 = tpu.matmul %8, %9, %cst_8 {dimension_numbers = #tpu.dot_dimension_numbers<[1], [0], [0], [1], [0, 0, 1, 1], [], []>} : vector<16x64xbf16>, vector<64x32xbf16>, vector<16x32xf32> -> vector<16x32xf32>
    %c0_9 = arith.constant 0 : index
    %c0_10 = arith.constant 0 : index
    %11 = vector.load %arg5[%c0_9, %c0_10] : memref<1x32xf32, #tpu.memory_space<vmem>>, vector<1x32xf32>
    %12 = vector.broadcast %11 : vector<1x32xf32> to vector<16x32xf32>
    %13 = arith.addf %10, %12 : vector<16x32xf32>
    %cst_11 = arith.constant 0.000000e+00 : f32
    %14 = vector.broadcast %cst_11 : f32 to vector<16x32xf32>
    %15 = arith.maximumf %13, %14 : vector<16x32xf32>
    %16 = arith.truncf %15 : vector<16x32xf32> to vector<16x32xbf16>
    %c0_12 = arith.constant 0 : index
    %c0_13 = arith.constant 0 : index
    %17 = vector.load %arg6[%c0_12, %c0_13] : memref<32x32xbf16, #tpu.memory_space<vmem>>, vector<32x32xbf16>
    %cst_14 = arith.constant dense<0.000000e+00> : vector<16x32xf32>
    %18 = tpu.matmul %16, %17, %cst_14 {dimension_numbers = #tpu.dot_dimension_numbers<[1], [0], [0], [1], [0, 0, 1, 1], [], []>} : vector<16x32xbf16>, vector<32x32xbf16>, vector<16x32xf32> -> vector<16x32xf32>
    %c0_15 = arith.constant 0 : index
    %c0_16 = arith.constant 0 : index
    %19 = vector.load %arg7[%c0_15, %c0_16] : memref<1x32xf32, #tpu.memory_space<vmem>>, vector<1x32xf32>
    %20 = vector.broadcast %19 : vector<1x32xf32> to vector<16x32xf32>
    %21 = arith.addf %18, %20 : vector<16x32xf32>
    %cst_17 = arith.constant 0.000000e+00 : f32
    %22 = vector.broadcast %cst_17 : f32 to vector<16x32xf32>
    %23 = arith.maximumf %21, %22 : vector<16x32xf32>
    %24 = arith.truncf %23 : vector<16x32xf32> to vector<16x32xbf16>
    %c0_18 = arith.constant 0 : index
    %c0_19 = arith.constant 0 : index
    %25 = vector.load %arg8[%c0_18, %c0_19] : memref<32x4xbf16, #tpu.memory_space<vmem>>, vector<32x4xbf16>
    %cst_20 = arith.constant dense<0.000000e+00> : vector<16x4xf32>
    %26 = tpu.matmul %24, %25, %cst_20 {dimension_numbers = #tpu.dot_dimension_numbers<[1], [0], [0], [1], [0, 0, 1, 1], [], []>} : vector<16x32xbf16>, vector<32x4xbf16>, vector<16x4xf32> -> vector<16x4xf32>
    %cst_21 = arith.constant dense<0xFF800000> : vector<16xf32>
    %27 = vector.multi_reduction <maximumf>, %26, %cst_21 [1] : vector<16x4xf32> to vector<16xf32>
    %28 = vector.shape_cast %27 : vector<16xf32> to vector<16x1xf32>
    %29 = vector.broadcast %28 : vector<16x1xf32> to vector<16x4xf32>
    %30 = arith.subf %26, %29 : vector<16x4xf32>
    %31 = math.exp %30 : vector<16x4xf32>
    %cst_22 = arith.constant dense<0.000000e+00> : vector<16xf32>
    %32 = vector.multi_reduction <add>, %31, %cst_22 [1] : vector<16x4xf32> to vector<16xf32>
    %33 = vector.shape_cast %32 : vector<16xf32> to vector<16x1xf32>
    %34 = tpu.reciprocal %33 {approx = true} : vector<16x1xf32> -> vector<16x1xf32>
    %35 = vector.broadcast %34 : vector<16x1xf32> to vector<16x4xf32>
    %36 = arith.mulf %31, %35 : vector<16x4xf32>
    %c0_23 = arith.constant 0 : index
    %c0_24 = arith.constant 0 : index
    %37 = vector.load %arg9[%c0_23, %c0_24] : memref<16x4xf32, #tpu.memory_space<vmem>>, vector<16x4xf32>
    tpu.vector_store %arg9[%c0_23, %c0_24], %36 {strides = array<i32>} : memref<16x4xf32, #tpu.memory_space<vmem>>, vector<16x4xf32>,
    return
  }
  func.func @transform_0(%arg0: i32) -> (i32, i32) {
    %c0_i32 = arith.constant 0 : i32
    %c0_i32_0 = arith.constant 0 : i32
    return %arg0, %c0_i32 : i32, i32
  }
  func.func @transform_1(%arg0: i32) -> (i32, i32) {
    %c0_i32 = arith.constant 0 : i32
    %c0_i32_0 = arith.constant 0 : i32
    %c0_i32_1 = arith.constant 0 : i32
    return %c0_i32, %c0_i32_0 : i32, i32
  }
  func.func @transform_2(%arg0: i32) -> (i32, i32) {
    %c0_i32 = arith.constant 0 : i32
    %c0_i32_0 = arith.constant 0 : i32
    %c0_i32_1 = arith.constant 0 : i32
    return %c0_i32, %c0_i32_0 : i32, i32
  }
  func.func @transform_3(%arg0: i32) -> (i32, i32) {
    %c0_i32 = arith.constant 0 : i32
    %c0_i32_0 = arith.constant 0 : i32
    %c0_i32_1 = arith.constant 0 : i32
    return %c0_i32, %c0_i32_0 : i32, i32
  }
  func.func @transform_4(%arg0: i32) -> (i32, i32) {
    %c0_i32 = arith.constant 0 : i32
    %c0_i32_0 = arith.constant 0 : i32
    %c0_i32_1 = arith.constant 0 : i32
    return %c0_i32, %c0_i32_0 : i32, i32
  }
  func.func @transform_5(%arg0: i32) -> (i32, i32) {
    %c0_i32 = arith.constant 0 : i32
    %c0_i32_0 = arith.constant 0 : i32
    %c0_i32_1 = arith.constant 0 : i32
    return %c0_i32, %c0_i32_0 : i32, i32
  }
  func.func @transform_6(%arg0: i32) -> (i32, i32) {
    %c0_i32 = arith.constant 0 : i32
    %c0_i32_0 = arith.constant 0 : i32
    %c0_i32_1 = arith.constant 0 : i32
    return %c0_i32, %c0_i32_0 : i32, i32
  }
  func.func @transform_7(%arg0: i32) -> (i32, i32) {
    %c0_i32 = arith.constant 0 : i32
    %c0_i32_0 = arith.constant 0 : i32
    %c0_i32_1 = arith.constant 0 : i32
    return %c0_i32, %c0_i32_0 : i32, i32
  }
  func.func @transform_8(%arg0: i32) -> (i32, i32) {
    %c0_i32 = arith.constant 0 : i32
    %c0_i32_0 = arith.constant 0 : i32
    return %arg0, %c0_i32 : i32, i32
  }
}

</mosaic_0001>

<llo_original>
// kernel: forward.3
$region0: #{forward.3}
  #allocation0 [shape = 'u32[]', space=smem, size = 0x4, offset = 0x4, fixed_abs, tag = 'smem constant byte address 0x4 - core index']
  #allocation1 [shape = 'u32[72,128]{1,0:T(1,128)}', space=vmem, size = 0x9000, scoped, tag = 'internal scratch']
  %s0 = inlined_call_operand.vmem [shape: bf16[128,16], index: 0, kind: input, shape index: {}]
  %s1 = inlined_call_operand.vmem [shape: bf16[16,16], index: 1, kind: input, shape index: {}]
  %s2 = inlined_call_operand.vmem [shape: f32[1,16], index: 2, kind: input, shape index: {}]
  %s3 = inlined_call_operand.vmem [shape: bf16[128,16], index: 3, kind: output, shape index: {}]
  %s4 = sld [smem:[#allocation0]]
  $region45: #{forward.3} parent=0
    _
  %s6 = ssub.s32 1, %s4
  %s7 = scalar_select 0, %s6, %s4
  loop: start=0, step=1, limit=4
  $region2: #{forward.3} parent=0 // loop_pre_header
    _
  $region3: #{forward.3} parent=0 // loop_header
    %s9 = sphi 0, %s13
    %p10 = scmp.ge.s32.totalorder %s9, 4
    %s19 = sphi 0, %s21
    %s22 = sphi 0, %s19
    %s23 = sphi 0, %s22
    %s39 = sphi 0, %s23
    %s43 = sphi 0, %s43
    %s45 = sphi 0, %s43
    %s46 = sphi 0, %s45
    %s60 = sphi 0, %s46
    %s64 = sphi 0, %s64
    %s66 = sphi 0, %s64
    %s67 = sphi 0, %s66
    %s81 = sphi 0, %s67
    %s87 = sphi 0, %s89
    %s90 = sphi 0, %s87
    %s91 = sphi 0, %s90
    %s107 = sphi 0, %s91
  $region4: #{forward.3} parent=0 // loop_header_branch
    %12 = sbr.rel (%p10) target = $region8
  $region5: #{forward.3} parent=0 // loop_body
    %s14 = ssub.s32 %s9, 1
    %s15 = ssub.s32 %s9, 2
    %s16 = sadd.s32 %s9, 1
    %s17 = ssub.s32 %s9, %s16
    %p18 = scmp.eq.s32.totalorder %s17, 0
    %s20 = sadd.s32 %s19, 1
    %s21 = scalar_select %p18, %s19, %s20
    %p24 = pneg %p18
    %p25 = scmp.eq.s32.totalorder %s9, 1
    %p26 = por %p24, %p25
    %p27 = scmp.ne.s32.totalorder %s19, %s22
    %p28 = scmp.eq.s32.totalorder %s9, 0
    %p29 = por %p27, %p28
    %p30 = scmp.ne.s32.totalorder %s19, %s22
    %p31 = scmp.eq.s32.totalorder %s14, 1
    %p32 = por %p30, %p31
    %p33 = scmp.ne.s32.totalorder %s22, %s23
    %p34 = scmp.eq.s32.totalorder %s14, 0
    %p35 = por %p33, %p34
    %p36 = scmp.ne.s32.totalorder %s22, %s23
    %p37 = scmp.eq.s32.totalorder %s15, 1
    %p38 = por %p36, %p37
    %p40 = scmp.ne.s32.totalorder %s23, %s39
    %p41 = scmp.eq.s32.totalorder %s15, 0
    %p42 = por %p40, %p41
    %s44 = sadd.s32 %s43, 1
    %p47 = scmp.eq.s32.totalorder %s9, 1
    %p48 = scmp.ne.s32.totalorder %s43, %s45
    %p49 = scmp.eq.s32.totalorder %s9, 0
    %p50 = por %p48, %p49
    %p51 = scmp.ne.s32.totalorder %s43, %s45
    %p52 = scmp.eq.s32.totalorder %s14, 1
    %p53 = por %p51, %p52
    %p54 = scmp.ne.s32.totalorder %s45, %s46
    %p55 = scmp.eq.s32.totalorder %s14, 0
    %p56 = por %p54, %p55
    %p57 = scmp.ne.s32.totalorder %s45, %s46
    %p58 = scmp.eq.s32.totalorder %s15, 1
    %p59 = por %p57, %p58
    %p61 = scmp.ne.s32.totalorder %s46, %s60
    %p62 = scmp.eq.s32.totalorder %s15, 0
    %p63 = por %p61, %p62
    %s65 = sadd.s32 %s64, 1
    %p68 = scmp.eq.s32.totalorder %s9, 1
    %p69 = scmp.ne.s32.totalorder %s64, %s66
    %p70 = scmp.eq.s32.totalorder %s9, 0
    %p71 = por %p69, %p70
    %p72 = scmp.ne.s32.totalorder %s64, %s66
    %p73 = scmp.eq.s32.totalorder %s14, 1
    %p74 = por %p72, %p73
    %p75 = scmp.ne.s32.totalorder %s66, %s67
    %p76 = scmp.eq.s32.totalorder %s14, 0
    %p77 = por %p75, %p76
    %p78 = scmp.ne.s32.totalorder %s66, %s67
    %p79 = scmp.eq.s32.totalorder %s15, 1
    %p80 = por %p78, %p79
    %p82 = scmp.ne.s32.totalorder %s67, %s81
    %p83 = scmp.eq.s32.totalorder %s15, 0
    %p84 = por %p82, %p83
    %s85 = ssub.s32 %s9, %s16
    %p86 = scmp.eq.s32.totalorder %s85, 0
    %s88 = sadd.s32 %s87, 1
    %s89 = scalar_select %p86, %s87, %s88
    %p92 = pneg %p86
    %p93 = scmp.eq.s32.totalorder %s9, 1
    %p94 = por %p92, %p93
    %p95 = scmp.ne.s32.totalorder %s87, %s90
    %p96 = scmp.eq.s32.totalorder %s9, 0
    %p97 = por %p95, %p96
    %p98 = scmp.ne.s32.totalorder %s87, %s90
    %p99 = scmp.eq.s32.totalorder %s14, 1
    %p100 = por %p98, %p99
    %p101 = scmp.ne.s32.totalorder %s90, %s91
    %p102 = scmp.eq.s32.totalorder %s14, 0
    %p103 = por %p101, %p102
    %p104 = scmp.ne.s32.totalorder %s90, %s91
    %p105 = scmp.eq.s32.totalorder %s15, 1
    %p106 = por %p104, %p105
    %p108 = scmp.ne.s32.totalorder %s91, %s107
    %p109 = scmp.eq.s32.totalorder %s15, 0
    %p110 = por %p108, %p109
    %p111 = scmp.le.s32.totalorder 1, %s9
    %p112 = scmp.lt.s32.totalorder %s9, 3
    %p113 = pnand %p111, %p112
    %p114 = pneg %p113
    // Predicated region
    $region9: #{forward.3} parent=5 // pred_check
      _
    $region10: #{forward.3} parent=5 // pred_check_branch
      %116 = sbr.rel (%p113) target = $region12
    $region11: #{forward.3} parent=5 // pred_region
      %s117 = ssub.s32 %s9, 1
      // Predicated region
      $region13: #{forward.3} parent=11 // pred_check
        %p118 = pneg %p56
      $region14: #{forward.3} parent=11 // pred_check_branch
        %120 = sbr.rel (%p118) target = $region16
      $region15: #{forward.3} parent=11 // pred_region
        _
      $region16: #{forward.3} parent=11 // pred_fallthru
        _
      // Predicated region
      $region17: #{forward.3} parent=11 // pred_check
        %p121 = pneg %p77
      $region18: #{forward.3} parent=11 // pred_check_branch
        %123 = sbr.rel (%p121) target = $region20
      $region19: #{forward.3} parent=11 // pred_region
        _
      $region20: #{forward.3} parent=11 // pred_fallthru
        _
    $region12: #{forward.3} parent=5 // pred_fallthru
      _
    %p124 = scmp.lt.s32.totalorder %s9, 2
    // Predicated region
    $region21: #{forward.3} parent=5 // pred_check
      %p125 = pneg %p124
    $region22: #{forward.3} parent=5 // pred_check_branch
      %127 = sbr.rel (%p125) target = $region24
    $region23: #{forward.3} parent=5 // pred_region
      // Predicated region
      $region25: #{forward.3} parent=23 // pred_check
        %p128 = pneg %p29
      $region26: #{forward.3} parent=23 // pred_check_branch
        %130 = sbr.rel (%p128) target = $region28
      $region27: #{forward.3} parent=23 // pred_region
        %s131 = smul.u32 8, %s9
        %p132 = scmp.lt.s32.totalorder %s131, 15
        %s133 = scalar_select %p132, %s131, 15
        %s134 = smul.addr %s133, 4
        %s135 = scalar_lea.vmem %s0, %s134
        %s136 = smul.u32 8, %s9
      $region28: #{forward.3} parent=23 // pred_fallthru
        _
    $region24: #{forward.3} parent=5 // pred_fallthru
      _
    %p137 = scmp.le.s32.totalorder 1, %s9
    %p138 = scmp.lt.s32.totalorder %s9, 3
    %p139 = pnand %p137, %p138
    %p140 = pneg %p139
    // Predicated region
    $region29: #{forward.3} parent=5 // pred_check
      _
    $region30: #{forward.3} parent=5 // pred_check_branch
      %142 = sbr.rel (%p139) target = $region32
    $region31: #{forward.3} parent=5 // pred_region
      %s143 = ssub.s32 %s9, 1
      %s144 = smul.u32 8, %s14
      %p145 = scmp.lt.s32.totalorder %s144, 15
      %s146 = scalar_select %p145, %s144, 15
      %s147 = smul.addr %s146, 4
      %s148 = scalar_lea.vmem %s0, %s147
      %p149 = pneg %p35
      %p150 = pneg %p32
      %p151 = pneg %p56
      %p152 = pneg %p53
      %p153 = pneg %p77
      %p154 = pneg %p74
      %p155 = pneg %p103
      %p156 = pneg %p100
      %s157 = smul.u32 8, %s14
      %p158 = scmp.lt.s32.totalorder %s157, 15
      %s159 = scalar_select %p158, %s157, 15
      %s160 = smul.addr %s159, 4
      %s161 = scalar_lea.vmem %s3, %s160
      %s162 = smul.u32 8, %s14
      %p163 = scmp.lt.s32.totalorder %s162, 15
      %s164 = scalar_select %p163, %s162, 15
      %s165 = smul.addr %s164, 4
      %s166 = scalar_lea.vmem %s0, %s165
      %s167 = smul.u32 8, %s14
      %s168 = smul.u32 8, %s14
      %p169 = scmp.lt.s32.totalorder %s168, 15
      %s170 = scalar_select %p169, %s168, 15
      %s171 = smul.addr %s170, 4
      %s172 = scalar_lea.vmem %s3, %s171
      %s173 = smul.u32 8, %s14
      %v175 = vld [vmem:[%s166] sm:$0xf]
      %v176 = vld [vmem:[%s166 + $0x4] sm:$0xf]
      %v177 = vld [vmem:[%s166 + $0x8] sm:$0xf]
      %v178 = vld [vmem:[%s166 + $0xc] sm:$0xf]
      %v179 = vld [vmem:[%s166 + $0x10] sm:$0xf]
      %v180 = vld [vmem:[%s166 + $0x14] sm:$0xf]
      %v181 = vld [vmem:[%s166 + $0x18] sm:$0xf]
      %v182 = vld [vmem:[%s166 + $0x1c] sm:$0xf]
      %v183 = vld [vmem:[%s1] sm:$0xf]
      %v184 = vld [vmem:[%s1 + $0x4] sm:$0xf]
      %v185 = vld [vmem:[%s2] sm:$0x1]
      %v187 = vperm.slane %v185, 0
      %v197 = vunpack.c.l.b16 %v175
      %v198 = vunpack.c.l.b16 %v176
      %v199 = vunpack.c.l.b16 %v177
      %v200 = vunpack.c.l.b16 %v178
      %v201 = vunpack.c.l.b16 %v179
      %v202 = vunpack.c.l.b16 %v180
      %v203 = vunpack.c.l.b16 %v181
      %v204 = vunpack.c.l.b16 %v182
      %v205 = vpack.c.b16 %v198, %v197
      %v206 = vpack.c.b16 %v200, %v199
      %v207 = vpack.c.b16 %v202, %v201
      %v208 = vpack.c.b16 %v204, %v203
      %v211 = vunpack.c.l.b16 %v183
      %v212 = vunpack.c.l.b16 %v184
      %v213 = vpack.c.b16 %v212, %v211
      %vm215 = vcmask 130048
      %v217 = vsel %vm215, %v205, 0
      %v220 = vsel %vm215, %v206, 0
      %v223 = vsel %vm215, %v207, 0
      %v226 = vsel %vm215, %v208, 0
      %228 = vmatpush.bf16.msra.mxu0 0
      %229 = vmatpush.bf16.msra.mxu0 0
      %230 = vmatpush.bf16.msra.mxu0 0
      %231 = vmatpush.bf16.msra.mxu0 0
      %232 = vmatpush.bf16.msra.mxu0 0
      %233 = vmatpush.bf16.msra.mxu0 0
      %234 = vmatpush.bf16.msra.mxu0 0
      %235 = vmatpush.bf16.msra.mxu0 %v213
      %236 = vmatmul.bf16.gmra.mxu0 %v217
      %v237 = vpop.f32.mrf.mxu0
      %v238 = vadd.f32 %v187, %v237
      %v239 = vpop.f32.mrf.mxu0
      %v240 = vadd.f32 %v187, %v239
      %241 = vmatmul.bf16.gmra.mxu0 %v220
      %v242 = vpop.f32.mrf.mxu0
      %v243 = vadd.f32 %v187, %v242
      %v244 = vpop.f32.mrf.mxu0
      %v245 = vadd.f32 %v187, %v244
      %246 = vmatmul.bf16.gmra.mxu0 %v223
      %v247 = vpop.f32.mrf.mxu0
      %v248 = vadd.f32 %v187, %v247
      %v249 = vpop.f32.mrf.mxu0
      %v250 = vadd.f32 %v187, %v249
      %251 = vmatmul.bf16.gmra.mxu0 %v226
      %v252 = vpop.f32.mrf.mxu0
      %v253 = vadd.f32 %v187, %v252
      %v254 = vpop.f32.mrf.mxu0
      %v255 = vadd.f32 %v187, %v254
      %256 = vdwg.mxu0
      %v257 = vmax.f32 %v238, 0.0
      %v258 = vmax.f32 %v240, 0.0
      %v259 = vmax.f32 %v243, 0.0
      %v260 = vmax.f32 %v245, 0.0
      %v261 = vmax.f32 %v248, 0.0
      %v262 = vmax.f32 %v250, 0.0
      %v263 = vmax.f32 %v253, 0.0
      %v264 = vmax.f32 %v255, 0.0
      %v265 = vpack.c.bf16 %v257, %v257
      %v266 = vpack.c.bf16 %v258, %v258
      %v267 = vpack.c.bf16 %v259, %v259
      %v268 = vpack.c.bf16 %v260, %v260
      %v269 = vpack.c.bf16 %v261, %v261
      %v270 = vpack.c.bf16 %v262, %v262
      %v271 = vpack.c.bf16 %v263, %v263
      %v272 = vpack.c.bf16 %v264, %v264
      %vm273 = vcmask 125952
      %274 = vst.msk [vmem:[%s172] sm:$0xf] %vm273, %v265
      %275 = vst.msk [vmem:[%s172 + $0x4] sm:$0xf] %vm273, %v266
      %276 = vst.msk [vmem:[%s172 + $0x8] sm:$0xf] %vm273, %v267
      %277 = vst.msk [vmem:[%s172 + $0xc] sm:$0xf] %vm273, %v268
      %278 = vst.msk [vmem:[%s172 + $0x10] sm:$0xf] %vm273, %v269
      %279 = vst.msk [vmem:[%s172 + $0x14] sm:$0xf] %vm273, %v270
      %280 = vst.msk [vmem:[%s172 + $0x18] sm:$0xf] %vm273, %v271
      %281 = vst.msk [vmem:[%s172 + $0x1c] sm:$0xf] %vm273, %v272
      %s282 = smul.u32 8, %s14
      %p283 = scmp.lt.s32.totalorder %s282, 15
      %s284 = scalar_select %p283, %s282, 15
      %s285 = smul.addr %s284, 4
      %s286 = scalar_lea.vmem %s3, %s285
      // Predicated region
      $region33: #{forward.3} parent=31 // pred_check
        %p287 = pneg %p100
      $region34: #{forward.3} parent=31 // pred_check_branch
        %289 = sbr.rel (%p287) target = $region36
      $region35: #{forward.3} parent=31 // pred_region
        %s290 = smul.u32 8, %s14
      $region36: #{forward.3} parent=31 // pred_fallthru
        _
    $region32: #{forward.3} parent=5 // pred_fallthru
      _
    %p291 = scmp.le.s32.totalorder 2, %s9
    // Predicated region
    $region37: #{forward.3} parent=5 // pred_check
      %p292 = pneg %p291
    $region38: #{forward.3} parent=5 // pred_check_branch
      %294 = sbr.rel (%p292) target = $region40
    $region39: #{forward.3} parent=5 // pred_region
      %s295 = ssub.s32 %s9, 2
      // Predicated region
      $region41: #{forward.3} parent=39 // pred_check
        %p296 = pneg %p106
      $region42: #{forward.3} parent=39 // pred_check_branch
        %298 = sbr.rel (%p296) target = $region44
      $region43: #{forward.3} parent=39 // pred_region
        %s299 = smul.u32 8, %s15
        %p300 = scmp.lt.s32.totalorder %s299, 15
        %s301 = scalar_select %p300, %s299, 15
        %s302 = smul.addr %s301, 4
        %s303 = scalar_lea.vmem %s3, %s302
      $region44: #{forward.3} parent=39 // pred_fallthru
        _
    $region40: #{forward.3} parent=5 // pred_fallthru
      _
  $region6: #{forward.3} parent=0 // loop_footer
    %s13 = sadd.s32 1, %s9
  $region7: #{forward.3} parent=0 // loop_footer_branch
    %8 = sbr.rel target = $region3
  $region8: #{forward.3} parent=0 // loop_exit
    _

// kernel: forward.5
$region0: #{forward.5}
  #allocation0 [shape = 'u32[]', space=smem, size = 0x4, offset = 0x4, fixed_abs, tag = 'smem constant byte address 0x4 - core index']
  #allocation1 [shape = 'u32[72,128]{1,0:T(1,128)}', space=vmem, size = 0x9000, scoped, tag = 'internal scratch']
  %s0 = inlined_call_operand.vmem [shape: bf16[16,128], index: 0, kind: input, shape index: {}]
  %s1 = inlined_call_operand.vmem [shape: bf16[128,64], index: 1, kind: input, shape index: {}]
  %s2 = inlined_call_operand.vmem [shape: f32[1,64], index: 2, kind: input, shape index: {}]
  %s3 = inlined_call_operand.vmem [shape: bf16[64,32], index: 3, kind: input, shape index: {}]
  %s4 = inlined_call_operand.vmem [shape: f32[1,32], index: 4, kind: input, shape index: {}]
  %s5 = inlined_call_operand.vmem [shape: bf16[32,32], index: 5, kind: input, shape index: {}]
  %s6 = inlined_call_operand.vmem [shape: f32[1,32], index: 6, kind: input, shape index: {}]
  %s7 = inlined_call_operand.vmem [shape: bf16[32,4], index: 7, kind: input, shape index: {}]
  %s8 = inlined_call_operand.vmem [shape: f32[16,4], index: 8, kind: output, shape index: {}]
  %s9 = sld [smem:[#allocation0]]
  $region42: #{forward.5} parent=0
    _
  %s11 = ssub.s32 1, %s9
  %s12 = scalar_select 0, %s11, %s9
  // Predicated region
  $region2: #{forward.5} parent=0 // pred_check
    _
  $region3: #{forward.5} parent=0 // pred_check_branch
    %14 = sbr.rel (0) target = $region5
  $region4: #{forward.5} parent=0 // pred_region
    _
  $region5: #{forward.5} parent=0 // pred_fallthru
    _
  // Predicated region
  $region6: #{forward.5} parent=0 // pred_check
    _
  $region7: #{forward.5} parent=0 // pred_check_branch
    %16 = sbr.rel (0) target = $region9
  $region8: #{forward.5} parent=0 // pred_region
    _
  $region9: #{forward.5} parent=0 // pred_fallthru
    _
  // Predicated region
  $region10: #{forward.5} parent=0 // pred_check
    _
  $region11: #{forward.5} parent=0 // pred_check_branch
    %18 = sbr.rel (0) target = $region13
  $region12: #{forward.5} parent=0 // pred_region
    _
  $region13: #{forward.5} parent=0 // pred_fallthru
    _
  // Predicated region
  $region14: #{forward.5} parent=0 // pred_check
    _
  $region15: #{forward.5} parent=0 // pred_check_branch
    %20 = sbr.rel (0) target = $region17
  $region16: #{forward.5} parent=0 // pred_region
    _
  $region17: #{forward.5} parent=0 // pred_fallthru
    _
  // Predicated region
  $region18: #{forward.5} parent=0 // pred_check
    _
  $region19: #{forward.5} parent=0 // pred_check_branch
    %22 = sbr.rel (0) target = $region21
  $region20: #{forward.5} parent=0 // pred_region
    _
  $region21: #{forward.5} parent=0 // pred_fallthru
    _
  // Predicated region
  $region22: #{forward.5} parent=0 // pred_check
    _
  $region23: #{forward.5} parent=0 // pred_check_branch
    %24 = sbr.rel (0) target = $region25
  $region24: #{forward.5} parent=0 // pred_region
    _
  $region25: #{forward.5} parent=0 // pred_fallthru
    _
  // Predicated region
  $region26: #{forward.5} parent=0 // pred_check
    _
  $region27: #{forward.5} parent=0 // pred_check_branch
    %26 = sbr.rel (0) target = $region29
  $region28: #{forward.5} parent=0 // pred_region
    _
  $region29: #{forward.5} parent=0 // pred_fallthru
    _
  // Predicated region
  $region30: #{forward.5} parent=0 // pred_check
    _
  $region31: #{forward.5} parent=0 // pred_check_branch
    %28 = sbr.rel (0) target = $region33
  $region32: #{forward.5} parent=0 // pred_region
    _
  $region33: #{forward.5} parent=0 // pred_fallthru
    _
  %v30 = vld [vmem:[%s0] sm:$0xf]
  %v31 = vld [vmem:[%s0 + $0x4] sm:$0xf]
  %v32 = vld [vmem:[%s1] sm:$0xf]
  %v33 = vld [vmem:[%s1 + $0x4] sm:$0xf]
  %v34 = vld [vmem:[%s1 + $0x8] sm:$0xf]
  %v35 = vld [vmem:[%s1 + $0xc] sm:$0xf]
  %v36 = vld [vmem:[%s1 + $0x10] sm:$0xf]
  %v37 = vld [vmem:[%s1 + $0x14] sm:$0xf]
  %v38 = vld [vmem:[%s1 + $0x18] sm:$0xf]
  %v39 = vld [vmem:[%s1 + $0x1c] sm:$0xf]
  %v40 = vld [vmem:[%s1 + $0x20] sm:$0xf]
  %v41 = vld [vmem:[%s1 + $0x24] sm:$0xf]
  %v42 = vld [vmem:[%s1 + $0x28] sm:$0xf]
  %v43 = vld [vmem:[%s1 + $0x2c] sm:$0xf]
  %v44 = vld [vmem:[%s1 + $0x30] sm:$0xf]
  %v45 = vld [vmem:[%s1 + $0x34] sm:$0xf]
  %v46 = vld [vmem:[%s1 + $0x38] sm:$0xf]
  %v47 = vld [vmem:[%s1 + $0x3c] sm:$0xf]
  %v48 = vld [vmem:[%s2] sm:$0x1]
  %v50 = vperm.slane %v48, 0
  %v54 = vunpack.c.l.b16 %v30
  %v55 = vunpack.c.l.b16 %v31
  %v56 = vpack.c.b16 %v55, %v54
  %v74 = vunpack.c.l.b16 %v32
  %v75 = vunpack.c.l.b16 %v33
  %v76 = vunpack.c.l.b16 %v34
  %v77 = vunpack.c.l.b16 %v35
  %v78 = vunpack.c.l.b16 %v36
  %v79 = vunpack.c.l.b16 %v37
  %v80 = vunpack.c.l.b16 %v38
  %v81 = vunpack.c.l.b16 %v39
  %v82 = vunpack.c.l.b16 %v40
  %v83 = vunpack.c.l.b16 %v41
  %v84 = vunpack.c.l.b16 %v42
  %v85 = vunpack.c.l.b16 %v43
  %v86 = vunpack.c.l.b16 %v44
  %v87 = vunpack.c.l.b16 %v45
  %v88 = vunpack.c.l.b16 %v46
  %v89 = vunpack.c.l.b16 %v47
  %v90 = vpack.c.b16 %v75, %v74
  %v91 = vpack.c.b16 %v77, %v76
  %v92 = vpack.c.b16 %v79, %v78
  %v93 = vpack.c.b16 %v81, %v80
  %v94 = vpack.c.b16 %v83, %v82
  %v95 = vpack.c.b16 %v85, %v84
  %v96 = vpack.c.b16 %v87, %v86
  %v97 = vpack.c.b16 %v89, %v88
  %106 = vmatpush.bf16.msra.mxu0 %v97
  %107 = vmatpush.bf16.msra.mxu0 %v96
  %108 = vmatpush.bf16.msra.mxu0 %v95
  %109 = vmatpush.bf16.msra.mxu0 %v94
  %110 = vmatpush.bf16.msra.mxu0 %v93
  %111 = vmatpush.bf16.msra.mxu0 %v92
  %112 = vmatpush.bf16.msra.mxu0 %v91
  %113 = vmatpush.bf16.msra.mxu0 %v90
  %114 = vmatmul.bf16.gmra.mxu0 %v56
  %v115 = vpop.f32.mrf.mxu0
  %v116 = vadd.f32 %v50, %v115
  %v117 = vpop.f32.mrf.mxu0
  %v118 = vadd.f32 %v50, %v117
  %119 = vdwg.mxu0
  %v120 = vmax.f32 %v116, 0.0
  %v121 = vmax.f32 %v118, 0.0
  %v122 = vpack.c.bf16 %v121, %v120
  %v123 = vld [vmem:[%s3] sm:$0xf]
  %v124 = vld [vmem:[%s3 + $0x4] sm:$0xf]
  %v125 = vld [vmem:[%s3 + $0x8] sm:$0xf]
  %v126 = vld [vmem:[%s3 + $0xc] sm:$0xf]
  %v127 = vld [vmem:[%s3 + $0x10] sm:$0xf]
  %v128 = vld [vmem:[%s3 + $0x14] sm:$0xf]
  %v129 = vld [vmem:[%s3 + $0x18] sm:$0xf]
  %v130 = vld [vmem:[%s3 + $0x1c] sm:$0xf]
  %v131 = vld [vmem:[%s4] sm:$0x1]
  %v133 = vperm.slane %v131, 0
  %v143 = vunpack.c.l.b16 %v123
  %v144 = vunpack.c.l.b16 %v124
  %v145 = vunpack.c.l.b16 %v125
  %v146 = vunpack.c.l.b16 %v126
  %v147 = vunpack.c.l.b16 %v127
  %v148 = vunpack.c.l.b16 %v128
  %v149 = vunpack.c.l.b16 %v129
  %v150 = vunpack.c.l.b16 %v130
  %v151 = vpack.c.b16 %v144, %v143
  %v152 = vpack.c.b16 %v146, %v145
  %v153 = vpack.c.b16 %v148, %v147
  %v154 = vpack.c.b16 %v150, %v149
  %vm159 = vcmask 523264
  %v161 = vsel %vm159, %v122, 0
  %163 = vmatpush.bf16.msra.mxu0 0
  %164 = vmatpush.bf16.msra.mxu0 0
  %165 = vmatpush.bf16.msra.mxu0 0
  %166 = vmatpush.bf16.msra.mxu0 0
  %167 = vmatpush.bf16.msra.mxu0 %v154
  %168 = vmatpush.bf16.msra.mxu0 %v153
  %169 = vmatpush.bf16.msra.mxu0 %v152
  %170 = vmatpush.bf16.msra.mxu0 %v151
  %171 = vmatmul.bf16.gmra.mxu0 %v161
  %v172 = vpop.f32.mrf.mxu0
  %v173 = vadd.f32 %v133, %v172
  %v174 = vpop.f32.mrf.mxu0
  %v175 = vadd.f32 %v133, %v174
  %176 = vdwg.mxu0
  %v177 = vmax.f32 %v173, 0.0
  %v178 = vmax.f32 %v175, 0.0
  %v179 = vpack.c.bf16 %v178, %v177
  %v180 = vld [vmem:[%s5] sm:$0xf]
  %v181 = vld [vmem:[%s5 + $0x4] sm:$0xf]
  %v182 = vld [vmem:[%s5 + $0x8] sm:$0xf]
  %v183 = vld [vmem:[%s5 + $0xc] sm:$0xf]
  %v184 = vld [vmem:[%s6] sm:$0x1]
  %v186 = vperm.slane %v184, 0
  %v192 = vunpack.c.l.b16 %v180
  %v193 = vunpack.c.l.b16 %v181
  %v194 = vunpack.c.l.b16 %v182
  %v195 = vunpack.c.l.b16 %v183
  %v196 = vpack.c.b16 %v193, %v192
  %v197 = vpack.c.b16 %v195, %v194
  %vm200 = vcmask 261120
  %v202 = vsel %vm200, %v179, 0
  %204 = vmatpush.bf16.msra.mxu0 0
  %205 = vmatpush.bf16.msra.mxu0 0
  %206 = vmatpush.bf16.msra.mxu0 0
  %207 = vmatpush.bf16.msra.mxu0 0
  %208 = vmatpush.bf16.msra.mxu0 0
  %209 = vmatpush.bf16.msra.mxu0 0
  %210 = vmatpush.bf16.msra.mxu0 %v197
  %211 = vmatpush.bf16.msra.mxu0 %v196
  %212 = vmatmul.bf16.gmra.mxu0 %v202
  %v213 = vpop.f32.mrf.mxu0
  %v214 = vadd.f32 %v186, %v213
  %v215 = vpop.f32.mrf.mxu0
  %v216 = vadd.f32 %v186, %v215
  %217 = vdwg.mxu0
  %v218 = vmax.f32 %v214, 0.0
  %v219 = vmax.f32 %v216, 0.0
  %v220 = vpack.c.bf16 %v219, %v218
  %v221 = vld [vmem:[%s7] sm:$0xf]
  %v222 = vld [vmem:[%s7 + $0x4] sm:$0xf]
  %v223 = vld [vmem:[%s7 + $0x8] sm:$0xf]
  %v224 = vld [vmem:[%s7 + $0xc] sm:$0xf]
  %v229 = vunpack.c.l.b16 %v221
  %v230 = vunpack.c.l.b16 %v222
  %v231 = vunpack.c.l.b16 %v223
  %v232 = vunpack.c.l.b16 %v224
  %v233 = vpack.c.b16 %v230, %v229
  %v234 = vpack.c.b16 %v232, %v231
  %v238 = vsel %vm200, %v220, 0
  %240 = vmatpush.bf16.msra.mxu0 0
  %241 = vmatpush.bf16.msra.mxu0 0
  %242 = vmatpush.bf16.msra.mxu0 0
  %243 = vmatpush.bf16.msra.mxu0 0
  %244 = vmatpush.bf16.msra.mxu0 0
  %245 = vmatpush.bf16.msra.mxu0 0
  %246 = vmatpush.bf16.msra.mxu0 %v234
  %247 = vmatpush.bf16.msra.mxu0 %v233
  %248 = vmatmul.bf16.gmra.mxu0 %v238
  %v249 = vpop.f32.mrf.mxu0
  %v250 = vadd.f32 0.0, %v249
  %v251 = vpop.f32.mrf.mxu0
  %v252 = vadd.f32 0.0, %v251
  %253 = vdwg.mxu0
  %vm254 = vcmask 31744
  %v255 = vsel %vm254, %v250, -inf
  %256 = vmax.xlane.f32.xlu0 %v255
  %v257 = vpop.xlane.xlu0 %256
  %v258 = vsel %vm254, %v252, -inf
  %259 = vmax.xlane.f32.xlu0 %v258
  %v260 = vpop.xlane.xlu0 %259
  %v261 = vsub.f32 %v250, %v257
  %v262 = vsub.f32 %v252, %v260
  %v263 = vmul.f32 %v261, 1.442695
  %v264 = vpow.pop %v263
  %v265 = vmul.f32 %v262, 1.442695
  %v266 = vpow.pop %v265
  %v267 = vsel %vm254, %v264, 0.0
  %268 = vadd.xlane.f32.xlu0 %v267
  %v269 = vpop.xlane.xlu0 %268
  %v270 = vsel %vm254, %v266, 0.0
  %271 = vadd.xlane.f32.xlu0 %v270
  %v272 = vpop.xlane.xlu0 %271
  %v273 = vrcp.pop %v269
  %v274 = vrcp.pop %v272
  %v275 = vmul.f32 %v264, %v273
  %v276 = vmul.f32 %v266, %v274
  %277 = vst.msk [vmem:[%s8] sm:$0xff] %vm254, %v275
  %278 = vst.msk [vmem:[%s8 + $0x8] sm:$0xff] %vm254, %v276
  // Predicated region
  $region34: #{forward.5} parent=0 // pred_check
    _
  $region35: #{forward.5} parent=0 // pred_check_branch
    %280 = sbr.rel (0) target = $region37
  $region36: #{forward.5} parent=0 // pred_region
    _
  $region37: #{forward.5} parent=0 // pred_fallthru
    _
  // Predicated region
  $region38: #{forward.5} parent=0 // pred_check
    _
  $region39: #{forward.5} parent=0 // pred_check_branch
    %282 = sbr.rel (0) target = $region41
  $region40: #{forward.5} parent=0 // pred_region
    _
  $region41: #{forward.5} parent=0 // pred_fallthru
    _

// kernel: forward.4
$region0: #{forward.4}
  #allocation0 [shape = 'u32[]', space=smem, size = 0x4, offset = 0x4, fixed_abs, tag = 'smem constant byte address 0x4 - core index']
  #allocation1 [shape = 'u32[72,128]{1,0:T(1,128)}', space=vmem, size = 0x9000, scoped, tag = 'internal scratch']
  #allocation2 [shape = 'f32[8,16,512]{2,1,0:T(8,128)}', space=vmem, size = 0x40000, scoped, tag = 'scratch operand']
  #allocation3 [shape = 'f32[16,128]{1,0:T(8,128)}', space=vmem, size = 0x2000, scoped, tag = 'scratch operand']
  #allocation4 [shape = 'f32[16,128]{1,0:T(8,128)}', space=vmem, size = 0x2000, scoped, tag = 'scratch operand']
  #allocation5 [shape = 'f32[16,128]{1,0:T(8,128)}', space=vmem, size = 0x2000, scoped, tag = 'scratch operand']
  #allocation6 [shape = 'f32[16,128]{1,0:T(8,128)}', space=vmem, size = 0x2000, scoped, tag = 'scratch operand']
  %s0 = inlined_call_operand.vmem [shape: bf16[8,16,16], index: 0, kind: input, shape index: {}]
  %s1 = inlined_call_operand.vmem [shape: bf16[16,512], index: 1, kind: input, shape index: {}]
  %s2 = inlined_call_operand.vmem [shape: bf16[128,512], index: 2, kind: input, shape index: {}]
  %s3 = inlined_call_operand.vmem [shape: f32[1,512], index: 3, kind: input, shape index: {}]
  %s4 = inlined_call_operand.vmem [shape: f32[16,256], index: 4, kind: output, shape index: {}]
  %s5 = sld [smem:[#allocation0]]
  $region34: #{forward.4} parent=0
    _
  %s7 = ssub.s32 1, %s5
  %s8 = scalar_select 0, %s7, %s5
  // Predicated region
  $region2: #{forward.4} parent=0 // pred_check
    _
  $region3: #{forward.4} parent=0 // pred_check_branch
    %10 = sbr.rel (0) target = $region5
  $region4: #{forward.4} parent=0 // pred_region
    _
  $region5: #{forward.4} parent=0 // pred_fallthru
    _
  // Predicated region
  $region6: #{forward.4} parent=0 // pred_check
    _
  $region7: #{forward.4} parent=0 // pred_check_branch
    %12 = sbr.rel (0) target = $region9
  $region8: #{forward.4} parent=0 // pred_region
    _
  $region9: #{forward.4} parent=0 // pred_fallthru
    _
  // Predicated region
  $region10: #{forward.4} parent=0 // pred_check
    _
  $region11: #{forward.4} parent=0 // pred_check_branch
    %14 = sbr.rel (0) target = $region13
  $region12: #{forward.4} parent=0 // pred_region
    _
  $region13: #{forward.4} parent=0 // pred_fallthru
    _
  // Predicated region
  $region14: #{forward.4} parent=0 // pred_check
    _
  $region15: #{forward.4} parent=0 // pred_check_branch
    %16 = sbr.rel (0) target = $region17
  $region16: #{forward.4} parent=0 // pred_region
    _
  $region17: #{forward.4} parent=0 // pred_fallthru
    _
  %p18 = scmp.eq.s32.totalorder 0, 0
  // Predicated region
  $region18: #{forward.4} parent=0 // pred_check
    %p19 = pneg %p18
  $region19: #{forward.4} parent=0 // pred_check_branch
    %21 = sbr.rel (%p19) target = $region21
  $region20: #{forward.4} parent=0 // pred_region
    %22 = vst [vmem:[#allocation3] sm:$0xff] 0.0
    %23 = vst [vmem:[#allocation3 + $0x8] sm:$0xff] 0.0
    %24 = vst [vmem:[#allocation4] sm:$0xff] 0.0
    %25 = vst [vmem:[#allocation4 + $0x8] sm:$0xff] 0.0
    %26 = vst [vmem:[#allocation5] sm:$0xff] 0.0
    %27 = vst [vmem:[#allocation5 + $0x8] sm:$0xff] 0.0
    %28 = vst [vmem:[#allocation6] sm:$0xff] -inf
    %29 = vst [vmem:[#allocation6 + $0x8] sm:$0xff] -inf
  $region21: #{forward.4} parent=0 // pred_fallthru
    _
  %v30 = vld [vmem:[%s0] sm:$0xf]
  %v31 = vld [vmem:[%s0 + $0x4] sm:$0xf]
  %v32 = vld [vmem:[%s1] sm:$0xff]
  %v33 = vld [vmem:[%s1 + $0x8] sm:$0xff]
  %v34 = vld [vmem:[%s1 + $0x10] sm:$0xff]
  %v35 = vld [vmem:[%s1 + $0x18] sm:$0xff]
  %v36 = vld [vmem:[%s3] sm:$0xf]
  %v38 = vperm.slane %v36, 0
  %v39 = vperm.slane %v36, 1
  %v40 = vperm.slane %v36, 2
  %v41 = vperm.slane %v36, 3
  %v48 = vunpack.c.l.b16 %v30
  %v49 = vunpack.c.l.b16 %v31
  %v50 = vpack.c.b16 %v49, %v48
  %v55 = vunpack.c.l.b16 %v32
  %v56 = vunpack.c.h.b16 %v32
  %v57 = vunpack.c.l.b16 %v33
  %v58 = vunpack.c.h.b16 %v33
  %v59 = vunpack.c.l.b16 %v34
  %v60 = vunpack.c.h.b16 %v34
  %v61 = vunpack.c.l.b16 %v35
  %v62 = vunpack.c.h.b16 %v35
  %v63 = vpack.c.b16 %v59, %v55
  %v64 = vpack.c.b16 %v60, %v56
  %v65 = vpack.c.b16 %v61, %v57
  %v66 = vpack.c.b16 %v62, %v58
  %vm71 = vcmask 130048
  %v73 = vsel %vm71, %v50, 0
  %75 = vmatpush.bf16.msra.mxu0 0
  %76 = vmatpush.bf16.msra.mxu0 0
  %77 = vmatpush.bf16.msra.mxu0 0
  %78 = vmatpush.bf16.msra.mxu0 0
  %79 = vmatpush.bf16.msra.mxu0 0
  %80 = vmatpush.bf16.msra.mxu0 0
  %81 = vmatpush.bf16.msra.mxu0 0
  %82 = vmatpush.bf16.msra.mxu0 %v63
  %83 = vmatmul.bf16.gmra.mxu0 %v73
  %v84 = vpop.f32.mrf.mxu0
  %v85 = vadd.f32 %v38, %v84
  %v86 = vpop.f32.mrf.mxu0
  %v87 = vadd.f32 %v38, %v86
  %88 = vdwg.mxu0
  %89 = vmatpush.bf16.msra.mxu0 0
  %90 = vmatpush.bf16.msra.mxu0 0
  %91 = vmatpush.bf16.msra.mxu0 0
  %92 = vmatpush.bf16.msra.mxu0 0
  %93 = vmatpush.bf16.msra.mxu0 0
  %94 = vmatpush.bf16.msra.mxu0 0
  %95 = vmatpush.bf16.msra.mxu0 0
  %96 = vmatpush.bf16.msra.mxu0 %v64
  %97 = vmatmul.bf16.gmra.mxu0 %v73
  %v98 = vpop.f32.mrf.mxu0
  %v99 = vadd.f32 %v39, %v98
  %v100 = vpop.f32.mrf.mxu0
  %v101 = vadd.f32 %v39, %v100
  %102 = vdwg.mxu0
  %103 = vmatpush.bf16.msra.mxu0 0
  %104 = vmatpush.bf16.msra.mxu0 0
  %105 = vmatpush.bf16.msra.mxu0 0
  %106 = vmatpush.bf16.msra.mxu0 0
  %107 = vmatpush.bf16.msra.mxu0 0
  %108 = vmatpush.bf16.msra.mxu0 0
  %109 = vmatpush.bf16.msra.mxu0 0
  %110 = vmatpush.bf16.msra.mxu0 %v65
  %111 = vmatmul.bf16.gmra.mxu0 %v73
  %v112 = vpop.f32.mrf.mxu0
  %v113 = vadd.f32 %v40, %v112
  %v114 = vpop.f32.mrf.mxu0
  %v115 = vadd.f32 %v40, %v114
  %116 = vdwg.mxu0
  %117 = vmatpush.bf16.msra.mxu0 0
  %118 = vmatpush.bf16.msra.mxu0 0
  %119 = vmatpush.bf16.msra.mxu0 0
  %120 = vmatpush.bf16.msra.mxu0 0
  %121 = vmatpush.bf16.msra.mxu0 0
  %122 = vmatpush.bf16.msra.mxu0 0
  %123 = vmatpush.bf16.msra.mxu0 0
  %124 = vmatpush.bf16.msra.mxu0 %v66
  %125 = vmatmul.bf16.gmra.mxu0 %v73
  %v126 = vpop.f32.mrf.mxu0
  %v127 = vadd.f32 %v41, %v126
  %v128 = vpop.f32.mrf.mxu0
  %v129 = vadd.f32 %v41, %v128
  %130 = vdwg.mxu0
  %131 = vst [vmem:[#allocation2] sm:$0xff] %v85
  %132 = vst [vmem:[#allocation2 + $0x8] sm:$0xff] %v99
  %133 = vst [vmem:[#allocation2 + $0x10] sm:$0xff] %v113
  %134 = vst [vmem:[#allocation2 + $0x18] sm:$0xff] %v127
  %135 = vst [vmem:[#allocation2 + $0x20] sm:$0xff] %v87
  %136 = vst [vmem:[#allocation2 + $0x28] sm:$0xff] %v101
  %137 = vst [vmem:[#allocation2 + $0x30] sm:$0xff] %v115
  %138 = vst [vmem:[#allocation2 + $0x38] sm:$0xff] %v129
  %s139 = scalar_lea.vmem %s0, 8
  %v140 = vld [vmem:[%s139] sm:$0xf]
  %v141 = vld [vmem:[%s139 + $0x4] sm:$0xf]
  %v142 = vld [vmem:[%s1] sm:$0xff]
  %v143 = vld [vmem:[%s1 + $0x8] sm:$0xff]
  %v144 = vld [vmem:[%s1 + $0x10] sm:$0xff]
  %v145 = vld [vmem:[%s1 + $0x18] sm:$0xff]
  %v146 = vld [vmem:[%s3] sm:$0xf]
  %v148 = vperm.slane %v146, 0
  %v149 = vperm.slane %v146, 1
  %v150 = vperm.slane %v146, 2
  %v151 = vperm.slane %v146, 3
  %v158 = vunpack.c.l.b16 %v140
  %v159 = vunpack.c.l.b16 %v141
  %v160 = vpack.c.b16 %v159, %v158
  %v165 = vunpack.c.l.b16 %v142
  %v166 = vunpack.c.h.b16 %v142
  %v167 = vunpack.c.l.b16 %v143
  %v168 = vunpack.c.h.b16 %v143
  %v169 = vunpack.c.l.b16 %v144
  %v170 = vunpack.c.h.b16 %v144
  %v171 = vunpack.c.l.b16 %v145
  %v172 = vunpack.c.h.b16 %v145
  %v173 = vpack.c.b16 %v169, %v165
  %v174 = vpack.c.b16 %v170, %v166
  %v175 = vpack.c.b16 %v171, %v167
  %v176 = vpack.c.b16 %v172, %v168
  %v182 = vsel %vm71, %v160, 0
  %184 = vmatpush.bf16.msra.mxu0 0
  %185 = vmatpush.bf16.msra.mxu0 0
  %186 = vmatpush.bf16.msra.mxu0 0
  %187 = vmatpush.bf16.msra.mxu0 0
  %188 = vmatpush.bf16.msra.mxu0 0
  %189 = vmatpush.bf16.msra.mxu0 0
  %190 = vmatpush.bf16.msra.mxu0 0
  %191 = vmatpush.bf16.msra.mxu0 %v173
  %192 = vmatmul.bf16.gmra.mxu0 %v182
  %v193 = vpop.f32.mrf.mxu0
  %v194 = vadd.f32 %v148, %v193
  %v195 = vpop.f32.mrf.mxu0
  %v196 = vadd.f32 %v148, %v195
  %197 = vdwg.mxu0
  %198 = vmatpush.bf16.msra.mxu0 0
  %199 = vmatpush.bf16.msra.mxu0 0
  %200 = vmatpush.bf16.msra.mxu0 0
  %201 = vmatpush.bf16.msra.mxu0 0
  %202 = vmatpush.bf16.msra.mxu0 0
  %203 = vmatpush.bf16.msra.mxu0 0
  %204 = vmatpush.bf16.msra.mxu0 0
  %205 = vmatpush.bf16.msra.mxu0 %v174
  %206 = vmatmul.bf16.gmra.mxu0 %v182
  %v207 = vpop.f32.mrf.mxu0
  %v208 = vadd.f32 %v149, %v207
  %v209 = vpop.f32.mrf.mxu0
  %v210 = vadd.f32 %v149, %v209
  %211 = vdwg.mxu0
  %212 = vmatpush.bf16.msra.mxu0 0
  %213 = vmatpush.bf16.msra.mxu0 0
  %214 = vmatpush.bf16.msra.mxu0 0
  %215 = vmatpush.bf16.msra.mxu0 0
  %216 = vmatpush.bf16.msra.mxu0 0
  %217 = vmatpush.bf16.msra.mxu0 0
  %218 = vmatpush.bf16.msra.mxu0 0
  %219 = vmatpush.bf16.msra.mxu0 %v175
  %220 = vmatmul.bf16.gmra.mxu0 %v182
  %v221 = vpop.f32.mrf.mxu0
  %v222 = vadd.f32 %v150, %v221
  %v223 = vpop.f32.mrf.mxu0
  %v224 = vadd.f32 %v150, %v223
  %225 = vdwg.mxu0
  %226 = vmatpush.bf16.msra.mxu0 0
  %227 = vmatpush.bf16.msra.mxu0 0
  %228 = vmatpush.bf16.msra.mxu0 0
  %229 = vmatpush.bf16.msra.mxu0 0
  %230 = vmatpush.bf16.msra.mxu0 0
  %231 = vmatpush.bf16.msra.mxu0 0
  %232 = vmatpush.bf16.msra.mxu0 0
  %233 = vmatpush.bf16.msra.mxu0 %v176
  %234 = vmatmul.bf16.gmra.mxu0 %v182
  %v235 = vpop.f32.mrf.mxu0
  %v236 = vadd.f32 %v151, %v235
  %v237 = vpop.f32.mrf.mxu0
  %v238 = vadd.f32 %v151, %v237
  %239 = vdwg.mxu0
  %s240 = scalar_lea.vmem [#allocation2], 64
  %241 = vst [vmem:[%s240] sm:$0xff] %v194
  %242 = vst [vmem:[%s240 + $0x8] sm:$0xff] %v208
  %243 = vst [vmem:[%s240 + $0x10] sm:$0xff] %v222
  %244 = vst [vmem:[%s240 + $0x18] sm:$0xff] %v236
  %245 = vst [vmem:[%s240 + $0x20] sm:$0xff] %v196
  %246 = vst [vmem:[%s240 + $0x28] sm:$0xff] %v210
  %247 = vst [vmem:[%s240 + $0x30] sm:$0xff] %v224
  %248 = vst [vmem:[%s240 + $0x38] sm:$0xff] %v238
  %s249 = scalar_lea.vmem %s0, 16
  %v250 = vld [vmem:[%s249] sm:$0xf]
  %v251 = vld [vmem:[%s249 + $0x4] sm:$0xf]
  %v252 = vld [vmem:[%s1] sm:$0xff]
  %v253 = vld [vmem:[%s1 + $0x8] sm:$0xff]
  %v254 = vld [vmem:[%s1 + $0x10] sm:$0xff]
  %v255 = vld [vmem:[%s1 + $0x18] sm:$0xff]
  %v256 = vld [vmem:[%s3] sm:$0xf]
  %v258 = vperm.slane %v256, 0
  %v259 = vperm.slane %v256, 1
  %v260 = vperm.slane %v256, 2
  %v261 = vperm.slane %v256, 3
  %v268 = vunpack.c.l.b16 %v250
  %v269 = vunpack.c.l.b16 %v251
  %v270 = vpack.c.b16 %v269, %v268
  %v275 = vunpack.c.l.b16 %v252
  %v276 = vunpack.c.h.b16 %v252
  %v277 = vunpack.c.l.b16 %v253
  %v278 = vunpack.c.h.b16 %v253
  %v279 = vunpack.c.l.b16 %v254
  %v280 = vunpack.c.h.b16 %v254
  %v281 = vunpack.c.l.b16 %v255
  %v282 = vunpack.c.h.b16 %v255
  %v283 = vpack.c.b16 %v279, %v275
  %v284 = vpack.c.b16 %v280, %v276
  %v285 = vpack.c.b16 %v281, %v277
  %v286 = vpack.c.b16 %v282, %v278
  %v292 = vsel %vm71, %v270, 0
  %294 = vmatpush.bf16.msra.mxu0 0
  %295 = vmatpush.bf16.msra.mxu0 0
  %296 = vmatpush.bf16.msra.mxu0 0
  %297 = vmatpush.bf16.msra.mxu0 0
  %298 = vmatpush.bf16.msra.mxu0 0
  %299 = vmatpush.bf16.msra.mxu0 0
  %300 = vmatpush.bf16.msra.mxu0 0
  %301 = vmatpush.bf16.msra.mxu0 %v283
  %302 = vmatmul.bf16.gmra.mxu0 %v292
  %v303 = vpop.f32.mrf.mxu0
  %v304 = vadd.f32 %v258, %v303
  %v305 = vpop.f32.mrf.mxu0
  %v306 = vadd.f32 %v258, %v305
  %307 = vdwg.mxu0
  %308 = vmatpush.bf16.msra.mxu0 0
  %309 = vmatpush.bf16.msra.mxu0 0
  %310 = vmatpush.bf16.msra.mxu0 0
  %311 = vmatpush.bf16.msra.mxu0 0
  %312 = vmatpush.bf16.msra.mxu0 0
  %313 = vmatpush.bf16.msra.mxu0 0
  %314 = vmatpush.bf16.msra.mxu0 0
  %315 = vmatpush.bf16.msra.mxu0 %v284
  %316 = vmatmul.bf16.gmra.mxu0 %v292
  %v317 = vpop.f32.mrf.mxu0
  %v318 = vadd.f32 %v259, %v317
  %v319 = vpop.f32.mrf.mxu0
  %v320 = vadd.f32 %v259, %v319
  %321 = vdwg.mxu0
  %322 = vmatpush.bf16.msra.mxu0 0
  %323 = vmatpush.bf16.msra.mxu0 0
  %324 = vmatpush.bf16.msra.mxu0 0
  %325 = vmatpush.bf16.msra.mxu0 0
  %326 = vmatpush.bf16.msra.mxu0 0
  %327 = vmatpush.bf16.msra.mxu0 0
  %328 = vmatpush.bf16.msra.mxu0 0
  %329 = vmatpush.bf16.msra.mxu0 %v285
  %330 = vmatmul.bf16.gmra.mxu0 %v292
  %v331 = vpop.f32.mrf.mxu0
  %v332 = vadd.f32 %v260, %v331
  %v333 = vpop.f32.mrf.mxu0
  %v334 = vadd.f32 %v260, %v333
  %335 = vdwg.mxu0
  %336 = vmatpush.bf16.msra.mxu0 0
  %337 = vmatpush.bf16.msra.mxu0 0
  %338 = vmatpush.bf16.msra.mxu0 0
  %339 = vmatpush.bf16.msra.mxu0 0
  %340 = vmatpush.bf16.msra.mxu0 0
  %341 = vmatpush.bf16.msra.mxu0 0
  %342 = vmatpush.bf16.msra.mxu0 0
  %343 = vmatpush.bf16.msra.mxu0 %v286
  %344 = vmatmul.bf16.gmra.mxu0 %v292
  %v345 = vpop.f32.mrf.mxu0
  %v346 = vadd.f32 %v261, %v345
  %v347 = vpop.f32.mrf.mxu0
  %v348 = vadd.f32 %v261, %v347
  %349 = vdwg.mxu0
  %s350 = scalar_lea.vmem [#allocation2], 128
  %351 = vst [vmem:[%s350] sm:$0xff] %v304
  %352 = vst [vmem:[%s350 + $0x8] sm:$0xff] %v318
  %353 = vst [vmem:[%s350 + $0x10] sm:$0xff] %v332
  %354 = vst [vmem:[%s350 + $0x18] sm:$0xff] %v346
  %355 = vst [vmem:[%s350 + $0x20] sm:$0xff] %v306
  %356 = vst [vmem:[%s350 + $0x28] sm:$0xff] %v320
  %357 = vst [vmem:[%s350 + $0x30] sm:$0xff] %v334
  %358 = vst [vmem:[%s350 + $0x38] sm:$0xff] %v348
  %s359 = scalar_lea.vmem %s0, 24
  %v360 = vld [vmem:[%s359] sm:$0xf]
  %v361 = vld [vmem:[%s359 + $0x4] sm:$0xf]
  %v362 = vld [vmem:[%s1] sm:$0xff]
  %v363 = vld [vmem:[%s1 + $0x8] sm:$0xff]
  %v364 = vld [vmem:[%s1 + $0x10] sm:$0xff]
  %v365 = vld [vmem:[%s1 + $0x18] sm:$0xff]
  %v366 = vld [vmem:[%s3] sm:$0xf]
  %v368 = vperm.slane %v366, 0
  %v369 = vperm.slane %v366, 1
  %v370 = vperm.slane %v366, 2
  %v371 = vperm.slane %v366, 3
  %v378 = vunpack.c.l.b16 %v360
  %v379 = vunpack.c.l.b16 %v361
  %v380 = vpack.c.b16 %v379, %v378
  %v385 = vunpack.c.l.b16 %v362
  %v386 = vunpack.c.h.b16 %v362
  %v387 = vunpack.c.l.b16 %v363
  %v388 = vunpack.c.h.b16 %v363
  %v389 = vunpack.c.l.b16 %v364
  %v390 = vunpack.c.h.b16 %v364
  %v391 = vunpack.c.l.b16 %v365
  %v392 = vunpack.c.h.b16 %v365
  %v393 = vpack.c.b16 %v389, %v385
  %v394 = vpack.c.b16 %v390, %v386
  %v395 = vpack.c.b16 %v391, %v387
  %v396 = vpack.c.b16 %v392, %v388
  %v402 = vsel %vm71, %v380, 0
  %404 = vmatpush.bf16.msra.mxu0 0
  %405 = vmatpush.bf16.msra.mxu0 0
  %406 = vmatpush.bf16.msra.mxu0 0
  %407 = vmatpush.bf16.msra.mxu0 0
  %408 = vmatpush.bf16.msra.mxu0 0
  %409 = vmatpush.bf16.msra.mxu0 0
  %410 = vmatpush.bf16.msra.mxu0 0
  %411 = vmatpush.bf16.msra.mxu0 %v393
  %412 = vmatmul.bf16.gmra.mxu0 %v402
  %v413 = vpop.f32.mrf.mxu0
  %v414 = vadd.f32 %v368, %v413
  %v415 = vpop.f32.mrf.mxu0
  %v416 = vadd.f32 %v368, %v415
  %417 = vdwg.mxu0
  %418 = vmatpush.bf16.msra.mxu0 0
  %419 = vmatpush.bf16.msra.mxu0 0
  %420 = vmatpush.bf16.msra.mxu0 0
  %421 = vmatpush.bf16.msra.mxu0 0
  %422 = vmatpush.bf16.msra.mxu0 0
  %423 = vmatpush.bf16.msra.mxu0 0
  %424 = vmatpush.bf16.msra.mxu0 0
  %425 = vmatpush.bf16.msra.mxu0 %v394
  %426 = vmatmul.bf16.gmra.mxu0 %v402
  %v427 = vpop.f32.mrf.mxu0
  %v428 = vadd.f32 %v369, %v427
  %v429 = vpop.f32.mrf.mxu0
  %v430 = vadd.f32 %v369, %v429
  %431 = vdwg.mxu0
  %432 = vmatpush.bf16.msra.mxu0 0
  %433 = vmatpush.bf16.msra.mxu0 0
  %434 = vmatpush.bf16.msra.mxu0 0
  %435 = vmatpush.bf16.msra.mxu0 0
  %436 = vmatpush.bf16.msra.mxu0 0
  %437 = vmatpush.bf16.msra.mxu0 0
  %438 = vmatpush.bf16.msra.mxu0 0
  %439 = vmatpush.bf16.msra.mxu0 %v395
  %440 = vmatmul.bf16.gmra.mxu0 %v402
  %v441 = vpop.f32.mrf.mxu0
  %v442 = vadd.f32 %v370, %v441
  %v443 = vpop.f32.mrf.mxu0
  %v444 = vadd.f32 %v370, %v443
  %445 = vdwg.mxu0
  %446 = vmatpush.bf16.msra.mxu0 0
  %447 = vmatpush.bf16.msra.mxu0 0
  %448 = vmatpush.bf16.msra.mxu0 0
  %449 = vmatpush.bf16.msra.mxu0 0
  %450 = vmatpush.bf16.msra.mxu0 0
  %451 = vmatpush.bf16.msra.mxu0 0
  %452 = vmatpush.bf16.msra.mxu0 0
  %453 = vmatpush.bf16.msra.mxu0 %v396
  %454 = vmatmul.bf16.gmra.mxu0 %v402
  %v455 = vpop.f32.mrf.mxu0
  %v456 = vadd.f32 %v371, %v455
  %v457 = vpop.f32.mrf.mxu0
  %v458 = vadd.f32 %v371, %v457
  %459 = vdwg.mxu0
  %s460 = scalar_lea.vmem [#allocation2], 192
  %461 = vst [vmem:[%s460] sm:$0xff] %v414
  %462 = vst [vmem:[%s460 + $0x8] sm:$0xff] %v428
  %463 = vst [vmem:[%s460 + $0x10] sm:$0xff] %v442
  %464 = vst [vmem:[%s460 + $0x18] sm:$0xff] %v456
  %465 = vst [vmem:[%s460 + $0x20] sm:$0xff] %v416
  %466 = vst [vmem:[%s460 + $0x28] sm:$0xff] %v430
  %467 = vst [vmem:[%s460 + $0x30] sm:$0xff] %v444
  %468 = vst [vmem:[%s460 + $0x38] sm:$0xff] %v458
  %s469 = scalar_lea.vmem %s0, 32
  %v470 = vld [vmem:[%s469] sm:$0xf]
  %v471 = vld [vmem:[%s469 + $0x4] sm:$0xf]
  %v472 = vld [vmem:[%s1] sm:$0xff]
  %v473 = vld [vmem:[%s1 + $0x8] sm:$0xff]
  %v474 = vld [vmem:[%s1 + $0x10] sm:$0xff]
  %v475 = vld [vmem:[%s1 + $0x18] sm:$0xff]
  %v476 = vld [vmem:[%s3] sm:$0xf]
  %v478 = vperm.slane %v476, 0
  %v479 = vperm.slane %v476, 1
  %v480 = vperm.slane %v476, 2
  %v481 = vperm.slane %v476, 3
  %v488 = vunpack.c.l.b16 %v470
  %v489 = vunpack.c.l.b16 %v471
  %v490 = vpack.c.b16 %v489, %v488
  %v495 = vunpack.c.l.b16 %v472
  %v496 = vunpack.c.h.b16 %v472
  %v497 = vunpack.c.l.b16 %v473
  %v498 = vunpack.c.h.b16 %v473
  %v499 = vunpack.c.l.b16 %v474
  %v500 = vunpack.c.h.b16 %v474
  %v501 = vunpack.c.l.b16 %v475
  %v502 = vunpack.c.h.b16 %v475
  %v503 = vpack.c.b16 %v499, %v495
  %v504 = vpack.c.b16 %v500, %v496
  %v505 = vpack.c.b16 %v501, %v497
  %v506 = vpack.c.b16 %v502, %v498
  %v512 = vsel %vm71, %v490, 0
  %514 = vmatpush.bf16.msra.mxu0 0
  %515 = vmatpush.bf16.msra.mxu0 0
  %516 = vmatpush.bf16.msra.mxu0 0
  %517 = vmatpush.bf16.msra.mxu0 0
  %518 = vmatpush.bf16.msra.mxu0 0
  %519 = vmatpush.bf16.msra.mxu0 0
  %520 = vmatpush.bf16.msra.mxu0 0
  %521 = vmatpush.bf16.msra.mxu0 %v503
  %522 = vmatmul.bf16.gmra.mxu0 %v512
  %v523 = vpop.f32.mrf.mxu0
  %v524 = vadd.f32 %v478, %v523
  %v525 = vpop.f32.mrf.mxu0
  %v526 = vadd.f32 %v478, %v525
  %527 = vdwg.mxu0
  %528 = vmatpush.bf16.msra.mxu0 0
  %529 = vmatpush.bf16.msra.mxu0 0
  %530 = vmatpush.bf16.msra.mxu0 0
  %531 = vmatpush.bf16.msra.mxu0 0
  %532 = vmatpush.bf16.msra.mxu0 0
  %533 = vmatpush.bf16.msra.mxu0 0
  %534 = vmatpush.bf16.msra.mxu0 0
  %535 = vmatpush.bf16.msra.mxu0 %v504
  %536 = vmatmul.bf16.gmra.mxu0 %v512
  %v537 = vpop.f32.mrf.mxu0
  %v538 = vadd.f32 %v479, %v537
  %v539 = vpop.f32.mrf.mxu0
  %v540 = vadd.f32 %v479, %v539
  %541 = vdwg.mxu0
  %542 = vmatpush.bf16.msra.mxu0 0
  %543 = vmatpush.bf16.msra.mxu0 0
  %544 = vmatpush.bf16.msra.mxu0 0
  %545 = vmatpush.bf16.msra.mxu0 0
  %546 = vmatpush.bf16.msra.mxu0 0
  %547 = vmatpush.bf16.msra.mxu0 0
  %548 = vmatpush.bf16.msra.mxu0 0
  %549 = vmatpush.bf16.msra.mxu0 %v505
  %550 = vmatmul.bf16.gmra.mxu0 %v512
  %v551 = vpop.f32.mrf.mxu0
  %v552 = vadd.f32 %v480, %v551
  %v553 = vpop.f32.mrf.mxu0
  %v554 = vadd.f32 %v480, %v553
  %555 = vdwg.mxu0
  %556 = vmatpush.bf16.msra.mxu0 0
  %557 = vmatpush.bf16.msra.mxu0 0
  %558 = vmatpush.bf16.msra.mxu0 0
  %559 = vmatpush.bf16.msra.mxu0 0
  %560 = vmatpush.bf16.msra.mxu0 0
  %561 = vmatpush.bf16.msra.mxu0 0
  %562 = vmatpush.bf16.msra.mxu0 0
  %563 = vmatpush.bf16.msra.mxu0 %v506
  %564 = vmatmul.bf16.gmra.mxu0 %v512
  %v565 = vpop.f32.mrf.mxu0
  %v566 = vadd.f32 %v481, %v565
  %v567 = vpop.f32.mrf.mxu0
  %v568 = vadd.f32 %v481, %v567
  %569 = vdwg.mxu0
  %s570 = scalar_lea.vmem [#allocation2], 256
  %571 = vst [vmem:[%s570] sm:$0xff] %v524
  %572 = vst [vmem:[%s570 + $0x8] sm:$0xff] %v538
  %573 = vst [vmem:[%s570 + $0x10] sm:$0xff] %v552
  %574 = vst [vmem:[%s570 + $0x18] sm:$0xff] %v566
  %575 = vst [vmem:[%s570 + $0x20] sm:$0xff] %v526
  %576 = vst [vmem:[%s570 + $0x28] sm:$0xff] %v540
  %577 = vst [vmem:[%s570 + $0x30] sm:$0xff] %v554
  %578 = vst [vmem:[%s570 + $0x38] sm:$0xff] %v568
  %s579 = scalar_lea.vmem %s0, 40
  %v580 = vld [vmem:[%s579] sm:$0xf]
  %v581 = vld [vmem:[%s579 + $0x4] sm:$0xf]
  %v582 = vld [vmem:[%s1] sm:$0xff]
  %v583 = vld [vmem:[%s1 + $0x8] sm:$0xff]
  %v584 = vld [vmem:[%s1 + $0x10] sm:$0xff]
  %v585 = vld [vmem:[%s1 + $0x18] sm:$0xff]
  %v586 = vld [vmem:[%s3] sm:$0xf]
  %v588 = vperm.slane %v586, 0
  %v589 = vperm.slane %v586, 1
  %v590 = vperm.slane %v586, 2
  %v591 = vperm.slane %v586, 3
  %v598 = vunpack.c.l.b16 %v580
  %v599 = vunpack.c.l.b16 %v581
  %v600 = vpack.c.b16 %v599, %v598
  %v605 = vunpack.c.l.b16 %v582
  %v606 = vunpack.c.h.b16 %v582
  %v607 = vunpack.c.l.b16 %v583
  %v608 = vunpack.c.h.b16 %v583
  %v609 = vunpack.c.l.b16 %v584
  %v610 = vunpack.c.h.b16 %v584
  %v611 = vunpack.c.l.b16 %v585
  %v612 = vunpack.c.h.b16 %v585
  %v613 = vpack.c.b16 %v609, %v605
  %v614 = vpack.c.b16 %v610, %v606
  %v615 = vpack.c.b16 %v611, %v607
  %v616 = vpack.c.b16 %v612, %v608
  %v622 = vsel %vm71, %v600, 0
  %624 = vmatpush.bf16.msra.mxu0 0
  %625 = vmatpush.bf16.msra.mxu0 0
  %626 = vmatpush.bf16.msra.mxu0 0
  %627 = vmatpush.bf16.msra.mxu0 0
  %628 = vmatpush.bf16.msra.mxu0 0
  %629 = vmatpush.bf16.msra.mxu0 0
  %630 = vmatpush.bf16.msra.mxu0 0
  %631 = vmatpush.bf16.msra.mxu0 %v613
  %632 = vmatmul.bf16.gmra.mxu0 %v622
  %v633 = vpop.f32.mrf.mxu0
  %v634 = vadd.f32 %v588, %v633
  %v635 = vpop.f32.mrf.mxu0
  %v636 = vadd.f32 %v588, %v635
  %637 = vdwg.mxu0
  %638 = vmatpush.bf16.msra.mxu0 0
  %639 = vmatpush.bf16.msra.mxu0 0
  %640 = vmatpush.bf16.msra.mxu0 0
  %641 = vmatpush.bf16.msra.mxu0 0
  %642 = vmatpush.bf16.msra.mxu0 0
  %643 = vmatpush.bf16.msra.mxu0 0
  %644 = vmatpush.bf16.msra.mxu0 0
  %645 = vmatpush.bf16.msra.mxu0 %v614
  %646 = vmatmul.bf16.gmra.mxu0 %v622
  %v647 = vpop.f32.mrf.mxu0
  %v648 = vadd.f32 %v589, %v647
  %v649 = vpop.f32.mrf.mxu0
  %v650 = vadd.f32 %v589, %v649
  %651 = vdwg.mxu0
  %652 = vmatpush.bf16.msra.mxu0 0
  %653 = vmatpush.bf16.msra.mxu0 0
  %654 = vmatpush.bf16.msra.mxu0 0
  %655 = vmatpush.bf16.msra.mxu0 0
  %656 = vmatpush.bf16.msra.mxu0 0
  %657 = vmatpush.bf16.msra.mxu0 0
  %658 = vmatpush.bf16.msra.mxu0 0
  %659 = vmatpush.bf16.msra.mxu0 %v615
  %660 = vmatmul.bf16.gmra.mxu0 %v622
  %v661 = vpop.f32.mrf.mxu0
  %v662 = vadd.f32 %v590, %v661
  %v663 = vpop.f32.mrf.mxu0
  %v664 = vadd.f32 %v590, %v663
  %665 = vdwg.mxu0
  %666 = vmatpush.bf16.msra.mxu0 0
  %667 = vmatpush.bf16.msra.mxu0 0
  %668 = vmatpush.bf16.msra.mxu0 0
  %669 = vmatpush.bf16.msra.mxu0 0
  %670 = vmatpush.bf16.msra.mxu0 0
  %671 = vmatpush.bf16.msra.mxu0 0
  %672 = vmatpush.bf16.msra.mxu0 0
  %673 = vmatpush.bf16.msra.mxu0 %v616
  %674 = vmatmul.bf16.gmra.mxu0 %v622
  %v675 = vpop.f32.mrf.mxu0
  %v676 = vadd.f32 %v591, %v675
  %v677 = vpop.f32.mrf.mxu0
  %v678 = vadd.f32 %v591, %v677
  %679 = vdwg.mxu0
  %s680 = scalar_lea.vmem [#allocation2], 320
  %681 = vst [vmem:[%s680] sm:$0xff] %v634
  %682 = vst [vmem:[%s680 + $0x8] sm:$0xff] %v648
  %683 = vst [vmem:[%s680 + $0x10] sm:$0xff] %v662
  %684 = vst [vmem:[%s680 + $0x18] sm:$0xff] %v676
  %685 = vst [vmem:[%s680 + $0x20] sm:$0xff] %v636
  %686 = vst [vmem:[%s680 + $0x28] sm:$0xff] %v650
  %687 = vst [vmem:[%s680 + $0x30] sm:$0xff] %v664
  %688 = vst [vmem:[%s680 + $0x38] sm:$0xff] %v678
  %s689 = scalar_lea.vmem %s0, 48
  %v690 = vld [vmem:[%s689] sm:$0xf]
  %v691 = vld [vmem:[%s689 + $0x4] sm:$0xf]
  %v692 = vld [vmem:[%s1] sm:$0xff]
  %v693 = vld [vmem:[%s1 + $0x8] sm:$0xff]
  %v694 = vld [vmem:[%s1 + $0x10] sm:$0xff]
  %v695 = vld [vmem:[%s1 + $0x18] sm:$0xff]
  %v696 = vld [vmem:[%s3] sm:$0xf]
  %v698 = vperm.slane %v696, 0
  %v699 = vperm.slane %v696, 1
  %v700 = vperm.slane %v696, 2
  %v701 = vperm.slane %v696, 3
  %v708 = vunpack.c.l.b16 %v690
  %v709 = vunpack.c.l.b16 %v691
  %v710 = vpack.c.b16 %v709, %v708
  %v715 = vunpack.c.l.b16 %v692
  %v716 = vunpack.c.h.b16 %v692
  %v717 = vunpack.c.l.b16 %v693
  %v718 = vunpack.c.h.b16 %v693
  %v719 = vunpack.c.l.b16 %v694
  %v720 = vunpack.c.h.b16 %v694
  %v721 = vunpack.c.l.b16 %v695
  %v722 = vunpack.c.h.b16 %v695
  %v723 = vpack.c.b16 %v719, %v715
  %v724 = vpack.c.b16 %v720, %v716
  %v725 = vpack.c.b16 %v721, %v717
  %v726 = vpack.c.b16 %v722, %v718
  %v732 = vsel %vm71, %v710, 0
  %734 = vmatpush.bf16.msra.mxu0 0
  %735 = vmatpush.bf16.msra.mxu0 0
  %736 = vmatpush.bf16.msra.mxu0 0
  %737 = vmatpush.bf16.msra.mxu0 0
  %738 = vmatpush.bf16.msra.mxu0 0
  %739 = vmatpush.bf16.msra.mxu0 0
  %740 = vmatpush.bf16.msra.mxu0 0
  %741 = vmatpush.bf16.msra.mxu0 %v723
  %742 = vmatmul.bf16.gmra.mxu0 %v732
  %v743 = vpop.f32.mrf.mxu0
  %v744 = vadd.f32 %v698, %v743
  %v745 = vpop.f32.mrf.mxu0
  %v746 = vadd.f32 %v698, %v745
  %747 = vdwg.mxu0
  %748 = vmatpush.bf16.msra.mxu0 0
  %749 = vmatpush.bf16.msra.mxu0 0
  %750 = vmatpush.bf16.msra.mxu0 0
  %751 = vmatpush.bf16.msra.mxu0 0
  %752 = vmatpush.bf16.msra.mxu0 0
  %753 = vmatpush.bf16.msra.mxu0 0
  %754 = vmatpush.bf16.msra.mxu0 0
  %755 = vmatpush.bf16.msra.mxu0 %v724
  %756 = vmatmul.bf16.gmra.mxu0 %v732
  %v757 = vpop.f32.mrf.mxu0
  %v758 = vadd.f32 %v699, %v757
  %v759 = vpop.f32.mrf.mxu0
  %v760 = vadd.f32 %v699, %v759
  %761 = vdwg.mxu0
  %762 = vmatpush.bf16.msra.mxu0 0
  %763 = vmatpush.bf16.msra.mxu0 0
  %764 = vmatpush.bf16.msra.mxu0 0
  %765 = vmatpush.bf16.msra.mxu0 0
  %766 = vmatpush.bf16.msra.mxu0 0
  %767 = vmatpush.bf16.msra.mxu0 0
  %768 = vmatpush.bf16.msra.mxu0 0
  %769 = vmatpush.bf16.msra.mxu0 %v725
  %770 = vmatmul.bf16.gmra.mxu0 %v732
  %v771 = vpop.f32.mrf.mxu0
  %v772 = vadd.f32 %v700, %v771
  %v773 = vpop.f32.mrf.mxu0
  %v774 = vadd.f32 %v700, %v773
  %775 = vdwg.mxu0
  %776 = vmatpush.bf16.msra.mxu0 0
  %777 = vmatpush.bf16.msra.mxu0 0
  %778 = vmatpush.bf16.msra.mxu0 0
  %779 = vmatpush.bf16.msra.mxu0 0
  %780 = vmatpush.bf16.msra.mxu0 0
  %781 = vmatpush.bf16.msra.mxu0 0
  %782 = vmatpush.bf16.msra.mxu0 0
  %783 = vmatpush.bf16.msra.mxu0 %v726
  %784 = vmatmul.bf16.gmra.mxu0 %v732
  %v785 = vpop.f32.mrf.mxu0
  %v786 = vadd.f32 %v701, %v785
  %v787 = vpop.f32.mrf.mxu0
  %v788 = vadd.f32 %v701, %v787
  %789 = vdwg.mxu0
  %s790 = scalar_lea.vmem [#allocation2], 384
  %791 = vst [vmem:[%s790] sm:$0xff] %v744
  %792 = vst [vmem:[%s790 + $0x8] sm:$0xff] %v758
  %793 = vst [vmem:[%s790 + $0x10] sm:$0xff] %v772
  %794 = vst [vmem:[%s790 + $0x18] sm:$0xff] %v786
  %795 = vst [vmem:[%s790 + $0x20] sm:$0xff] %v746
  %796 = vst [vmem:[%s790 + $0x28] sm:$0xff] %v760
  %797 = vst [vmem:[%s790 + $0x30] sm:$0xff] %v774
  %798 = vst [vmem:[%s790 + $0x38] sm:$0xff] %v788
  %s799 = scalar_lea.vmem %s0, 56
  %v800 = vld [vmem:[%s799] sm:$0xf]
  %v801 = vld [vmem:[%s799 + $0x4] sm:$0xf]
  %v802 = vld [vmem:[%s1] sm:$0xff]
  %v803 = vld [vmem:[%s1 + $0x8] sm:$0xff]
  %v804 = vld [vmem:[%s1 + $0x10] sm:$0xff]
  %v805 = vld [vmem:[%s1 + $0x18] sm:$0xff]
  %v806 = vld [vmem:[%s3] sm:$0xf]
  %v808 = vperm.slane %v806, 0
  %v809 = vperm.slane %v806, 1
  %v810 = vperm.slane %v806, 2
  %v811 = vperm.slane %v806, 3
  %v818 = vunpack.c.l.b16 %v800
  %v819 = vunpack.c.l.b16 %v801
  %v820 = vpack.c.b16 %v819, %v818
  %v825 = vunpack.c.l.b16 %v802
  %v826 = vunpack.c.h.b16 %v802
  %v827 = vunpack.c.l.b16 %v803
  %v828 = vunpack.c.h.b16 %v803
  %v829 = vunpack.c.l.b16 %v804
  %v830 = vunpack.c.h.b16 %v804
  %v831 = vunpack.c.l.b16 %v805
  %v832 = vunpack.c.h.b16 %v805
  %v833 = vpack.c.b16 %v829, %v825
  %v834 = vpack.c.b16 %v830, %v826
  %v835 = vpack.c.b16 %v831, %v827
  %v836 = vpack.c.b16 %v832, %v828
  %v842 = vsel %vm71, %v820, 0
  %844 = vmatpush.bf16.msra.mxu0 0
  %845 = vmatpush.bf16.msra.mxu0 0
  %846 = vmatpush.bf16.msra.mxu0 0
  %847 = vmatpush.bf16.msra.mxu0 0
  %848 = vmatpush.bf16.msra.mxu0 0
  %849 = vmatpush.bf16.msra.mxu0 0
  %850 = vmatpush.bf16.msra.mxu0 0
  %851 = vmatpush.bf16.msra.mxu0 %v833
  %852 = vmatmul.bf16.gmra.mxu0 %v842
  %v853 = vpop.f32.mrf.mxu0
  %v854 = vadd.f32 %v808, %v853
  %v855 = vpop.f32.mrf.mxu0
  %v856 = vadd.f32 %v808, %v855
  %857 = vdwg.mxu0
  %858 = vmatpush.bf16.msra.mxu0 0
  %859 = vmatpush.bf16.msra.mxu0 0
  %860 = vmatpush.bf16.msra.mxu0 0
  %861 = vmatpush.bf16.msra.mxu0 0
  %862 = vmatpush.bf16.msra.mxu0 0
  %863 = vmatpush.bf16.msra.mxu0 0
  %864 = vmatpush.bf16.msra.mxu0 0
  %865 = vmatpush.bf16.msra.mxu0 %v834
  %866 = vmatmul.bf16.gmra.mxu0 %v842
  %v867 = vpop.f32.mrf.mxu0
  %v868 = vadd.f32 %v809, %v867
  %v869 = vpop.f32.mrf.mxu0
  %v870 = vadd.f32 %v809, %v869
  %871 = vdwg.mxu0
  %872 = vmatpush.bf16.msra.mxu0 0
  %873 = vmatpush.bf16.msra.mxu0 0
  %874 = vmatpush.bf16.msra.mxu0 0
  %875 = vmatpush.bf16.msra.mxu0 0
  %876 = vmatpush.bf16.msra.mxu0 0
  %877 = vmatpush.bf16.msra.mxu0 0
  %878 = vmatpush.bf16.msra.mxu0 0
  %879 = vmatpush.bf16.msra.mxu0 %v835
  %880 = vmatmul.bf16.gmra.mxu0 %v842
  %v881 = vpop.f32.mrf.mxu0
  %v882 = vadd.f32 %v810, %v881
  %v883 = vpop.f32.mrf.mxu0
  %v884 = vadd.f32 %v810, %v883
  %885 = vdwg.mxu0
  %886 = vmatpush.bf16.msra.mxu0 0
  %887 = vmatpush.bf16.msra.mxu0 0
  %888 = vmatpush.bf16.msra.mxu0 0
  %889 = vmatpush.bf16.msra.mxu0 0
  %890 = vmatpush.bf16.msra.mxu0 0
  %891 = vmatpush.bf16.msra.mxu0 0
  %892 = vmatpush.bf16.msra.mxu0 0
  %893 = vmatpush.bf16.msra.mxu0 %v836
  %894 = vmatmul.bf16.gmra.mxu0 %v842
  %v895 = vpop.f32.mrf.mxu0
  %v896 = vadd.f32 %v811, %v895
  %v897 = vpop.f32.mrf.mxu0
  %v898 = vadd.f32 %v811, %v897
  %899 = vdwg.mxu0
  %s900 = scalar_lea.vmem [#allocation2], 448
  %901 = vst [vmem:[%s900] sm:$0xff] %v854
  %902 = vst [vmem:[%s900 + $0x8] sm:$0xff] %v868
  %903 = vst [vmem:[%s900 + $0x10] sm:$0xff] %v882
  %904 = vst [vmem:[%s900 + $0x18] sm:$0xff] %v896
  %905 = vst [vmem:[%s900 + $0x20] sm:$0xff] %v856
  %906 = vst [vmem:[%s900 + $0x28] sm:$0xff] %v870
  %907 = vst [vmem:[%s900 + $0x30] sm:$0xff] %v884
  %908 = vst [vmem:[%s900 + $0x38] sm:$0xff] %v898
  %v909 = vld [vmem:[#allocation2] sm:$0xff]
  %v910 = vld [vmem:[#allocation2 + $0x8] sm:$0xff]
  %v911 = vld [vmem:[#allocation2 + $0x10] sm:$0xff]
  %v912 = vld [vmem:[#allocation2 + $0x18] sm:$0xff]
  %v913 = vld [vmem:[#allocation2 + $0x20] sm:$0xff]
  %v914 = vld [vmem:[#allocation2 + $0x28] sm:$0xff]
  %v915 = vld [vmem:[#allocation2 + $0x30] sm:$0xff]
  %v916 = vld [vmem:[#allocation2 + $0x38] sm:$0xff]
  %v917 = vld [vmem:[#allocation3] sm:$0xff]
  %v918 = vld [vmem:[#allocation3 + $0x8] sm:$0xff]
  %v919 = vpack.c.bf16 %v918, %v917
  %v920 = vld [vmem:[%s2] sm:$0xff]
  %v921 = vld [vmem:[%s2 + $0x8] sm:$0xff]
  %v922 = vld [vmem:[%s2 + $0x10] sm:$0xff]
  %v923 = vld [vmem:[%s2 + $0x18] sm:$0xff]
  %v924 = vld [vmem:[%s2 + $0x20] sm:$0xff]
  %v925 = vld [vmem:[%s2 + $0x28] sm:$0xff]
  %v926 = vld [vmem:[%s2 + $0x30] sm:$0xff]
  %v927 = vld [vmem:[%s2 + $0x38] sm:$0xff]
  %v928 = vld [vmem:[%s2 + $0x40] sm:$0xff]
  %v929 = vld [vmem:[%s2 + $0x48] sm:$0xff]
  %v930 = vld [vmem:[%s2 + $0x50] sm:$0xff]
  %v931 = vld [vmem:[%s2 + $0x58] sm:$0xff]
  %v932 = vld [vmem:[%s2 + $0x60] sm:$0xff]
  %v933 = vld [vmem:[%s2 + $0x68] sm:$0xff]
  %v934 = vld [vmem:[%s2 + $0x70] sm:$0xff]
  %v935 = vld [vmem:[%s2 + $0x78] sm:$0xff]
  %v936 = vld [vmem:[%s2 + $0x80] sm:$0xff]
  %v937 = vld [vmem:[%s2 + $0x88] sm:$0xff]
  %v938 = vld [vmem:[%s2 + $0x90] sm:$0xff]
  %v939 = vld [vmem:[%s2 + $0x98] sm:$0xff]
  %v940 = vld [vmem:[%s2 + $0xa0] sm:$0xff]
  %v941 = vld [vmem:[%s2 + $0xa8] sm:$0xff]
  %v942 = vld [vmem:[%s2 + $0xb0] sm:$0xff]
  %v943 = vld [vmem:[%s2 + $0xb8] sm:$0xff]
  %v944 = vld [vmem:[%s2 + $0xc0] sm:$0xff]
  %v945 = vld [vmem:[%s2 + $0xc8] sm:$0xff]
  %v946 = vld [vmem:[%s2 + $0xd0] sm:$0xff]
  %v947 = vld [vmem:[%s2 + $0xd8] sm:$0xff]
  %v948 = vld [vmem:[%s2 + $0xe0] sm:$0xff]
  %v949 = vld [vmem:[%s2 + $0xe8] sm:$0xff]
  %v950 = vld [vmem:[%s2 + $0xf0] sm:$0xff]
  %v951 = vld [vmem:[%s2 + $0xf8] sm:$0xff]
  %v984 = vunpack.c.l.b16 %v920
  %v985 = vunpack.c.h.b16 %v920
  %v986 = vunpack.c.l.b16 %v921
  %v987 = vunpack.c.h.b16 %v921
  %v988 = vunpack.c.l.b16 %v922
  %v989 = vunpack.c.h.b16 %v922
  %v990 = vunpack.c.l.b16 %v923
  %v991 = vunpack.c.h.b16 %v923
  %v992 = vunpack.c.l.b16 %v924
  %v993 = vunpack.c.h.b16 %v924
  %v994 = vunpack.c.l.b16 %v925
  %v995 = vunpack.c.h.b16 %v925
  %v996 = vunpack.c.l.b16 %v926
  %v997 = vunpack.c.h.b16 %v926
  %v998 = vunpack.c.l.b16 %v927
  %v999 = vunpack.c.h.b16 %v927
  %v1000 = vunpack.c.l.b16 %v928
  %v1001 = vunpack.c.h.b16 %v928
  %v1002 = vunpack.c.l.b16 %v929
  %v1003 = vunpack.c.h.b16 %v929
  %v1004 = vunpack.c.l.b16 %v930
  %v1005 = vunpack.c.h.b16 %v930
  %v1006 = vunpack.c.l.b16 %v931
  %v1007 = vunpack.c.h.b16 %v931
  %v1008 = vunpack.c.l.b16 %v932
  %v1009 = vunpack.c.h.b16 %v932
  %v1010 = vunpack.c.l.b16 %v933
  %v1011 = vunpack.c.h.b16 %v933
  %v1012 = vunpack.c.l.b16 %v934
  %v1013 = vunpack.c.h.b16 %v934
  %v1014 = vunpack.c.l.b16 %v935
  %v1015 = vunpack.c.h.b16 %v935
  %v1016 = vunpack.c.l.b16 %v936
  %v1017 = vunpack.c.h.b16 %v936
  %v1018 = vunpack.c.l.b16 %v937
  %v1019 = vunpack.c.h.b16 %v937
  %v1020 = vunpack.c.l.b16 %v938
  %v1021 = vunpack.c.h.b16 %v938
  %v1022 = vunpack.c.l.b16 %v939
  %v1023 = vunpack.c.h.b16 %v939
  %v1024 = vunpack.c.l.b16 %v940
  %v1025 = vunpack.c.h.b16 %v940
  %v1026 = vunpack.c.l.b16 %v941
  %v1027 = vunpack.c.h.b16 %v941
  %v1028 = vunpack.c.l.b16 %v942
  %v1029 = vunpack.c.h.b16 %v942
  %v1030 = vunpack.c.l.b16 %v943
  %v1031 = vunpack.c.h.b16 %v943
  %v1032 = vunpack.c.l.b16 %v944
  %v1033 = vunpack.c.h.b16 %v944
  %v1034 = vunpack.c.l.b16 %v945
  %v1035 = vunpack.c.h.b16 %v945
  %v1036 = vunpack.c.l.b16 %v946
  %v1037 = vunpack.c.h.b16 %v946
  %v1038 = vunpack.c.l.b16 %v947
  %v1039 = vunpack.c.h.b16 %v947
  %v1040 = vunpack.c.l.b16 %v948
  %v1041 = vunpack.c.h.b16 %v948
  %v1042 = vunpack.c.l.b16 %v949
  %v1043 = vunpack.c.h.b16 %v949
  %v1044 = vunpack.c.l.b16 %v950
  %v1045 = vunpack.c.h.b16 %v950
  %v1046 = vunpack.c.l.b16 %v951
  %v1047 = vunpack.c.h.b16 %v951
  %v1048 = vpack.c.b16 %v988, %v984
  %v1049 = vpack.c.b16 %v989, %v985
  %v1050 = vpack.c.b16 %v990, %v986
  %v1051 = vpack.c.b16 %v991, %v987
  %v1052 = vpack.c.b16 %v996, %v992
  %v1053 = vpack.c.b16 %v997, %v993
  %v1054 = vpack.c.b16 %v998, %v994
  %v1055 = vpack.c.b16 %v999, %v995
  %v1056 = vpack.c.b16 %v1004, %v1000
  %v1057 = vpack.c.b16 %v1005, %v1001
  %v1058 = vpack.c.b16 %v1006, %v1002
  %v1059 = vpack.c.b16 %v1007, %v1003
  %v1060 = vpack.c.b16 %v1012, %v1008
  %v1061 = vpack.c.b16 %v1013, %v1009
  %v1062 = vpack.c.b16 %v1014, %v1010
  %v1063 = vpack.c.b16 %v1015, %v1011
  %v1064 = vpack.c.b16 %v1020, %v1016
  %v1065 = vpack.c.b16 %v1021, %v1017
  %v1066 = vpack.c.b16 %v1022, %v1018
  %v1067 = vpack.c.b16 %v1023, %v1019
  %v1068 = vpack.c.b16 %v1028, %v1024
  %v1069 = vpack.c.b16 %v1029, %v1025
  %v1070 = vpack.c.b16 %v1030, %v1026
  %v1071 = vpack.c.b16 %v1031, %v1027
  %v1072 = vpack.c.b16 %v1036, %v1032
  %v1073 = vpack.c.b16 %v1037, %v1033
  %v1074 = vpack.c.b16 %v1038, %v1034
  %v1075 = vpack.c.b16 %v1039, %v1035
  %v1076 = vpack.c.b16 %v1044, %v1040
  %v1077 = vpack.c.b16 %v1045, %v1041
  %v1078 = vpack.c.b16 %v1046, %v1042
  %v1079 = vpack.c.b16 %v1047, %v1043
  %1112 = vmatpush.bf16.msra.mxu0 %v1076
  %1113 = vmatpush.bf16.msra.mxu0 %v1072
  %1114 = vmatpush.bf16.msra.mxu0 %v1068
  %1115 = vmatpush.bf16.msra.mxu0 %v1064
  %1116 = vmatpush.bf16.msra.mxu0 %v1060
  %1117 = vmatpush.bf16.msra.mxu0 %v1056
  %1118 = vmatpush.bf16.msra.mxu0 %v1052
  %1119 = vmatpush.bf16.msra.mxu0 %v1048
  %1120 = vmatmul.bf16.gmra.mxu0 %v919
  %v1121 = vpop.f32.mrf.mxu0
  %v1122 = vadd.f32 0.0, %v1121
  %v1123 = vpop.f32.mrf.mxu0
  %v1124 = vadd.f32 0.0, %v1123
  %1125 = vdwg.mxu0
  %1126 = vmatpush.bf16.msra.mxu0 %v1077
  %1127 = vmatpush.bf16.msra.mxu0 %v1073
  %1128 = vmatpush.bf16.msra.mxu0 %v1069
  %1129 = vmatpush.bf16.msra.mxu0 %v1065
  %1130 = vmatpush.bf16.msra.mxu0 %v1061
  %1131 = vmatpush.bf16.msra.mxu0 %v1057
  %1132 = vmatpush.bf16.msra.mxu0 %v1053
  %1133 = vmatpush.bf16.msra.mxu0 %v1049
  %1134 = vmatmul.bf16.gmra.mxu0 %v919
  %v1135 = vpop.f32.mrf.mxu0
  %v1136 = vadd.f32 0.0, %v1135
  %v1137 = vpop.f32.mrf.mxu0
  %v1138 = vadd.f32 0.0, %v1137
  %1139 = vdwg.mxu0
  %1140 = vmatpush.bf16.msra.mxu0 %v1078
  %1141 = vmatpush.bf16.msra.mxu0 %v1074
  %1142 = vmatpush.bf16.msra.mxu0 %v1070
  %1143 = vmatpush.bf16.msra.mxu0 %v1066
  %1144 = vmatpush.bf16.msra.mxu0 %v1062
  %1145 = vmatpush.bf16.msra.mxu0 %v1058
  %1146 = vmatpush.bf16.msra.mxu0 %v1054
  %1147 = vmatpush.bf16.msra.mxu0 %v1050
  %1148 = vmatmul.bf16.gmra.mxu0 %v919
  %v1149 = vpop.f32.mrf.mxu0
  %v1150 = vadd.f32 0.0, %v1149
  %v1151 = vpop.f32.mrf.mxu0
  %v1152 = vadd.f32 0.0, %v1151
  %1153 = vdwg.mxu0
  %1154 = vmatpush.bf16.msra.mxu0 %v1079
  %1155 = vmatpush.bf16.msra.mxu0 %v1075
  %1156 = vmatpush.bf16.msra.mxu0 %v1071
  %1157 = vmatpush.bf16.msra.mxu0 %v1067
  %1158 = vmatpush.bf16.msra.mxu0 %v1063
  %1159 = vmatpush.bf16.msra.mxu0 %v1059
  %1160 = vmatpush.bf16.msra.mxu0 %v1055
  %1161 = vmatpush.bf16.msra.mxu0 %v1051
  %1162 = vmatmul.bf16.gmra.mxu0 %v919
  %v1163 = vpop.f32.mrf.mxu0
  %v1164 = vadd.f32 0.0, %v1163
  %v1165 = vpop.f32.mrf.mxu0
  %v1166 = vadd.f32 0.0, %v1165
  %1167 = vdwg.mxu0
  %v1168 = vadd.f32 %v909, %v1122
  %v1169 = vadd.f32 %v910, %v1136
  %v1170 = vadd.f32 %v911, %v1150
  %v1171 = vadd.f32 %v912, %v1164
  %v1172 = vadd.f32 %v913, %v1124
  %v1173 = vadd.f32 %v914, %v1138
  %v1174 = vadd.f32 %v915, %v1152
  %v1175 = vadd.f32 %v916, %v1166
  %v1176 = vxor.u32 %v1168, 2147483648
  %v1177 = vxor.u32 %v1172, 2147483648
  %v1178 = vmul.f32 %v1176, 1.442695
  %v1179 = vpow.pop %v1178
  %v1180 = vmul.f32 %v1177, 1.442695
  %v1181 = vpow.pop %v1180
  %v1182 = vadd.f32 %v1179, 1.0
  %v1183 = vadd.f32 %v1181, 1.0
  %v1184 = vrcp.pop %v1182
  %v1185 = vmul.f32 %v1182, %v1184
  %v1186 = vsub.f32 1.0, %v1185
  %v1187 = vmul.f32 %v1184, %v1186
  %v1188 = vadd.f32 %v1184, %v1187
  %vm1189 = vweird.f32 %v1182
  %vm1190 = vweird.f32 %v1184
  %vm1191 = vmor %vm1189, %vm1190
  %v1192 = vsel %vm1191, %v1184, %v1188
  %v1193 = vand.u32 2147483647, %v1182
  %vm1194 = vcmp.eq.f32.partialorder %v1193, 8.507059e+37
  %v1195 = vand.u32 %v1182, 2147483648
  %v1196 = vor.u32 1.1754944e-38, %v1195
  %v1197 = vsel %vm1194, %v1196, %v1192
  %v1198 = vmul.f32 1.0, %v1197
  %v1199 = vrcp.pop %v1183
  %v1200 = vmul.f32 %v1183, %v1199
  %v1201 = vsub.f32 1.0, %v1200
  %v1202 = vmul.f32 %v1199, %v1201
  %v1203 = vadd.f32 %v1199, %v1202
  %vm1204 = vweird.f32 %v1183
  %vm1205 = vweird.f32 %v1199
  %vm1206 = vmor %vm1204, %vm1205
  %v1207 = vsel %vm1206, %v1199, %v1203
  %v1208 = vand.u32 2147483647, %v1183
  %vm1209 = vcmp.eq.f32.partialorder %v1208, 8.507059e+37
  %v1210 = vand.u32 %v1183, 2147483648
  %v1211 = vor.u32 1.1754944e-38, %v1210
  %v1212 = vsel %vm1209, %v1211, %v1207
  %v1213 = vmul.f32 1.0, %v1212
  %v1214 = vxor.u32 %v1169, 2147483648
  %v1215 = vxor.u32 %v1173, 2147483648
  %v1216 = vmul.f32 %v1214, 1.442695
  %v1217 = vpow.pop %v1216
  %v1218 = vmul.f32 %v1215, 1.442695
  %v1219 = vpow.pop %v1218
  %v1220 = vadd.f32 %v1217, 1.0
  %v1221 = vadd.f32 %v1219, 1.0
  %v1222 = vrcp.pop %v1220
  %v1223 = vmul.f32 %v1220, %v1222
  %v1224 = vsub.f32 1.0, %v1223
  %v1225 = vmul.f32 %v1222, %v1224
  %v1226 = vadd.f32 %v1222, %v1225
  %vm1227 = vweird.f32 %v1220
  %vm1228 = vweird.f32 %v1222
  %vm1229 = vmor %vm1227, %vm1228
  %v1230 = vsel %vm1229, %v1222, %v1226
  %v1231 = vand.u32 2147483647, %v1220
  %vm1232 = vcmp.eq.f32.partialorder %v1231, 8.507059e+37
  %v1233 = vand.u32 %v1220, 2147483648
  %v1234 = vor.u32 1.1754944e-38, %v1233
  %v1235 = vsel %vm1232, %v1234, %v1230
  %v1236 = vmul.f32 1.0, %v1235
  %v1237 = vrcp.pop %v1221
  %v1238 = vmul.f32 %v1221, %v1237
  %v1239 = vsub.f32 1.0, %v1238
  %v1240 = vmul.f32 %v1237, %v1239
  %v1241 = vadd.f32 %v1237, %v1240
  %vm1242 = vweird.f32 %v1221
  %vm1243 = vweird.f32 %v1237
  %vm1244 = vmor %vm1242, %vm1243
  %v1245 = vsel %vm1244, %v1237, %v1241
  %v1246 = vand.u32 2147483647, %v1221
  %vm1247 = vcmp.eq.f32.partialorder %v1246, 8.507059e+37
  %v1248 = vand.u32 %v1221, 2147483648
  %v1249 = vor.u32 1.1754944e-38, %v1248
  %v1250 = vsel %vm1247, %v1249, %v1245
  %v1251 = vmul.f32 1.0, %v1250
  %v1252 = vtanh.pop %v1170
  %v1253 = vtanh.pop %v1174
  %v1254 = vxor.u32 %v1171, 2147483648
  %v1255 = vxor.u32 %v1175, 2147483648
  %v1256 = vmul.f32 %v1254, 1.442695
  %v1257 = vpow.pop %v1256
  %v1258 = vmul.f32 %v1255, 1.442695
  %v1259 = vpow.pop %v1258
  %v1260 = vadd.f32 %v1257, 1.0
  %v1261 = vadd.f32 %v1259, 1.0
  %v1262 = vrcp.pop %v1260
  %v1263 = vmul.f32 %v1260, %v1262
  %v1264 = vsub.f32 1.0, %v1263
  %v1265 = vmul.f32 %v1262, %v1264
  %v1266 = vadd.f32 %v1262, %v1265
  %vm1267 = vweird.f32 %v1260
  %vm1268 = vweird.f32 %v1262
  %vm1269 = vmor %vm1267, %vm1268
  %v1270 = vsel %vm1269, %v1262, %v1266
  %v1271 = vand.u32 2147483647, %v1260
  %vm1272 = vcmp.eq.f32.partialorder %v1271, 8.507059e+37
  %v1273 = vand.u32 %v1260, 2147483648
  %v1274 = vor.u32 1.1754944e-38, %v1273
  %v1275 = vsel %vm1272, %v1274, %v1270
  %v1276 = vmul.f32 1.0, %v1275
  %v1277 = vrcp.pop %v1261
  %v1278 = vmul.f32 %v1261, %v1277
  %v1279 = vsub.f32 1.0, %v1278
  %v1280 = vmul.f32 %v1277, %v1279
  %v1281 = vadd.f32 %v1277, %v1280
  %vm1282 = vweird.f32 %v1261
  %vm1283 = vweird.f32 %v1277
  %vm1284 = vmor %vm1282, %vm1283
  %v1285 = vsel %vm1284, %v1277, %v1281
  %v1286 = vand.u32 2147483647, %v1261
  %vm1287 = vcmp.eq.f32.partialorder %v1286, 8.507059e+37
  %v1288 = vand.u32 %v1261, 2147483648
  %v1289 = vor.u32 1.1754944e-38, %v1288
  %v1290 = vsel %vm1287, %v1289, %v1285
  %v1291 = vmul.f32 1.0, %v1290
  %v1292 = vld [vmem:[#allocation4] sm:$0xff]
  %v1293 = vld [vmem:[#allocation4 + $0x8] sm:$0xff]
  %v1294 = vmul.f32 %v1236, %v1292
  %v1295 = vmul.f32 %v1251, %v1293
  %v1296 = vmul.f32 %v1198, %v1252
  %v1297 = vmul.f32 %v1213, %v1253
  %v1298 = vadd.f32 %v1294, %v1296
  %v1299 = vadd.f32 %v1295, %v1297
  %v1300 = vtanh.pop %v1298
  %v1301 = vtanh.pop %v1299
  %v1302 = vmul.f32 %v1276, %v1300
  %v1303 = vmul.f32 %v1291, %v1301
  %1304 = vst [vmem:[#allocation4] sm:$0xff] %v1298
  %1305 = vst [vmem:[#allocation4 + $0x8] sm:$0xff] %v1299
  %1306 = vst [vmem:[#allocation3] sm:$0xff] %v1302
  %1307 = vst [vmem:[#allocation3 + $0x8] sm:$0xff] %v1303
  %v1308 = vld [vmem:[#allocation5] sm:$0xff]
  %v1309 = vld [vmem:[#allocation5 + $0x8] sm:$0xff]
  %v1310 = vadd.f32 %v1308, %v1302
  %v1311 = vadd.f32 %v1309, %v1303
  %1312 = vst [vmem:[#allocation5] sm:$0xff] %v1310
  %1313 = vst [vmem:[#allocation5 + $0x8] sm:$0xff] %v1311
  %v1314 = vld [vmem:[#allocation6] sm:$0xff]
  %v1315 = vld [vmem:[#allocation6 + $0x8] sm:$0xff]
  %v1316 = vmax.f32 %v1314, %v1302
  %v1317 = vmax.f32 %v1315, %v1303
  %1318 = vst [vmem:[#allocation6] sm:$0xff] %v1316
  %1319 = vst [vmem:[#allocation6 + $0x8] sm:$0xff] %v1317
  %v1320 = vld [vmem:[%s240] sm:$0xff]
  %v1321 = vld [vmem:[%s240 + $0x8] sm:$0xff]
  %v1322 = vld [vmem:[%s240 + $0x10] sm:$0xff]
  %v1323 = vld [vmem:[%s240 + $0x18] sm:$0xff]
  %v1324 = vld [vmem:[%s240 + $0x20] sm:$0xff]
  %v1325 = vld [vmem:[%s240 + $0x28] sm:$0xff]
  %v1326 = vld [vmem:[%s240 + $0x30] sm:$0xff]
  %v1327 = vld [vmem:[%s240 + $0x38] sm:$0xff]
  %v1328 = vld [vmem:[#allocation3] sm:$0xff]
  %v1329 = vld [vmem:[#allocation3 + $0x8] sm:$0xff]
  %v1330 = vpack.c.bf16 %v1329, %v1328
  %v1331 = vld [vmem:[%s2] sm:$0xff]
  %v1332 = vld [vmem:[%s2 + $0x8] sm:$0xff]
  %v1333 = vld [vmem:[%s2 + $0x10] sm:$0xff]
  %v1334 = vld [vmem:[%s2 + $0x18] sm:$0xff]
  %v1335 = vld [vmem:[%s2 + $0x20] sm:$0xff]
  %v1336 = vld [vmem:[%s2 + $0x28] sm:$0xff]
  %v1337 = vld [vmem:[%s2 + $0x30] sm:$0xff]
  %v1338 = vld [vmem:[%s2 + $0x38] sm:$0xff]
  %v1339 = vld [vmem:[%s2 + $0x40] sm:$0xff]
  %v1340 = vld [vmem:[%s2 + $0x48] sm:$0xff]
  %v1341 = vld [vmem:[%s2 + $0x50] sm:$0xff]
  %v1342 = vld [vmem:[%s2 + $0x58] sm:$0xff]
  %v1343 = vld [vmem:[%s2 + $0x60] sm:$0xff]
  %v1344 = vld [vmem:[%s2 + $0x68] sm:$0xff]
  %v1345 = vld [vmem:[%s2 + $0x70] sm:$0xff]
  %v1346 = vld [vmem:[%s2 + $0x78] sm:$0xff]
  %v1347 = vld [vmem:[%s2 + $0x80] sm:$0xff]
  %v1348 = vld [vmem:[%s2 + $0x88] sm:$0xff]
  %v1349 = vld [vmem:[%s2 + $0x90] sm:$0xff]
  %v1350 = vld [vmem:[%s2 + $0x98] sm:$0xff]
  %v1351 = vld [vmem:[%s2 + $0xa0] sm:$0xff]
  %v1352 = vld [vmem:[%s2 + $0xa8] sm:$0xff]
  %v1353 = vld [vmem:[%s2 + $0xb0] sm:$0xff]
  %v1354 = vld [vmem:[%s2 + $0xb8] sm:$0xff]
  %v1355 = vld [vmem:[%s2 + $0xc0] sm:$0xff]
  %v1356 = vld [vmem:[%s2 + $0xc8] sm:$0xff]
  %v1357 = vld [vmem:[%s2 + $0xd0] sm:$0xff]
  %v1358 = vld [vmem:[%s2 + $0xd8] sm:$0xff]
  %v1359 = vld [vmem:[%s2 + $0xe0] sm:$0xff]
  %v1360 = vld [vmem:[%s2 + $0xe8] sm:$0xff]
  %v1361 = vld [vmem:[%s2 + $0xf0] sm:$0xff]
  %v1362 = vld [vmem:[%s2 + $0xf8] sm:$0xff]
  %v1395 = vunpack.c.l.b16 %v1331
  %v1396 = vunpack.c.h.b16 %v1331
  %v1397 = vunpack.c.l.b16 %v1332
  %v1398 = vunpack.c.h.b16 %v1332
  %v1399 = vunpack.c.l.b16 %v1333
  %v1400 = vunpack.c.h.b16 %v1333
  %v1401 = vunpack.c.l.b16 %v1334
  %v1402 = vunpack.c.h.b16 %v1334
  %v1403 = vunpack.c.l.b16 %v1335
  %v1404 = vunpack.c.h.b16 %v1335
  %v1405 = vunpack.c.l.b16 %v1336
  %v1406 = vunpack.c.h.b16 %v1336
  %v1407 = vunpack.c.l.b16 %v1337
  %v1408 = vunpack.c.h.b16 %v1337
  %v1409 = vunpack.c.l.b16 %v1338
  %v1410 = vunpack.c.h.b16 %v1338
  %v1411 = vunpack.c.l.b16 %v1339
  %v1412 = vunpack.c.h.b16 %v1339
  %v1413 = vunpack.c.l.b16 %v1340
  %v1414 = vunpack.c.h.b16 %v1340
  %v1415 = vunpack.c.l.b16 %v1341
  %v1416 = vunpack.c.h.b16 %v1341
  %v1417 = vunpack.c.l.b16 %v1342
  %v1418 = vunpack.c.h.b16 %v1342
  %v1419 = vunpack.c.l.b16 %v1343
  %v1420 = vunpack.c.h.b16 %v1343
  %v1421 = vunpack.c.l.b16 %v1344
  %v1422 = vunpack.c.h.b16 %v1344
  %v1423 = vunpack.c.l.b16 %v1345
  %v1424 = vunpack.c.h.b16 %v1345
  %v1425 = vunpack.c.l.b16 %v1346
  %v1426 = vunpack.c.h.b16 %v1346
  %v1427 = vunpack.c.l.b16 %v1347
  %v1428 = vunpack.c.h.b16 %v1347
  %v1429 = vunpack.c.l.b16 %v1348
  %v1430 = vunpack.c.h.b16 %v1348
  %v1431 = vunpack.c.l.b16 %v1349
  %v1432 = vunpack.c.h.b16 %v1349
  %v1433 = vunpack.c.l.b16 %v1350
  %v1434 = vunpack.c.h.b16 %v1350
  %v1435 = vunpack.c.l.b16 %v1351
  %v1436 = vunpack.c.h.b16 %v1351
  %v1437 = vunpack.c.l.b16 %v1352
  %v1438 = vunpack.c.h.b16 %v1352
  %v1439 = vunpack.c.l.b16 %v1353
  %v1440 = vunpack.c.h.b16 %v1353
  %v1441 = vunpack.c.l.b16 %v1354
  %v1442 = vunpack.c.h.b16 %v1354
  %v1443 = vunpack.c.l.b16 %v1355
  %v1444 = vunpack.c.h.b16 %v1355
  %v1445 = vunpack.c.l.b16 %v1356
  %v1446 = vunpack.c.h.b16 %v1356
  %v1447 = vunpack.c.l.b16 %v1357
  %v1448 = vunpack.c.h.b16 %v1357
  %v1449 = vunpack.c.l.b16 %v1358
  %v1450 = vunpack.c.h.b16 %v1358
  %v1451 = vunpack.c.l.b16 %v1359
  %v1452 = vunpack.c.h.b16 %v1359
  %v1453 = vunpack.c.l.b16 %v1360
  %v1454 = vunpack.c.h.b16 %v1360
  %v1455 = vunpack.c.l.b16 %v1361
  %v1456 = vunpack.c.h.b16 %v1361
  %v1457 = vunpack.c.l.b16 %v1362
  %v1458 = vunpack.c.h.b16 %v1362
  %v1459 = vpack.c.b16 %v1399, %v1395
  %v1460 = vpack.c.b16 %v1400, %v1396
  %v1461 = vpack.c.b16 %v1401, %v1397
  %v1462 = vpack.c.b16 %v1402, %v1398
  %v1463 = vpack.c.b16 %v1407, %v1403
  %v1464 = vpack.c.b16 %v1408, %v1404
  %v1465 = vpack.c.b16 %v1409, %v1405
  %v1466 = vpack.c.b16 %v1410, %v1406
  %v1467 = vpack.c.b16 %v1415, %v1411
  %v1468 = vpack.c.b16 %v1416, %v1412
  %v1469 = vpack.c.b16 %v1417, %v1413
  %v1470 = vpack.c.b16 %v1418, %v1414
  %v1471 = vpack.c.b16 %v1423, %v1419
  %v1472 = vpack.c.b16 %v1424, %v1420
  %v1473 = vpack.c.b16 %v1425, %v1421
  %v1474 = vpack.c.b16 %v1426, %v1422
  %v1475 = vpack.c.b16 %v1431, %v1427
  %v1476 = vpack.c.b16 %v1432, %v1428
  %v1477 = vpack.c.b16 %v1433, %v1429
  %v1478 = vpack.c.b16 %v1434, %v1430
  %v1479 = vpack.c.b16 %v1439, %v1435
  %v1480 = vpack.c.b16 %v1440, %v1436
  %v1481 = vpack.c.b16 %v1441, %v1437
  %v1482 = vpack.c.b16 %v1442, %v1438
  %v1483 = vpack.c.b16 %v1447, %v1443
  %v1484 = vpack.c.b16 %v1448, %v1444
  %v1485 = vpack.c.b16 %v1449, %v1445
  %v1486 = vpack.c.b16 %v1450, %v1446
  %v1487 = vpack.c.b16 %v1455, %v1451
  %v1488 = vpack.c.b16 %v1456, %v1452
  %v1489 = vpack.c.b16 %v1457, %v1453
  %v1490 = vpack.c.b16 %v1458, %v1454
  %1523 = vmatpush.bf16.msra.mxu0 %v1487
  %1524 = vmatpush.bf16.msra.mxu0 %v1483
  %1525 = vmatpush.bf16.msra.mxu0 %v1479
  %1526 = vmatpush.bf16.msra.mxu0 %v1475
  %1527 = vmatpush.bf16.msra.mxu0 %v1471
  %1528 = vmatpush.bf16.msra.mxu0 %v1467
  %1529 = vmatpush.bf16.msra.mxu0 %v1463
  %1530 = vmatpush.bf16.msra.mxu0 %v1459
  %1531 = vmatmul.bf16.gmra.mxu0 %v1330
  %v1532 = vpop.f32.mrf.mxu0
  %v1533 = vadd.f32 0.0, %v1532
  %v1534 = vpop.f32.mrf.mxu0
  %v1535 = vadd.f32 0.0, %v1534
  %1536 = vdwg.mxu0
  %1537 = vmatpush.bf16.msra.mxu0 %v1488
  %1538 = vmatpush.bf16.msra.mxu0 %v1484
  %1539 = vmatpush.bf16.msra.mxu0 %v1480
  %1540 = vmatpush.bf16.msra.mxu0 %v1476
  %1541 = vmatpush.bf16.msra.mxu0 %v1472
  %1542 = vmatpush.bf16.msra.mxu0 %v1468
  %1543 = vmatpush.bf16.msra.mxu0 %v1464
  %1544 = vmatpush.bf16.msra.mxu0 %v1460
  %1545 = vmatmul.bf16.gmra.mxu0 %v1330
  %v1546 = vpop.f32.mrf.mxu0
  %v1547 = vadd.f32 0.0, %v1546
  %v1548 = vpop.f32.mrf.mxu0
  %v1549 = vadd.f32 0.0, %v1548
  %1550 = vdwg.mxu0
  %1551 = vmatpush.bf16.msra.mxu0 %v1489
  %1552 = vmatpush.bf16.msra.mxu0 %v1485
  %1553 = vmatpush.bf16.msra.mxu0 %v1481
  %1554 = vmatpush.bf16.msra.mxu0 %v1477
  %1555 = vmatpush.bf16.msra.mxu0 %v1473
  %1556 = vmatpush.bf16.msra.mxu0 %v1469
  %1557 = vmatpush.bf16.msra.mxu0 %v1465
  %1558 = vmatpush.bf16.msra.mxu0 %v1461
  %1559 = vmatmul.bf16.gmra.mxu0 %v1330
  %v1560 = vpop.f32.mrf.mxu0
  %v1561 = vadd.f32 0.0, %v1560
  %v1562 = vpop.f32.mrf.mxu0
  %v1563 = vadd.f32 0.0, %v1562
  %1564 = vdwg.mxu0
  %1565 = vmatpush.bf16.msra.mxu0 %v1490
  %1566 = vmatpush.bf16.msra.mxu0 %v1486
  %1567 = vmatpush.bf16.msra.mxu0 %v1482
  %1568 = vmatpush.bf16.msra.mxu0 %v1478
  %1569 = vmatpush.bf16.msra.mxu0 %v1474
  %1570 = vmatpush.bf16.msra.mxu0 %v1470
  %1571 = vmatpush.bf16.msra.mxu0 %v1466
  %1572 = vmatpush.bf16.msra.mxu0 %v1462
  %1573 = vmatmul.bf16.gmra.mxu0 %v1330
  %v1574 = vpop.f32.mrf.mxu0
  %v1575 = vadd.f32 0.0, %v1574
  %v1576 = vpop.f32.mrf.mxu0
  %v1577 = vadd.f32 0.0, %v1576
  %1578 = vdwg.mxu0
  %v1579 = vadd.f32 %v1320, %v1533
  %v1580 = vadd.f32 %v1321, %v1547
  %v1581 = vadd.f32 %v1322, %v1561
  %v1582 = vadd.f32 %v1323, %v1575
  %v1583 = vadd.f32 %v1324, %v1535
  %v1584 = vadd.f32 %v1325, %v1549
  %v1585 = vadd.f32 %v1326, %v1563
  %v1586 = vadd.f32 %v1327, %v1577
  %v1587 = vxor.u32 %v1579, 2147483648
  %v1588 = vxor.u32 %v1583, 2147483648
  %v1589 = vmul.f32 %v1587, 1.442695
  %v1590 = vpow.pop %v1589
  %v1591 = vmul.f32 %v1588, 1.442695
  %v1592 = vpow.pop %v1591
  %v1593 = vadd.f32 %v1590, 1.0
  %v1594 = vadd.f32 %v1592, 1.0
  %v1595 = vrcp.pop %v1593
  %v1596 = vmul.f32 %v1593, %v1595
  %v1597 = vsub.f32 1.0, %v1596
  %v1598 = vmul.f32 %v1595, %v1597
  %v1599 = vadd.f32 %v1595, %v1598
  %vm1600 = vweird.f32 %v1593
  %vm1601 = vweird.f32 %v1595
  %vm1602 = vmor %vm1600, %vm1601
  %v1603 = vsel %vm1602, %v1595, %v1599
  %v1604 = vand.u32 2147483647, %v1593
  %vm1605 = vcmp.eq.f32.partialorder %v1604, 8.507059e+37
  %v1606 = vand.u32 %v1593, 2147483648
  %v1607 = vor.u32 1.1754944e-38, %v1606
  %v1608 = vsel %vm1605, %v1607, %v1603
  %v1609 = vmul.f32 1.0, %v1608
  %v1610 = vrcp.pop %v1594
  %v1611 = vmul.f32 %v1594, %v1610
  %v1612 = vsub.f32 1.0, %v1611
  %v1613 = vmul.f32 %v1610, %v1612
  %v1614 = vadd.f32 %v1610, %v1613
  %vm1615 = vweird.f32 %v1594
  %vm1616 = vweird.f32 %v1610
  %vm1617 = vmor %vm1615, %vm1616
  %v1618 = vsel %vm1617, %v1610, %v1614
  %v1619 = vand.u32 2147483647, %v1594
  %vm1620 = vcmp.eq.f32.partialorder %v1619, 8.507059e+37
  %v1621 = vand.u32 %v1594, 2147483648
  %v1622 = vor.u32 1.1754944e-38, %v1621
  %v1623 = vsel %vm1620, %v1622, %v1618
  %v1624 = vmul.f32 1.0, %v1623
  %v1625 = vxor.u32 %v1580, 2147483648
  %v1626 = vxor.u32 %v1584, 2147483648
  %v1627 = vmul.f32 %v1625, 1.442695
  %v1628 = vpow.pop %v1627
  %v1629 = vmul.f32 %v1626, 1.442695
  %v1630 = vpow.pop %v1629
  %v1631 = vadd.f32 %v1628, 1.0
  %v1632 = vadd.f32 %v1630, 1.0
  %v1633 = vrcp.pop %v1631
  %v1634 = vmul.f32 %v1631, %v1633
  %v1635 = vsub.f32 1.0, %v1634
  %v1636 = vmul.f32 %v1633, %v1635
  %v1637 = vadd.f32 %v1633, %v1636
  %vm1638 = vweird.f32 %v1631
  %vm1639 = vweird.f32 %v1633
  %vm1640 = vmor %vm1638, %vm1639
  %v1641 = vsel %vm1640, %v1633, %v1637
  %v1642 = vand.u32 2147483647, %v1631
  %vm1643 = vcmp.eq.f32.partialorder %v1642, 8.507059e+37
  %v1644 = vand.u32 %v1631, 2147483648
  %v1645 = vor.u32 1.1754944e-38, %v1644
  %v1646 = vsel %vm1643, %v1645, %v1641
  %v1647 = vmul.f32 1.0, %v1646
  %v1648 = vrcp.pop %v1632
  %v1649 = vmul.f32 %v1632, %v1648
  %v1650 = vsub.f32 1.0, %v1649
  %v1651 = vmul.f32 %v1648, %v1650
  %v1652 = vadd.f32 %v1648, %v1651
  %vm1653 = vweird.f32 %v1632
  %vm1654 = vweird.f32 %v1648
  %vm1655 = vmor %vm1653, %vm1654
  %v1656 = vsel %vm1655, %v1648, %v1652
  %v1657 = vand.u32 2147483647, %v1632
  %vm1658 = vcmp.eq.f32.partialorder %v1657, 8.507059e+37
  %v1659 = vand.u32 %v1632, 2147483648
  %v1660 = vor.u32 1.1754944e-38, %v1659
  %v1661 = vsel %vm1658, %v1660, %v1656
  %v1662 = vmul.f32 1.0, %v1661
  %v1663 = vtanh.pop %v1581
  %v1664 = vtanh.pop %v1585
  %v1665 = vxor.u32 %v1582, 2147483648
  %v1666 = vxor.u32 %v1586, 2147483648
  %v1667 = vmul.f32 %v1665, 1.442695
  %v1668 = vpow.pop %v1667
  %v1669 = vmul.f32 %v1666, 1.442695
  %v1670 = vpow.pop %v1669
  %v1671 = vadd.f32 %v1668, 1.0
  %v1672 = vadd.f32 %v1670, 1.0
  %v1673 = vrcp.pop %v1671
  %v1674 = vmul.f32 %v1671, %v1673
  %v1675 = vsub.f32 1.0, %v1674
  %v1676 = vmul.f32 %v1673, %v1675
  %v1677 = vadd.f32 %v1673, %v1676
  %vm1678 = vweird.f32 %v1671
  %vm1679 = vweird.f32 %v1673
  %vm1680 = vmor %vm1678, %vm1679
  %v1681 = vsel %vm1680, %v1673, %v1677
  %v1682 = vand.u32 2147483647, %v1671
  %vm1683 = vcmp.eq.f32.partialorder %v1682, 8.507059e+37
  %v1684 = vand.u32 %v1671, 2147483648
  %v1685 = vor.u32 1.1754944e-38, %v1684
  %v1686 = vsel %vm1683, %v1685, %v1681
  %v1687 = vmul.f32 1.0, %v1686
  %v1688 = vrcp.pop %v1672
  %v1689 = vmul.f32 %v1672, %v1688
  %v1690 = vsub.f32 1.0, %v1689
  %v1691 = vmul.f32 %v1688, %v1690
  %v1692 = vadd.f32 %v1688, %v1691
  %vm1693 = vweird.f32 %v1672
  %vm1694 = vweird.f32 %v1688
  %vm1695 = vmor %vm1693, %vm1694
  %v1696 = vsel %vm1695, %v1688, %v1692
  %v1697 = vand.u32 2147483647, %v1672
  %vm1698 = vcmp.eq.f32.partialorder %v1697, 8.507059e+37
  %v1699 = vand.u32 %v1672, 2147483648
  %v1700 = vor.u32 1.1754944e-38, %v1699
  %v1701 = vsel %vm1698, %v1700, %v1696
  %v1702 = vmul.f32 1.0, %v1701
  %v1703 = vld [vmem:[#allocation4] sm:$0xff]
  %v1704 = vld [vmem:[#allocation4 + $0x8] sm:$0xff]
  %v1705 = vmul.f32 %v1647, %v1703
  %v1706 = vmul.f32 %v1662, %v1704
  %v1707 = vmul.f32 %v1609, %v1663
  %v1708 = vmul.f32 %v1624, %v1664
  %v1709 = vadd.f32 %v1705, %v1707
  %v1710 = vadd.f32 %v1706, %v1708
  %v1711 = vtanh.pop %v1709
  %v1712 = vtanh.pop %v1710
  %v1713 = vmul.f32 %v1687, %v1711
  %v1714 = vmul.f32 %v1702, %v1712
  %1715 = vst [vmem:[#allocation4] sm:$0xff] %v1709
  %1716 = vst [vmem:[#allocation4 + $0x8] sm:$0xff] %v1710
  %1717 = vst [vmem:[#allocation3] sm:$0xff] %v1713
  %1718 = vst [vmem:[#allocation3 + $0x8] sm:$0xff] %v1714
  %v1719 = vld [vmem:[#allocation5] sm:$0xff]
  %v1720 = vld [vmem:[#allocation5 + $0x8] sm:$0xff]
  %v1721 = vadd.f32 %v1719, %v1713
  %v1722 = vadd.f32 %v1720, %v1714
  %1723 = vst [vmem:[#allocation5] sm:$0xff] %v1721
  %1724 = vst [vmem:[#allocation5 + $0x8] sm:$0xff] %v1722
  %v1725 = vld [vmem:[#allocation6] sm:$0xff]
  %v1726 = vld [vmem:[#allocation6 + $0x8] sm:$0xff]
  %v1727 = vmax.f32 %v1725, %v1713
  %v1728 = vmax.f32 %v1726, %v1714
  %1729 = vst [vmem:[#allocation6] sm:$0xff] %v1727
  %1730 = vst [vmem:[#allocation6 + $0x8] sm:$0xff] %v1728
  %v1731 = vld [vmem:[%s350] sm:$0xff]
  %v1732 = vld [vmem:[%s350 + $0x8] sm:$0xff]
  %v1733 = vld [vmem:[%s350 + $0x10] sm:$0xff]
  %v1734 = vld [vmem:[%s350 + $0x18] sm:$0xff]
  %v1735 = vld [vmem:[%s350 + $0x20] sm:$0xff]
  %v1736 = vld [vmem:[%s350 + $0x28] sm:$0xff]
  %v1737 = vld [vmem:[%s350 + $0x30] sm:$0xff]
  %v1738 = vld [vmem:[%s350 + $0x38] sm:$0xff]
  %v1739 = vld [vmem:[#allocation3] sm:$0xff]
  %v1740 = vld [vmem:[#allocation3 + $0x8] sm:$0xff]
  %v1741 = vpack.c.bf16 %v1740, %v1739
  %v1742 = vld [vmem:[%s2] sm:$0xff]
  %v1743 = vld [vmem:[%s2 + $0x8] sm:$0xff]
  %v1744 = vld [vmem:[%s2 + $0x10] sm:$0xff]
  %v1745 = vld [vmem:[%s2 + $0x18] sm:$0xff]
  %v1746 = vld [vmem:[%s2 + $0x20] sm:$0xff]
  %v1747 = vld [vmem:[%s2 + $0x28] sm:$0xff]
  %v1748 = vld [vmem:[%s2 + $0x30] sm:$0xff]
  %v1749 = vld [vmem:[%s2 + $0x38] sm:$0xff]
  %v1750 = vld [vmem:[%s2 + $0x40] sm:$0xff]
  %v1751 = vld [vmem:[%s2 + $0x48] sm:$0xff]
  %v1752 = vld [vmem:[%s2 + $0x50] sm:$0xff]
  %v1753 = vld [vmem:[%s2 + $0x58] sm:$0xff]
  %v1754 = vld [vmem:[%s2 + $0x60] sm:$0xff]
  %v1755 = vld [vmem:[%s2 + $0x68] sm:$0xff]
  %v1756 = vld [vmem:[%s2 + $0x70] sm:$0xff]
  %v1757 = vld [vmem:[%s2 + $0x78] sm:$0xff]
  %v1758 = vld [vmem:[%s2 + $0x80] sm:$0xff]
  %v1759 = vld [vmem:[%s2 + $0x88] sm:$0xff]
  %v1760 = vld [vmem:[%s2 + $0x90] sm:$0xff]
  %v1761 = vld [vmem:[%s2 + $0x98] sm:$0xff]
  %v1762 = vld [vmem:[%s2 + $0xa0] sm:$0xff]
  %v1763 = vld [vmem:[%s2 + $0xa8] sm:$0xff]
  %v1764 = vld [vmem:[%s2 + $0xb0] sm:$0xff]
  %v1765 = vld [vmem:[%s2 + $0xb8] sm:$0xff]
  %v1766 = vld [vmem:[%s2 + $0xc0] sm:$0xff]
  %v1767 = vld [vmem:[%s2 + $0xc8] sm:$0xff]
  %v1768 = vld [vmem:[%s2 + $0xd0] sm:$0xff]
  %v1769 = vld [vmem:[%s2 + $0xd8] sm:$0xff]
  %v1770 = vld [vmem:[%s2 + $0xe0] sm:$0xff]
  %v1771 = vld [vmem:[%s2 + $0xe8] sm:$0xff]
  %v1772 = vld [vmem:[%s2 + $0xf0] sm:$0xff]
  %v1773 = vld [vmem:[%s2 + $0xf8] sm:$0xff]
  %v1806 = vunpack.c.l.b16 %v1742
  %v1807 = vunpack.c.h.b16 %v1742
  %v1808 = vunpack.c.l.b16 %v1743
  %v1809 = vunpack.c.h.b16 %v1743
  %v1810 = vunpack.c.l.b16 %v1744
  %v1811 = vunpack.c.h.b16 %v1744
  %v1812 = vunpack.c.l.b16 %v1745
  %v1813 = vunpack.c.h.b16 %v1745
  %v1814 = vunpack.c.l.b16 %v1746
  %v1815 = vunpack.c.h.b16 %v1746
  %v1816 = vunpack.c.l.b16 %v1747
  %v1817 = vunpack.c.h.b16 %v1747
  %v1818 = vunpack.c.l.b16 %v1748
  %v1819 = vunpack.c.h.b16 %v1748
  %v1820 = vunpack.c.l.b16 %v1749
  %v1821 = vunpack.c.h.b16 %v1749
  %v1822 = vunpack.c.l.b16 %v1750
  %v1823 = vunpack.c.h.b16 %v1750
  %v1824 = vunpack.c.l.b16 %v1751
  %v1825 = vunpack.c.h.b16 %v1751
  %v1826 = vunpack.c.l.b16 %v1752
  %v1827 = vunpack.c.h.b16 %v1752
  %v1828 = vunpack.c.l.b16 %v1753
  %v1829 = vunpack.c.h.b16 %v1753
  %v1830 = vunpack.c.l.b16 %v1754
  %v1831 = vunpack.c.h.b16 %v1754
  %v1832 = vunpack.c.l.b16 %v1755
  %v1833 = vunpack.c.h.b16 %v1755
  %v1834 = vunpack.c.l.b16 %v1756
  %v1835 = vunpack.c.h.b16 %v1756
  %v1836 = vunpack.c.l.b16 %v1757
  %v1837 = vunpack.c.h.b16 %v1757
  %v1838 = vunpack.c.l.b16 %v1758
  %v1839 = vunpack.c.h.b16 %v1758
  %v1840 = vunpack.c.l.b16 %v1759
  %v1841 = vunpack.c.h.b16 %v1759
  %v1842 = vunpack.c.l.b16 %v1760
  %v1843 = vunpack.c.h.b16 %v1760
  %v1844 = vunpack.c.l.b16 %v1761
  %v1845 = vunpack.c.h.b16 %v1761
  %v1846 = vunpack.c.l.b16 %v1762
  %v1847 = vunpack.c.h.b16 %v1762
  %v1848 = vunpack.c.l.b16 %v1763
  %v1849 = vunpack.c.h.b16 %v1763
  %v1850 = vunpack.c.l.b16 %v1764
  %v1851 = vunpack.c.h.b16 %v1764
  %v1852 = vunpack.c.l.b16 %v1765
  %v1853 = vunpack.c.h.b16 %v1765
  %v1854 = vunpack.c.l.b16 %v1766
  %v1855 = vunpack.c.h.b16 %v1766
  %v1856 = vunpack.c.l.b16 %v1767
  %v1857 = vunpack.c.h.b16 %v1767
  %v1858 = vunpack.c.l.b16 %v1768
  %v1859 = vunpack.c.h.b16 %v1768
  %v1860 = vunpack.c.l.b16 %v1769
  %v1861 = vunpack.c.h.b16 %v1769
  %v1862 = vunpack.c.l.b16 %v1770
  %v1863 = vunpack.c.h.b16 %v1770
  %v1864 = vunpack.c.l.b16 %v1771
  %v1865 = vunpack.c.h.b16 %v1771
  %v1866 = vunpack.c.l.b16 %v1772
  %v1867 = vunpack.c.h.b16 %v1772
  %v1868 = vunpack.c.l.b16 %v1773
  %v1869 = vunpack.c.h.b16 %v1773
  %v1870 = vpack.c.b16 %v1810, %v1806
  %v1871 = vpack.c.b16 %v1811, %v1807
  %v1872 = vpack.c.b16 %v1812, %v1808
  %v1873 = vpack.c.b16 %v1813, %v1809
  %v1874 = vpack.c.b16 %v1818, %v1814
  %v1875 = vpack.c.b16 %v1819, %v1815
  %v1876 = vpack.c.b16 %v1820, %v1816
  %v1877 = vpack.c.b16 %v1821, %v1817
  %v1878 = vpack.c.b16 %v1826, %v1822
  %v1879 = vpack.c.b16 %v1827, %v1823
  %v1880 = vpack.c.b16 %v1828, %v1824
  %v1881 = vpack.c.b16 %v1829, %v1825
  %v1882 = vpack.c.b16 %v1834, %v1830
  %v1883 = vpack.c.b16 %v1835, %v1831
  %v1884 = vpack.c.b16 %v1836, %v1832
  %v1885 = vpack.c.b16 %v1837, %v1833
  %v1886 = vpack.c.b16 %v1842, %v1838
  %v1887 = vpack.c.b16 %v1843, %v1839
  %v1888 = vpack.c.b16 %v1844, %v1840
  %v1889 = vpack.c.b16 %v1845, %v1841
  %v1890 = vpack.c.b16 %v1850, %v1846
  %v1891 = vpack.c.b16 %v1851, %v1847
  %v1892 = vpack.c.b16 %v1852, %v1848
  %v1893 = vpack.c.b16 %v1853, %v1849
  %v1894 = vpack.c.b16 %v1858, %v1854
  %v1895 = vpack.c.b16 %v1859, %v1855
  %v1896 = vpack.c.b16 %v1860, %v1856
  %v1897 = vpack.c.b16 %v1861, %v1857
  %v1898 = vpack.c.b16 %v1866, %v1862
  %v1899 = vpack.c.b16 %v1867, %v1863
  %v1900 = vpack.c.b16 %v1868, %v1864
  %v1901 = vpack.c.b16 %v1869, %v1865
  %1934 = vmatpush.bf16.msra.mxu0 %v1898
  %1935 = vmatpush.bf16.msra.mxu0 %v1894
  %1936 = vmatpush.bf16.msra.mxu0 %v1890
  %1937 = vmatpush.bf16.msra.mxu0 %v1886
  %1938 = vmatpush.bf16.msra.mxu0 %v1882
  %1939 = vmatpush.bf16.msra.mxu0 %v1878
  %1940 = vmatpush.bf16.msra.mxu0 %v1874
  %1941 = vmatpush.bf16.msra.mxu0 %v1870
  %1942 = vmatmul.bf16.gmra.mxu0 %v1741
  %v1943 = vpop.f32.mrf.mxu0
  %v1944 = vadd.f32 0.0, %v1943
  %v1945 = vpop.f32.mrf.mxu0
  %v1946 = vadd.f32 0.0, %v1945
  %1947 = vdwg.mxu0
  %1948 = vmatpush.bf16.msra.mxu0 %v1899
  %1949 = vmatpush.bf16.msra.mxu0 %v1895
  %1950 = vmatpush.bf16.msra.mxu0 %v1891
  %1951 = vmatpush.bf16.msra.mxu0 %v1887
  %1952 = vmatpush.bf16.msra.mxu0 %v1883
  %1953 = vmatpush.bf16.msra.mxu0 %v1879
  %1954 = vmatpush.bf16.msra.mxu0 %v1875
  %1955 = vmatpush.bf16.msra.mxu0 %v1871
  %1956 = vmatmul.bf16.gmra.mxu0 %v1741
  %v1957 = vpop.f32.mrf.mxu0
  %v1958 = vadd.f32 0.0, %v1957
  %v1959 = vpop.f32.mrf.mxu0
  %v1960 = vadd.f32 0.0, %v1959
  %1961 = vdwg.mxu0
  %1962 = vmatpush.bf16.msra.mxu0 %v1900
  %1963 = vmatpush.bf16.msra.mxu0 %v1896
  %1964 = vmatpush.bf16.msra.mxu0 %v1892
  %1965 = vmatpush.bf16.msra.mxu0 %v1888
  %1966 = vmatpush.bf16.msra.mxu0 %v1884
  %1967 = vmatpush.bf16.msra.mxu0 %v1880
  %1968 = vmatpush.bf16.msra.mxu0 %v1876
  %1969 = vmatpush.bf16.msra.mxu0 %v1872
  %1970 = vmatmul.bf16.gmra.mxu0 %v1741
  %v1971 = vpop.f32.mrf.mxu0
  %v1972 = vadd.f32 0.0, %v1971
  %v1973 = vpop.f32.mrf.mxu0
  %v1974 = vadd.f32 0.0, %v1973
  %1975 = vdwg.mxu0
  %1976 = vmatpush.bf16.msra.mxu0 %v1901
  %1977 = vmatpush.bf16.msra.mxu0 %v1897
  %1978 = vmatpush.bf16.msra.mxu0 %v1893
  %1979 = vmatpush.bf16.msra.mxu0 %v1889
  %1980 = vmatpush.bf16.msra.mxu0 %v1885
  %1981 = vmatpush.bf16.msra.mxu0 %v1881
  %1982 = vmatpush.bf16.msra.mxu0 %v1877
  %1983 = vmatpush.bf16.msra.mxu0 %v1873
  %1984 = vmatmul.bf16.gmra.mxu0 %v1741
  %v1985 = vpop.f32.mrf.mxu0
  %v1986 = vadd.f32 0.0, %v1985
  %v1987 = vpop.f32.mrf.mxu0
  %v1988 = vadd.f32 0.0, %v1987
  %1989 = vdwg.mxu0
  %v1990 = vadd.f32 %v1731, %v1944
  %v1991 = vadd.f32 %v1732, %v1958
  %v1992 = vadd.f32 %v1733, %v1972
  %v1993 = vadd.f32 %v1734, %v1986
  %v1994 = vadd.f32 %v1735, %v1946
  %v1995 = vadd.f32 %v1736, %v1960
  %v1996 = vadd.f32 %v1737, %v1974
  %v1997 = vadd.f32 %v1738, %v1988
  %v1998 = vxor.u32 %v1990, 2147483648
  %v1999 = vxor.u32 %v1994, 2147483648
  %v2000 = vmul.f32 %v1998, 1.442695
  %v2001 = vpow.pop %v2000
  %v2002 = vmul.f32 %v1999, 1.442695
  %v2003 = vpow.pop %v2002
  %v2004 = vadd.f32 %v2001, 1.0
  %v2005 = vadd.f32 %v2003, 1.0
  %v2006 = vrcp.pop %v2004
  %v2007 = vmul.f32 %v2004, %v2006
  %v2008 = vsub.f32 1.0, %v2007
  %v2009 = vmul.f32 %v2006, %v2008
  %v2010 = vadd.f32 %v2006, %v2009
  %vm2011 = vweird.f32 %v2004
  %vm2012 = vweird.f32 %v2006
  %vm2013 = vmor %vm2011, %vm2012
  %v2014 = vsel %vm2013, %v2006, %v2010
  %v2015 = vand.u32 2147483647, %v2004
  %vm2016 = vcmp.eq.f32.partialorder %v2015, 8.507059e+37
  %v2017 = vand.u32 %v2004, 2147483648
  %v2018 = vor.u32 1.1754944e-38, %v2017
  %v2019 = vsel %vm2016, %v2018, %v2014
  %v2020 = vmul.f32 1.0, %v2019
  %v2021 = vrcp.pop %v2005
  %v2022 = vmul.f32 %v2005, %v2021
  %v2023 = vsub.f32 1.0, %v2022
  %v2024 = vmul.f32 %v2021, %v2023
  %v2025 = vadd.f32 %v2021, %v2024
  %vm2026 = vweird.f32 %v2005
  %vm2027 = vweird.f32 %v2021
  %vm2028 = vmor %vm2026, %vm2027
  %v2029 = vsel %vm2028, %v2021, %v2025
  %v2030 = vand.u32 2147483647, %v2005
  %vm2031 = vcmp.eq.f32.partialorder %v2030, 8.507059e+37
  %v2032 = vand.u32 %v2005, 2147483648
  %v2033 = vor.u32 1.1754944e-38, %v2032
  %v2034 = vsel %vm2031, %v2033, %v2029
  %v2035 = vmul.f32 1.0, %v2034
  %v2036 = vxor.u32 %v1991, 2147483648
  %v2037 = vxor.u32 %v1995, 2147483648
  %v2038 = vmul.f32 %v2036, 1.442695
  %v2039 = vpow.pop %v2038
  %v2040 = vmul.f32 %v2037, 1.442695
  %v2041 = vpow.pop %v2040
  %v2042 = vadd.f32 %v2039, 1.0
  %v2043 = vadd.f32 %v2041, 1.0
  %v2044 = vrcp.pop %v2042
  %v2045 = vmul.f32 %v2042, %v2044
  %v2046 = vsub.f32 1.0, %v2045
  %v2047 = vmul.f32 %v2044, %v2046
  %v2048 = vadd.f32 %v2044, %v2047
  %vm2049 = vweird.f32 %v2042
  %vm2050 = vweird.f32 %v2044
  %vm2051 = vmor %vm2049, %vm2050
  %v2052 = vsel %vm2051, %v2044, %v2048
  %v2053 = vand.u32 2147483647, %v2042
  %vm2054 = vcmp.eq.f32.partialorder %v2053, 8.507059e+37
  %v2055 = vand.u32 %v2042, 2147483648
  %v2056 = vor.u32 1.1754944e-38, %v2055
  %v2057 = vsel %vm2054, %v2056, %v2052
  %v2058 = vmul.f32 1.0, %v2057
  %v2059 = vrcp.pop %v2043
  %v2060 = vmul.f32 %v2043, %v2059
  %v2061 = vsub.f32 1.0, %v2060
  %v2062 = vmul.f32 %v2059, %v2061
  %v2063 = vadd.f32 %v2059, %v2062
  %vm2064 = vweird.f32 %v2043
  %vm2065 = vweird.f32 %v2059
  %vm2066 = vmor %vm2064, %vm2065
  %v2067 = vsel %vm2066, %v2059, %v2063
  %v2068 = vand.u32 2147483647, %v2043
  %vm2069 = vcmp.eq.f32.partialorder %v2068, 8.507059e+37
  %v2070 = vand.u32 %v2043, 2147483648
  %v2071 = vor.u32 1.1754944e-38, %v2070
  %v2072 = vsel %vm2069, %v2071, %v2067
  %v2073 = vmul.f32 1.0, %v2072
  %v2074 = vtanh.pop %v1992
  %v2075 = vtanh.pop %v1996
  %v2076 = vxor.u32 %v1993, 2147483648
  %v2077 = vxor.u32 %v1997, 2147483648
  %v2078 = vmul.f32 %v2076, 1.442695
  %v2079 = vpow.pop %v2078
  %v2080 = vmul.f32 %v2077, 1.442695
  %v2081 = vpow.pop %v2080
  %v2082 = vadd.f32 %v2079, 1.0
  %v2083 = vadd.f32 %v2081, 1.0
  %v2084 = vrcp.pop %v2082
  %v2085 = vmul.f32 %v2082, %v2084
  %v2086 = vsub.f32 1.0, %v2085
  %v2087 = vmul.f32 %v2084, %v2086
  %v2088 = vadd.f32 %v2084, %v2087
  %vm2089 = vweird.f32 %v2082
  %vm2090 = vweird.f32 %v2084
  %vm2091 = vmor %vm2089, %vm2090
  %v2092 = vsel %vm2091, %v2084, %v2088
  %v2093 = vand.u32 2147483647, %v2082
  %vm2094 = vcmp.eq.f32.partialorder %v2093, 8.507059e+37
  %v2095 = vand.u32 %v2082, 2147483648
  %v2096 = vor.u32 1.1754944e-38, %v2095
  %v2097 = vsel %vm2094, %v2096, %v2092
  %v2098 = vmul.f32 1.0, %v2097
  %v2099 = vrcp.pop %v2083
  %v2100 = vmul.f32 %v2083, %v2099
  %v2101 = vsub.f32 1.0, %v2100
  %v2102 = vmul.f32 %v2099, %v2101
  %v2103 = vadd.f32 %v2099, %v2102
  %vm2104 = vweird.f32 %v2083
  %vm2105 = vweird.f32 %v2099
  %vm2106 = vmor %vm2104, %vm2105
  %v2107 = vsel %vm2106, %v2099, %v2103
  %v2108 = vand.u32 2147483647, %v2083
  %vm2109 = vcmp.eq.f32.partialorder %v2108, 8.507059e+37
  %v2110 = vand.u32 %v2083, 2147483648
  %v2111 = vor.u32 1.1754944e-38, %v2110
  %v2112 = vsel %vm2109, %v2111, %v2107
  %v2113 = vmul.f32 1.0, %v2112
  %v2114 = vld [vmem:[#allocation4] sm:$0xff]
  %v2115 = vld [vmem:[#allocation4 + $0x8] sm:$0xff]
  %v2116 = vmul.f32 %v2058, %v2114
  %v2117 = vmul.f32 %v2073, %v2115
  %v2118 = vmul.f32 %v2020, %v2074
  %v2119 = vmul.f32 %v2035, %v2075
  %v2120 = vadd.f32 %v2116, %v2118
  %v2121 = vadd.f32 %v2117, %v2119
  %v2122 = vtanh.pop %v2120
  %v2123 = vtanh.pop %v2121
  %v2124 = vmul.f32 %v2098, %v2122
  %v2125 = vmul.f32 %v2113, %v2123
  %2126 = vst [vmem:[#allocation4] sm:$0xff] %v2120
  %2127 = vst [vmem:[#allocation4 + $0x8] sm:$0xff] %v2121
  %2128 = vst [vmem:[#allocation3] sm:$0xff] %v2124
  %2129 = vst [vmem:[#allocation3 + $0x8] sm:$0xff] %v2125
  %v2130 = vld [vmem:[#allocation5] sm:$0xff]
  %v2131 = vld [vmem:[#allocation5 + $0x8] sm:$0xff]
  %v2132 = vadd.f32 %v2130, %v2124
  %v2133 = vadd.f32 %v2131, %v2125
  %2134 = vst [vmem:[#allocation5] sm:$0xff] %v2132
  %2135 = vst [vmem:[#allocation5 + $0x8] sm:$0xff] %v2133
  %v2136 = vld [vmem:[#allocation6] sm:$0xff]
  %v2137 = vld [vmem:[#allocation6 + $0x8] sm:$0xff]
  %v2138 = vmax.f32 %v2136, %v2124
  %v2139 = vmax.f32 %v2137, %v2125
  %2140 = vst [vmem:[#allocation6] sm:$0xff] %v2138
  %2141 = vst [vmem:[#allocation6 + $0x8] sm:$0xff] %v2139
  %v2142 = vld [vmem:[%s460] sm:$0xff]
  %v2143 = vld [vmem:[%s460 + $0x8] sm:$0xff]
  %v2144 = vld [vmem:[%s460 + $0x10] sm:$0xff]
  %v2145 = vld [vmem:[%s460 + $0x18] sm:$0xff]
  %v2146 = vld [vmem:[%s460 + $0x20] sm:$0xff]
  %v2147 = vld [vmem:[%s460 + $0x28] sm:$0xff]
  %v2148 = vld [vmem:[%s460 + $0x30] sm:$0xff]
  %v2149 = vld [vmem:[%s460 + $0x38] sm:$0xff]
  %v2150 = vld [vmem:[#allocation3] sm:$0xff]
  %v2151 = vld [vmem:[#allocation3 + $0x8] sm:$0xff]
  %v2152 = vpack.c.bf16 %v2151, %v2150
  %v2153 = vld [vmem:[%s2] sm:$0xff]
  %v2154 = vld [vmem:[%s2 + $0x8] sm:$0xff]
  %v2155 = vld [vmem:[%s2 + $0x10] sm:$0xff]
  %v2156 = vld [vmem:[%s2 + $0x18] sm:$0xff]
  %v2157 = vld [vmem:[%s2 + $0x20] sm:$0xff]
  %v2158 = vld [vmem:[%s2 + $0x28] sm:$0xff]
  %v2159 = vld [vmem:[%s2 + $0x30] sm:$0xff]
  %v2160 = vld [vmem:[%s2 + $0x38] sm:$0xff]
  %v2161 = vld [vmem:[%s2 + $0x40] sm:$0xff]
  %v2162 = vld [vmem:[%s2 + $0x48] sm:$0xff]
  %v2163 = vld [vmem:[%s2 + $0x50] sm:$0xff]
  %v2164 = vld [vmem:[%s2 + $0x58] sm:$0xff]
  %v2165 = vld [vmem:[%s2 + $0x60] sm:$0xff]
  %v2166 = vld [vmem:[%s2 + $0x68] sm:$0xff]
  %v2167 = vld [vmem:[%s2 + $0x70] sm:$0xff]
  %v2168 = vld [vmem:[%s2 + $0x78] sm:$0xff]
  %v2169 = vld [vmem:[%s2 + $0x80] sm:$0xff]
  %v2170 = vld [vmem:[%s2 + $0x88] sm:$0xff]
  %v2171 = vld [vmem:[%s2 + $0x90] sm:$0xff]
  %v2172 = vld [vmem:[%s2 + $0x98] sm:$0xff]
  %v2173 = vld [vmem:[%s2 + $0xa0] sm:$0xff]
  %v2174 = vld [vmem:[%s2 + $0xa8] sm:$0xff]
  %v2175 = vld [vmem:[%s2 + $0xb0] sm:$0xff]
  %v2176 = vld [vmem:[%s2 + $0xb8] sm:$0xff]
  %v2177 = vld [vmem:[%s2 + $0xc0] sm:$0xff]
  %v2178 = vld [vmem:[%s2 + $0xc8] sm:$0xff]
  %v2179 = vld [vmem:[%s2 + $0xd0] sm:$0xff]
  %v2180 = vld [vmem:[%s2 + $0xd8] sm:$0xff]
  %v2181 = vld [vmem:[%s2 + $0xe0] sm:$0xff]
  %v2182 = vld [vmem:[%s2 + $0xe8] sm:$0xff]
  %v2183 = vld [vmem:[%s2 + $0xf0] sm:$0xff]
  %v2184 = vld [vmem:[%s2 + $0xf8] sm:$0xff]
  %v2217 = vunpack.c.l.b16 %v2153
  %v2218 = vunpack.c.h.b16 %v2153
  %v2219 = vunpack.c.l.b16 %v2154
  %v2220 = vunpack.c.h.b16 %v2154
  %v2221 = vunpack.c.l.b16 %v2155
  %v2222 = vunpack.c.h.b16 %v2155
  %v2223 = vunpack.c.l.b16 %v2156
  %v2224 = vunpack.c.h.b16 %v2156
  %v2225 = vunpack.c.l.b16 %v2157
  %v2226 = vunpack.c.h.b16 %v2157
  %v2227 = vunpack.c.l.b16 %v2158
  %v2228 = vunpack.c.h.b16 %v2158
  %v2229 = vunpack.c.l.b16 %v2159
  %v2230 = vunpack.c.h.b16 %v2159
  %v2231 = vunpack.c.l.b16 %v2160
  %v2232 = vunpack.c.h.b16 %v2160
  %v2233 = vunpack.c.l.b16 %v2161
  %v2234 = vunpack.c.h.b16 %v2161
  %v2235 = vunpack.c.l.b16 %v2162
  %v2236 = vunpack.c.h.b16 %v2162
  %v2237 = vunpack.c.l.b16 %v2163
  %v2238 = vunpack.c.h.b16 %v2163
  %v2239 = vunpack.c.l.b16 %v2164
  %v2240 = vunpack.c.h.b16 %v2164
  %v2241 = vunpack.c.l.b16 %v2165
  %v2242 = vunpack.c.h.b16 %v2165
  %v2243 = vunpack.c.l.b16 %v2166
  %v2244 = vunpack.c.h.b16 %v2166
  %v2245 = vunpack.c.l.b16 %v2167
  %v2246 = vunpack.c.h.b16 %v2167
  %v2247 = vunpack.c.l.b16 %v2168
  %v2248 = vunpack.c.h.b16 %v2168
  %v2249 = vunpack.c.l.b16 %v2169
  %v2250 = vunpack.c.h.b16 %v2169
  %v2251 = vunpack.c.l.b16 %v2170
  %v2252 = vunpack.c.h.b16 %v2170
  %v2253 = vunpack.c.l.b16 %v2171
  %v2254 = vunpack.c.h.b16 %v2171
  %v2255 = vunpack.c.l.b16 %v2172
  %v2256 = vunpack.c.h.b16 %v2172
  %v2257 = vunpack.c.l.b16 %v2173
  %v2258 = vunpack.c.h.b16 %v2173
  %v2259 = vunpack.c.l.b16 %v2174
  %v2260 = vunpack.c.h.b16 %v2174
  %v2261 = vunpack.c.l.b16 %v2175
  %v2262 = vunpack.c.h.b16 %v2175
  %v2263 = vunpack.c.l.b16 %v2176
  %v2264 = vunpack.c.h.b16 %v2176
  %v2265 = vunpack.c.l.b16 %v2177
  %v2266 = vunpack.c.h.b16 %v2177
  %v2267 = vunpack.c.l.b16 %v2178
  %v2268 = vunpack.c.h.b16 %v2178
  %v2269 = vunpack.c.l.b16 %v2179
  %v2270 = vunpack.c.h.b16 %v2179
  %v2271 = vunpack.c.l.b16 %v2180
  %v2272 = vunpack.c.h.b16 %v2180
  %v2273 = vunpack.c.l.b16 %v2181
  %v2274 = vunpack.c.h.b16 %v2181
  %v2275 = vunpack.c.l.b16 %v2182
  %v2276 = vunpack.c.h.b16 %v2182
  %v2277 = vunpack.c.l.b16 %v2183
  %v2278 = vunpack.c.h.b16 %v2183
  %v2279 = vunpack.c.l.b16 %v2184
  %v2280 = vunpack.c.h.b16 %v2184
  %v2281 = vpack.c.b16 %v2221, %v2217
  %v2282 = vpack.c.b16 %v2222, %v2218
  %v2283 = vpack.c.b16 %v2223, %v2219
  %v2284 = vpack.c.b16 %v2224, %v2220
  %v2285 = vpack.c.b16 %v2229, %v2225
  %v2286 = vpack.c.b16 %v2230, %v2226
  %v2287 = vpack.c.b16 %v2231, %v2227
  %v2288 = vpack.c.b16 %v2232, %v2228
  %v2289 = vpack.c.b16 %v2237, %v2233
  %v2290 = vpack.c.b16 %v2238, %v2234
  %v2291 = vpack.c.b16 %v2239, %v2235
  %v2292 = vpack.c.b16 %v2240, %v2236
  %v2293 = vpack.c.b16 %v2245, %v2241
  %v2294 = vpack.c.b16 %v2246, %v2242
  %v2295 = vpack.c.b16 %v2247, %v2243
  %v2296 = vpack.c.b16 %v2248, %v2244
  %v2297 = vpack.c.b16 %v2253, %v2249
  %v2298 = vpack.c.b16 %v2254, %v2250
  %v2299 = vpack.c.b16 %v2255, %v2251
  %v2300 = vpack.c.b16 %v2256, %v2252
  %v2301 = vpack.c.b16 %v2261, %v2257
  %v2302 = vpack.c.b16 %v2262, %v2258
  %v2303 = vpack.c.b16 %v2263, %v2259
  %v2304 = vpack.c.b16 %v2264, %v2260
  %v2305 = vpack.c.b16 %v2269, %v2265
  %v2306 = vpack.c.b16 %v2270, %v2266
  %v2307 = vpack.c.b16 %v2271, %v2267
  %v2308 = vpack.c.b16 %v2272, %v2268
  %v2309 = vpack.c.b16 %v2277, %v2273
  %v2310 = vpack.c.b16 %v2278, %v2274
  %v2311 = vpack.c.b16 %v2279, %v2275
  %v2312 = vpack.c.b16 %v2280, %v2276
  %2345 = vmatpush.bf16.msra.mxu0 %v2309
  %2346 = vmatpush.bf16.msra.mxu0 %v2305
  %2347 = vmatpush.bf16.msra.mxu0 %v2301
  %2348 = vmatpush.bf16.msra.mxu0 %v2297
  %2349 = vmatpush.bf16.msra.mxu0 %v2293
  %2350 = vmatpush.bf16.msra.mxu0 %v2289
  %2351 = vmatpush.bf16.msra.mxu0 %v2285
  %2352 = vmatpush.bf16.msra.mxu0 %v2281
  %2353 = vmatmul.bf16.gmra.mxu0 %v2152
  %v2354 = vpop.f32.mrf.mxu0
  %v2355 = vadd.f32 0.0, %v2354
  %v2356 = vpop.f32.mrf.mxu0
  %v2357 = vadd.f32 0.0, %v2356
  %2358 = vdwg.mxu0
  %2359 = vmatpush.bf16.msra.mxu0 %v2310
  %2360 = vmatpush.bf16.msra.mxu0 %v2306
  %2361 = vmatpush.bf16.msra.mxu0 %v2302
  %2362 = vmatpush.bf16.msra.mxu0 %v2298
  %2363 = vmatpush.bf16.msra.mxu0 %v2294
  %2364 = vmatpush.bf16.msra.mxu0 %v2290
  %2365 = vmatpush.bf16.msra.mxu0 %v2286
  %2366 = vmatpush.bf16.msra.mxu0 %v2282
  %2367 = vmatmul.bf16.gmra.mxu0 %v2152
  %v2368 = vpop.f32.mrf.mxu0
  %v2369 = vadd.f32 0.0, %v2368
  %v2370 = vpop.f32.mrf.mxu0
  %v2371 = vadd.f32 0.0, %v2370
  %2372 = vdwg.mxu0
  %2373 = vmatpush.bf16.msra.mxu0 %v2311
  %2374 = vmatpush.bf16.msra.mxu0 %v2307
  %2375 = vmatpush.bf16.msra.mxu0 %v2303
  %2376 = vmatpush.bf16.msra.mxu0 %v2299
  %2377 = vmatpush.bf16.msra.mxu0 %v2295
  %2378 = vmatpush.bf16.msra.mxu0 %v2291
  %2379 = vmatpush.bf16.msra.mxu0 %v2287
  %2380 = vmatpush.bf16.msra.mxu0 %v2283
  %2381 = vmatmul.bf16.gmra.mxu0 %v2152
  %v2382 = vpop.f32.mrf.mxu0
  %v2383 = vadd.f32 0.0, %v2382
  %v2384 = vpop.f32.mrf.mxu0
  %v2385 = vadd.f32 0.0, %v2384
  %2386 = vdwg.mxu0
  %2387 = vmatpush.bf16.msra.mxu0 %v2312
  %2388 = vmatpush.bf16.msra.mxu0 %v2308
  %2389 = vmatpush.bf16.msra.mxu0 %v2304
  %2390 = vmatpush.bf16.msra.mxu0 %v2300
  %2391 = vmatpush.bf16.msra.mxu0 %v2296
  %2392 = vmatpush.bf16.msra.mxu0 %v2292
  %2393 = vmatpush.bf16.msra.mxu0 %v2288
  %2394 = vmatpush.bf16.msra.mxu0 %v2284
  %2395 = vmatmul.bf16.gmra.mxu0 %v2152
  %v2396 = vpop.f32.mrf.mxu0
  %v2397 = vadd.f32 0.0, %v2396
  %v2398 = vpop.f32.mrf.mxu0
  %v2399 = vadd.f32 0.0, %v2398
  %2400 = vdwg.mxu0
  %v2401 = vadd.f32 %v2142, %v2355
  %v2402 = vadd.f32 %v2143, %v2369
  %v2403 = vadd.f32 %v2144, %v2383
  %v2404 = vadd.f32 %v2145, %v2397
  %v2405 = vadd.f32 %v2146, %v2357
  %v2406 = vadd.f32 %v2147, %v2371
  %v2407 = vadd.f32 %v2148, %v2385
  %v2408 = vadd.f32 %v2149, %v2399
  %v2409 = vxor.u32 %v2401, 2147483648
  %v2410 = vxor.u32 %v2405, 2147483648
  %v2411 = vmul.f32 %v2409, 1.442695
  %v2412 = vpow.pop %v2411
  %v2413 = vmul.f32 %v2410, 1.442695
  %v2414 = vpow.pop %v2413
  %v2415 = vadd.f32 %v2412, 1.0
  %v2416 = vadd.f32 %v2414, 1.0
  %v2417 = vrcp.pop %v2415
  %v2418 = vmul.f32 %v2415, %v2417
  %v2419 = vsub.f32 1.0, %v2418
  %v2420 = vmul.f32 %v2417, %v2419
  %v2421 = vadd.f32 %v2417, %v2420
  %vm2422 = vweird.f32 %v2415
  %vm2423 = vweird.f32 %v2417
  %vm2424 = vmor %vm2422, %vm2423
  %v2425 = vsel %vm2424, %v2417, %v2421
  %v2426 = vand.u32 2147483647, %v2415
  %vm2427 = vcmp.eq.f32.partialorder %v2426, 8.507059e+37
  %v2428 = vand.u32 %v2415, 2147483648
  %v2429 = vor.u32 1.1754944e-38, %v2428
  %v2430 = vsel %vm2427, %v2429, %v2425
  %v2431 = vmul.f32 1.0, %v2430
  %v2432 = vrcp.pop %v2416
  %v2433 = vmul.f32 %v2416, %v2432
  %v2434 = vsub.f32 1.0, %v2433
  %v2435 = vmul.f32 %v2432, %v2434
  %v2436 = vadd.f32 %v2432, %v2435
  %vm2437 = vweird.f32 %v2416
  %vm2438 = vweird.f32 %v2432
  %vm2439 = vmor %vm2437, %vm2438
  %v2440 = vsel %vm2439, %v2432, %v2436
  %v2441 = vand.u32 2147483647, %v2416
  %vm2442 = vcmp.eq.f32.partialorder %v2441, 8.507059e+37
  %v2443 = vand.u32 %v2416, 2147483648
  %v2444 = vor.u32 1.1754944e-38, %v2443
  %v2445 = vsel %vm2442, %v2444, %v2440
  %v2446 = vmul.f32 1.0, %v2445
  %v2447 = vxor.u32 %v2402, 2147483648
  %v2448 = vxor.u32 %v2406, 2147483648
  %v2449 = vmul.f32 %v2447, 1.442695
  %v2450 = vpow.pop %v2449
  %v2451 = vmul.f32 %v2448, 1.442695
  %v2452 = vpow.pop %v2451
  %v2453 = vadd.f32 %v2450, 1.0
  %v2454 = vadd.f32 %v2452, 1.0
  %v2455 = vrcp.pop %v2453
  %v2456 = vmul.f32 %v2453, %v2455
  %v2457 = vsub.f32 1.0, %v2456
  %v2458 = vmul.f32 %v2455, %v2457
  %v2459 = vadd.f32 %v2455, %v2458
  %vm2460 = vweird.f32 %v2453
  %vm2461 = vweird.f32 %v2455
  %vm2462 = vmor %vm2460, %vm2461
  %v2463 = vsel %vm2462, %v2455, %v2459
  %v2464 = vand.u32 2147483647, %v2453
  %vm2465 = vcmp.eq.f32.partialorder %v2464, 8.507059e+37
  %v2466 = vand.u32 %v2453, 2147483648
  %v2467 = vor.u32 1.1754944e-38, %v2466
  %v2468 = vsel %vm2465, %v2467, %v2463
  %v2469 = vmul.f32 1.0, %v2468
  %v2470 = vrcp.pop %v2454
  %v2471 = vmul.f32 %v2454, %v2470
  %v2472 = vsub.f32 1.0, %v2471
  %v2473 = vmul.f32 %v2470, %v2472
  %v2474 = vadd.f32 %v2470, %v2473
  %vm2475 = vweird.f32 %v2454
  %vm2476 = vweird.f32 %v2470
  %vm2477 = vmor %vm2475, %vm2476
  %v2478 = vsel %vm2477, %v2470, %v2474
  %v2479 = vand.u32 2147483647, %v2454
  %vm2480 = vcmp.eq.f32.partialorder %v2479, 8.507059e+37
  %v2481 = vand.u32 %v2454, 2147483648
  %v2482 = vor.u32 1.1754944e-38, %v2481
  %v2483 = vsel %vm2480, %v2482, %v2478
  %v2484 = vmul.f32 1.0, %v2483
  %v2485 = vtanh.pop %v2403
  %v2486 = vtanh.pop %v2407
  %v2487 = vxor.u32 %v2404, 2147483648
  %v2488 = vxor.u32 %v2408, 2147483648
  %v2489 = vmul.f32 %v2487, 1.442695
  %v2490 = vpow.pop %v2489
  %v2491 = vmul.f32 %v2488, 1.442695
  %v2492 = vpow.pop %v2491
  %v2493 = vadd.f32 %v2490, 1.0
  %v2494 = vadd.f32 %v2492, 1.0
  %v2495 = vrcp.pop %v2493
  %v2496 = vmul.f32 %v2493, %v2495
  %v2497 = vsub.f32 1.0, %v2496
  %v2498 = vmul.f32 %v2495, %v2497
  %v2499 = vadd.f32 %v2495, %v2498
  %vm2500 = vweird.f32 %v2493
  %vm2501 = vweird.f32 %v2495
  %vm2502 = vmor %vm2500, %vm2501
  %v2503 = vsel %vm2502, %v2495, %v2499
  %v2504 = vand.u32 2147483647, %v2493
  %vm2505 = vcmp.eq.f32.partialorder %v2504, 8.507059e+37
  %v2506 = vand.u32 %v2493, 2147483648
  %v2507 = vor.u32 1.1754944e-38, %v2506
  %v2508 = vsel %vm2505, %v2507, %v2503
  %v2509 = vmul.f32 1.0, %v2508
  %v2510 = vrcp.pop %v2494
  %v2511 = vmul.f32 %v2494, %v2510
  %v2512 = vsub.f32 1.0, %v2511
  %v2513 = vmul.f32 %v2510, %v2512
  %v2514 = vadd.f32 %v2510, %v2513
  %vm2515 = vweird.f32 %v2494
  %vm2516 = vweird.f32 %v2510
  %vm2517 = vmor %vm2515, %vm2516
  %v2518 = vsel %vm2517, %v2510, %v2514
  %v2519 = vand.u32 2147483647, %v2494
  %vm2520 = vcmp.eq.f32.partialorder %v2519, 8.507059e+37
  %v2521 = vand.u32 %v2494, 2147483648
  %v2522 = vor.u32 1.1754944e-38, %v2521
  %v2523 = vsel %vm2520, %v2522, %v2518
  %v2524 = vmul.f32 1.0, %v2523
  %v2525 = vld [vmem:[#allocation4] sm:$0xff]
  %v2526 = vld [vmem:[#allocation4 + $0x8] sm:$0xff]
  %v2527 = vmul.f32 %v2469, %v2525
  %v2528 = vmul.f32 %v2484, %v2526
  %v2529 = vmul.f32 %v2431, %v2485
  %v2530 = vmul.f32 %v2446, %v2486
  %v2531 = vadd.f32 %v2527, %v2529
  %v2532 = vadd.f32 %v2528, %v2530
  %v2533 = vtanh.pop %v2531
  %v2534 = vtanh.pop %v2532
  %v2535 = vmul.f32 %v2509, %v2533
  %v2536 = vmul.f32 %v2524, %v2534
  %2537 = vst [vmem:[#allocation4] sm:$0xff] %v2531
  %2538 = vst [vmem:[#allocation4 + $0x8] sm:$0xff] %v2532
  %2539 = vst [vmem:[#allocation3] sm:$0xff] %v2535
  %2540 = vst [vmem:[#allocation3 + $0x8] sm:$0xff] %v2536
  %v2541 = vld [vmem:[#allocation5] sm:$0xff]
  %v2542 = vld [vmem:[#allocation5 + $0x8] sm:$0xff]
  %v2543 = vadd.f32 %v2541, %v2535
  %v2544 = vadd.f32 %v2542, %v2536
  %2545 = vst [vmem:[#allocation5] sm:$0xff] %v2543
  %2546 = vst [vmem:[#allocation5 + $0x8] sm:$0xff] %v2544
  %v2547 = vld [vmem:[#allocation6] sm:$0xff]
  %v2548 = vld [vmem:[#allocation6 + $0x8] sm:$0xff]
  %v2549 = vmax.f32 %v2547, %v2535
  %v2550 = vmax.f32 %v2548, %v2536
  %2551 = vst [vmem:[#allocation6] sm:$0xff] %v2549
  %2552 = vst [vmem:[#allocation6 + $0x8] sm:$0xff] %v2550
  %v2553 = vld [vmem:[%s570] sm:$0xff]
  %v2554 = vld [vmem:[%s570 + $0x8] sm:$0xff]
  %v2555 = vld [vmem:[%s570 + $0x10] sm:$0xff]
  %v2556 = vld [vmem:[%s570 + $0x18] sm:$0xff]
  %v2557 = vld [vmem:[%s570 + $0x20] sm:$0xff]
  %v2558 = vld [vmem:[%s570 + $0x28] sm:$0xff]
  %v2559 = vld [vmem:[%s570 + $0x30] sm:$0xff]
  %v2560 = vld [vmem:[%s570 + $0x38] sm:$0xff]
  %v2561 = vld [vmem:[#allocation3] sm:$0xff]
  %v2562 = vld [vmem:[#allocation3 + $0x8] sm:$0xff]
  %v2563 = vpack.c.bf16 %v2562, %v2561
  %v2564 = vld [vmem:[%s2] sm:$0xff]
  %v2565 = vld [vmem:[%s2 + $0x8] sm:$0xff]
  %v2566 = vld [vmem:[%s2 + $0x10] sm:$0xff]
  %v2567 = vld [vmem:[%s2 + $0x18] sm:$0xff]
  %v2568 = vld [vmem:[%s2 + $0x20] sm:$0xff]
  %v2569 = vld [vmem:[%s2 + $0x28] sm:$0xff]
  %v2570 = vld [vmem:[%s2 + $0x30] sm:$0xff]
  %v2571 = vld [vmem:[%s2 + $0x38] sm:$0xff]
  %v2572 = vld [vmem:[%s2 + $0x40] sm:$0xff]
  %v2573 = vld [vmem:[%s2 + $0x48] sm:$0xff]
  %v2574 = vld [vmem:[%s2 + $0x50] sm:$0xff]
  %v2575 = vld [vmem:[%s2 + $0x58] sm:$0xff]
  %v2576 = vld [vmem:[%s2 + $0x60] sm:$0xff]
  %v2577 = vld [vmem:[%s2 + $0x68] sm:$0xff]
  %v2578 = vld [vmem:[%s2 + $0x70] sm:$0xff]
  %v2579 = vld [vmem:[%s2 + $0x78] sm:$0xff]
  %v2580 = vld [vmem:[%s2 + $0x80] sm:$0xff]
  %v2581 = vld [vmem:[%s2 + $0x88] sm:$0xff]
  %v2582 = vld [vmem:[%s2 + $0x90] sm:$0xff]
  %v2583 = vld [vmem:[%s2 + $0x98] sm:$0xff]
  %v2584 = vld [vmem:[%s2 + $0xa0] sm:$0xff]
  %v2585 = vld [vmem:[%s2 + $0xa8] sm:$0xff]
  %v2586 = vld [vmem:[%s2 + $0xb0] sm:$0xff]
  %v2587 = vld [vmem:[%s2 + $0xb8] sm:$0xff]
  %v2588 = vld [vmem:[%s2 + $0xc0] sm:$0xff]
  %v2589 = vld [vmem:[%s2 + $0xc8] sm:$0xff]
  %v2590 = vld [vmem:[%s2 + $0xd0] sm:$0xff]
  %v2591 = vld [vmem:[%s2 + $0xd8] sm:$0xff]
  %v2592 = vld [vmem:[%s2 + $0xe0] sm:$0xff]
  %v2593 = vld [vmem:[%s2 + $0xe8] sm:$0xff]
  %v2594 = vld [vmem:[%s2 + $0xf0] sm:$0xff]
  %v2595 = vld [vmem:[%s2 + $0xf8] sm:$0xff]
  %v2628 = vunpack.c.l.b16 %v2564
  %v2629 = vunpack.c.h.b16 %v2564
  %v2630 = vunpack.c.l.b16 %v2565
  %v2631 = vunpack.c.h.b16 %v2565
  %v2632 = vunpack.c.l.b16 %v2566
  %v2633 = vunpack.c.h.b16 %v2566
  %v2634 = vunpack.c.l.b16 %v2567
  %v2635 = vunpack.c.h.b16 %v2567
  %v2636 = vunpack.c.l.b16 %v2568
  %v2637 = vunpack.c.h.b16 %v2568
  %v2638 = vunpack.c.l.b16 %v2569
  %v2639 = vunpack.c.h.b16 %v2569
  %v2640 = vunpack.c.l.b16 %v2570
  %v2641 = vunpack.c.h.b16 %v2570
  %v2642 = vunpack.c.l.b16 %v2571
  %v2643 = vunpack.c.h.b16 %v2571
  %v2644 = vunpack.c.l.b16 %v2572
  %v2645 = vunpack.c.h.b16 %v2572
  %v2646 = vunpack.c.l.b16 %v2573
  %v2647 = vunpack.c.h.b16 %v2573
  %v2648 = vunpack.c.l.b16 %v2574
  %v2649 = vunpack.c.h.b16 %v2574
  %v2650 = vunpack.c.l.b16 %v2575
  %v2651 = vunpack.c.h.b16 %v2575
  %v2652 = vunpack.c.l.b16 %v2576
  %v2653 = vunpack.c.h.b16 %v2576
  %v2654 = vunpack.c.l.b16 %v2577
  %v2655 = vunpack.c.h.b16 %v2577
  %v2656 = vunpack.c.l.b16 %v2578
  %v2657 = vunpack.c.h.b16 %v2578
  %v2658 = vunpack.c.l.b16 %v2579
  %v2659 = vunpack.c.h.b16 %v2579
  %v2660 = vunpack.c.l.b16 %v2580
  %v2661 = vunpack.c.h.b16 %v2580
  %v2662 = vunpack.c.l.b16 %v2581
  %v2663 = vunpack.c.h.b16 %v2581
  %v2664 = vunpack.c.l.b16 %v2582
  %v2665 = vunpack.c.h.b16 %v2582
  %v2666 = vunpack.c.l.b16 %v2583
  %v2667 = vunpack.c.h.b16 %v2583
  %v2668 = vunpack.c.l.b16 %v2584
  %v2669 = vunpack.c.h.b16 %v2584
  %v2670 = vunpack.c.l.b16 %v2585
  %v2671 = vunpack.c.h.b16 %v2585
  %v2672 = vunpack.c.l.b16 %v2586
  %v2673 = vunpack.c.h.b16 %v2586
  %v2674 = vunpack.c.l.b16 %v2587
  %v2675 = vunpack.c.h.b16 %v2587
  %v2676 = vunpack.c.l.b16 %v2588
  %v2677 = vunpack.c.h.b16 %v2588
  %v2678 = vunpack.c.l.b16 %v2589
  %v2679 = vunpack.c.h.b16 %v2589
  %v2680 = vunpack.c.l.b16 %v2590
  %v2681 = vunpack.c.h.b16 %v2590
  %v2682 = vunpack.c.l.b16 %v2591
  %v2683 = vunpack.c.h.b16 %v2591
  %v2684 = vunpack.c.l.b16 %v2592
  %v2685 = vunpack.c.h.b16 %v2592
  %v2686 = vunpack.c.l.b16 %v2593
  %v2687 = vunpack.c.h.b16 %v2593
  %v2688 = vunpack.c.l.b16 %v2594
  %v2689 = vunpack.c.h.b16 %v2594
  %v2690 = vunpack.c.l.b16 %v2595
  %v2691 = vunpack.c.h.b16 %v2595
  %v2692 = vpack.c.b16 %v2632, %v2628
  %v2693 = vpack.c.b16 %v2633, %v2629
  %v2694 = vpack.c.b16 %v2634, %v2630
  %v2695 = vpack.c.b16 %v2635, %v2631
  %v2696 = vpack.c.b16 %v2640, %v2636
  %v2697 = vpack.c.b16 %v2641, %v2637
  %v2698 = vpack.c.b16 %v2642, %v2638
  %v2699 = vpack.c.b16 %v2643, %v2639
  %v2700 = vpack.c.b16 %v2648, %v2644
  %v2701 = vpack.c.b16 %v2649, %v2645
  %v2702 = vpack.c.b16 %v2650, %v2646
  %v2703 = vpack.c.b16 %v2651, %v2647
  %v2704 = vpack.c.b16 %v2656, %v2652
  %v2705 = vpack.c.b16 %v2657, %v2653
  %v2706 = vpack.c.b16 %v2658, %v2654
  %v2707 = vpack.c.b16 %v2659, %v2655
  %v2708 = vpack.c.b16 %v2664, %v2660
  %v2709 = vpack.c.b16 %v2665, %v2661
  %v2710 = vpack.c.b16 %v2666, %v2662
  %v2711 = vpack.c.b16 %v2667, %v2663
  %v2712 = vpack.c.b16 %v2672, %v2668
  %v2713 = vpack.c.b16 %v2673, %v2669
  %v2714 = vpack.c.b16 %v2674, %v2670
  %v2715 = vpack.c.b16 %v2675, %v2671
  %v2716 = vpack.c.b16 %v2680, %v2676
  %v2717 = vpack.c.b16 %v2681, %v2677
  %v2718 = vpack.c.b16 %v2682, %v2678
  %v2719 = vpack.c.b16 %v2683, %v2679
  %v2720 = vpack.c.b16 %v2688, %v2684
  %v2721 = vpack.c.b16 %v2689, %v2685
  %v2722 = vpack.c.b16 %v2690, %v2686
  %v2723 = vpack.c.b16 %v2691, %v2687
  %2756 = vmatpush.bf16.msra.mxu0 %v2720
  %2757 = vmatpush.bf16.msra.mxu0 %v2716
  %2758 = vmatpush.bf16.msra.mxu0 %v2712
  %2759 = vmatpush.bf16.msra.mxu0 %v2708
  %2760 = vmatpush.bf16.msra.mxu0 %v2704
  %2761 = vmatpush.bf16.msra.mxu0 %v2700
  %2762 = vmatpush.bf16.msra.mxu0 %v2696
  %2763 = vmatpush.bf16.msra.mxu0 %v2692
  %2764 = vmatmul.bf16.gmra.mxu0 %v2563
  %v2765 = vpop.f32.mrf.mxu0
  %v2766 = vadd.f32 0.0, %v2765
  %v2767 = vpop.f32.mrf.mxu0
  %v2768 = vadd.f32 0.0, %v2767
  %2769 = vdwg.mxu0
  %2770 = vmatpush.bf16.msra.mxu0 %v2721
  %2771 = vmatpush.bf16.msra.mxu0 %v2717
  %2772 = vmatpush.bf16.msra.mxu0 %v2713
  %2773 = vmatpush.bf16.msra.mxu0 %v2709
  %2774 = vmatpush.bf16.msra.mxu0 %v2705
  %2775 = vmatpush.bf16.msra.mxu0 %v2701
  %2776 = vmatpush.bf16.msra.mxu0 %v2697
  %2777 = vmatpush.bf16.msra.mxu0 %v2693
  %2778 = vmatmul.bf16.gmra.mxu0 %v2563
  %v2779 = vpop.f32.mrf.mxu0
  %v2780 = vadd.f32 0.0, %v2779
  %v2781 = vpop.f32.mrf.mxu0
  %v2782 = vadd.f32 0.0, %v2781
  %2783 = vdwg.mxu0
  %2784 = vmatpush.bf16.msra.mxu0 %v2722
  %2785 = vmatpush.bf16.msra.mxu0 %v2718
  %2786 = vmatpush.bf16.msra.mxu0 %v2714
  %2787 = vmatpush.bf16.msra.mxu0 %v2710
  %2788 = vmatpush.bf16.msra.mxu0 %v2706
  %2789 = vmatpush.bf16.msra.mxu0 %v2702
  %2790 = vmatpush.bf16.msra.mxu0 %v2698
  %2791 = vmatpush.bf16.msra.mxu0 %v2694
  %2792 = vmatmul.bf16.gmra.mxu0 %v2563
  %v2793 = vpop.f32.mrf.mxu0
  %v2794 = vadd.f32 0.0, %v2793
  %v2795 = vpop.f32.mrf.mxu0
  %v2796 = vadd.f32 0.0, %v2795
  %2797 = vdwg.mxu0
  %2798 = vmatpush.bf16.msra.mxu0 %v2723
  %2799 = vmatpush.bf16.msra.mxu0 %v2719
  %2800 = vmatpush.bf16.msra.mxu0 %v2715
  %2801 = vmatpush.bf16.msra.mxu0 %v2711
  %2802 = vmatpush.bf16.msra.mxu0 %v2707
  %2803 = vmatpush.bf16.msra.mxu0 %v2703
  %2804 = vmatpush.bf16.msra.mxu0 %v2699
  %2805 = vmatpush.bf16.msra.mxu0 %v2695
  %2806 = vmatmul.bf16.gmra.mxu0 %v2563
  %v2807 = vpop.f32.mrf.mxu0
  %v2808 = vadd.f32 0.0, %v2807
  %v2809 = vpop.f32.mrf.mxu0
  %v2810 = vadd.f32 0.0, %v2809
  %2811 = vdwg.mxu0
  %v2812 = vadd.f32 %v2553, %v2766
  %v2813 = vadd.f32 %v2554, %v2780
  %v2814 = vadd.f32 %v2555, %v2794
  %v2815 = vadd.f32 %v2556, %v2808
  %v2816 = vadd.f32 %v2557, %v2768
  %v2817 = vadd.f32 %v2558, %v2782
  %v2818 = vadd.f32 %v2559, %v2796
  %v2819 = vadd.f32 %v2560, %v2810
  %v2820 = vxor.u32 %v2812, 2147483648
  %v2821 = vxor.u32 %v2816, 2147483648
  %v2822 = vmul.f32 %v2820, 1.442695
  %v2823 = vpow.pop %v2822
  %v2824 = vmul.f32 %v2821, 1.442695
  %v2825 = vpow.pop %v2824
  %v2826 = vadd.f32 %v2823, 1.0
  %v2827 = vadd.f32 %v2825, 1.0
  %v2828 = vrcp.pop %v2826
  %v2829 = vmul.f32 %v2826, %v2828
  %v2830 = vsub.f32 1.0, %v2829
  %v2831 = vmul.f32 %v2828, %v2830
  %v2832 = vadd.f32 %v2828, %v2831
  %vm2833 = vweird.f32 %v2826
  %vm2834 = vweird.f32 %v2828
  %vm2835 = vmor %vm2833, %vm2834
  %v2836 = vsel %vm2835, %v2828, %v2832
  %v2837 = vand.u32 2147483647, %v2826
  %vm2838 = vcmp.eq.f32.partialorder %v2837, 8.507059e+37
  %v2839 = vand.u32 %v2826, 2147483648
  %v2840 = vor.u32 1.1754944e-38, %v2839
  %v2841 = vsel %vm2838, %v2840, %v2836
  %v2842 = vmul.f32 1.0, %v2841
  %v2843 = vrcp.pop %v2827
  %v2844 = vmul.f32 %v2827, %v2843
  %v2845 = vsub.f32 1.0, %v2844
  %v2846 = vmul.f32 %v2843, %v2845
  %v2847 = vadd.f32 %v2843, %v2846
  %vm2848 = vweird.f32 %v2827
  %vm2849 = vweird.f32 %v2843
  %vm2850 = vmor %vm2848, %vm2849
  %v2851 = vsel %vm2850, %v2843, %v2847
  %v2852 = vand.u32 2147483647, %v2827
  %vm2853 = vcmp.eq.f32.partialorder %v2852, 8.507059e+37
  %v2854 = vand.u32 %v2827, 2147483648
  %v2855 = vor.u32 1.1754944e-38, %v2854
  %v2856 = vsel %vm2853, %v2855, %v2851
  %v2857 = vmul.f32 1.0, %v2856
  %v2858 = vxor.u32 %v2813, 2147483648
  %v2859 = vxor.u32 %v2817, 2147483648
  %v2860 = vmul.f32 %v2858, 1.442695
  %v2861 = vpow.pop %v2860
  %v2862 = vmul.f32 %v2859, 1.442695
  %v2863 = vpow.pop %v2862
  %v2864 = vadd.f32 %v2861, 1.0
  %v2865 = vadd.f32 %v2863, 1.0
  %v2866 = vrcp.pop %v2864
  %v2867 = vmul.f32 %v2864, %v2866
  %v2868 = vsub.f32 1.0, %v2867
  %v2869 = vmul.f32 %v2866, %v2868
  %v2870 = vadd.f32 %v2866, %v2869
  %vm2871 = vweird.f32 %v2864
  %vm2872 = vweird.f32 %v2866
  %vm2873 = vmor %vm2871, %vm2872
  %v2874 = vsel %vm2873, %v2866, %v2870
  %v2875 = vand.u32 2147483647, %v2864
  %vm2876 = vcmp.eq.f32.partialorder %v2875, 8.507059e+37
  %v2877 = vand.u32 %v2864, 2147483648
  %v2878 = vor.u32 1.1754944e-38, %v2877
  %v2879 = vsel %vm2876, %v2878, %v2874
  %v2880 = vmul.f32 1.0, %v2879
  %v2881 = vrcp.pop %v2865
  %v2882 = vmul.f32 %v2865, %v2881
  %v2883 = vsub.f32 1.0, %v2882
  %v2884 = vmul.f32 %v2881, %v2883
  %v2885 = vadd.f32 %v2881, %v2884
  %vm2886 = vweird.f32 %v2865
  %vm2887 = vweird.f32 %v2881
  %vm2888 = vmor %vm2886, %vm2887
  %v2889 = vsel %vm2888, %v2881, %v2885
  %v2890 = vand.u32 2147483647, %v2865
  %vm2891 = vcmp.eq.f32.partialorder %v2890, 8.507059e+37
  %v2892 = vand.u32 %v2865, 2147483648
  %v2893 = vor.u32 1.1754944e-38, %v2892
  %v2894 = vsel %vm2891, %v2893, %v2889
  %v2895 = vmul.f32 1.0, %v2894
  %v2896 = vtanh.pop %v2814
  %v2897 = vtanh.pop %v2818
  %v2898 = vxor.u32 %v2815, 2147483648
  %v2899 = vxor.u32 %v2819, 2147483648
  %v2900 = vmul.f32 %v2898, 1.442695
  %v2901 = vpow.pop %v2900
  %v2902 = vmul.f32 %v2899, 1.442695
  %v2903 = vpow.pop %v2902
  %v2904 = vadd.f32 %v2901, 1.0
  %v2905 = vadd.f32 %v2903, 1.0
  %v2906 = vrcp.pop %v2904
  %v2907 = vmul.f32 %v2904, %v2906
  %v2908 = vsub.f32 1.0, %v2907
  %v2909 = vmul.f32 %v2906, %v2908
  %v2910 = vadd.f32 %v2906, %v2909
  %vm2911 = vweird.f32 %v2904
  %vm2912 = vweird.f32 %v2906
  %vm2913 = vmor %vm2911, %vm2912
  %v2914 = vsel %vm2913, %v2906, %v2910
  %v2915 = vand.u32 2147483647, %v2904
  %vm2916 = vcmp.eq.f32.partialorder %v2915, 8.507059e+37
  %v2917 = vand.u32 %v2904, 2147483648
  %v2918 = vor.u32 1.1754944e-38, %v2917
  %v2919 = vsel %vm2916, %v2918, %v2914
  %v2920 = vmul.f32 1.0, %v2919
  %v2921 = vrcp.pop %v2905
  %v2922 = vmul.f32 %v2905, %v2921
  %v2923 = vsub.f32 1.0, %v2922
  %v2924 = vmul.f32 %v2921, %v2923
  %v2925 = vadd.f32 %v2921, %v2924
  %vm2926 = vweird.f32 %v2905
  %vm2927 = vweird.f32 %v2921
  %vm2928 = vmor %vm2926, %vm2927
  %v2929 = vsel %vm2928, %v2921, %v2925
  %v2930 = vand.u32 2147483647, %v2905
  %vm2931 = vcmp.eq.f32.partialorder %v2930, 8.507059e+37
  %v2932 = vand.u32 %v2905, 2147483648
  %v2933 = vor.u32 1.1754944e-38, %v2932
  %v2934 = vsel %vm2931, %v2933, %v2929
  %v2935 = vmul.f32 1.0, %v2934
  %v2936 = vld [vmem:[#allocation4] sm:$0xff]
  %v2937 = vld [vmem:[#allocation4 + $0x8] sm:$0xff]
  %v2938 = vmul.f32 %v2880, %v2936
  %v2939 = vmul.f32 %v2895, %v2937
  %v2940 = vmul.f32 %v2842, %v2896
  %v2941 = vmul.f32 %v2857, %v2897
  %v2942 = vadd.f32 %v2938, %v2940
  %v2943 = vadd.f32 %v2939, %v2941
  %v2944 = vtanh.pop %v2942
  %v2945 = vtanh.pop %v2943
  %v2946 = vmul.f32 %v2920, %v2944
  %v2947 = vmul.f32 %v2935, %v2945
  %2948 = vst [vmem:[#allocation4] sm:$0xff] %v2942
  %2949 = vst [vmem:[#allocation4 + $0x8] sm:$0xff] %v2943
  %2950 = vst [vmem:[#allocation3] sm:$0xff] %v2946
  %2951 = vst [vmem:[#allocation3 + $0x8] sm:$0xff] %v2947
  %v2952 = vld [vmem:[#allocation5] sm:$0xff]
  %v2953 = vld [vmem:[#allocation5 + $0x8] sm:$0xff]
  %v2954 = vadd.f32 %v2952, %v2946
  %v2955 = vadd.f32 %v2953, %v2947
  %2956 = vst [vmem:[#allocation5] sm:$0xff] %v2954
  %2957 = vst [vmem:[#allocation5 + $0x8] sm:$0xff] %v2955
  %v2958 = vld [vmem:[#allocation6] sm:$0xff]
  %v2959 = vld [vmem:[#allocation6 + $0x8] sm:$0xff]
  %v2960 = vmax.f32 %v2958, %v2946
  %v2961 = vmax.f32 %v2959, %v2947
  %2962 = vst [vmem:[#allocation6] sm:$0xff] %v2960
  %2963 = vst [vmem:[#allocation6 + $0x8] sm:$0xff] %v2961
  %v2964 = vld [vmem:[%s680] sm:$0xff]
  %v2965 = vld [vmem:[%s680 + $0x8] sm:$0xff]
  %v2966 = vld [vmem:[%s680 + $0x10] sm:$0xff]
  %v2967 = vld [vmem:[%s680 + $0x18] sm:$0xff]
  %v2968 = vld [vmem:[%s680 + $0x20] sm:$0xff]
  %v2969 = vld [vmem:[%s680 + $0x28] sm:$0xff]
  %v2970 = vld [vmem:[%s680 + $0x30] sm:$0xff]
  %v2971 = vld [vmem:[%s680 + $0x38] sm:$0xff]
  %v2972 = vld [vmem:[#allocation3] sm:$0xff]
  %v2973 = vld [vmem:[#allocation3 + $0x8] sm:$0xff]
  %v2974 = vpack.c.bf16 %v2973, %v2972
  %v2975 = vld [vmem:[%s2] sm:$0xff]
  %v2976 = vld [vmem:[%s2 + $0x8] sm:$0xff]
  %v2977 = vld [vmem:[%s2 + $0x10] sm:$0xff]
  %v2978 = vld [vmem:[%s2 + $0x18] sm:$0xff]
  %v2979 = vld [vmem:[%s2 + $0x20] sm:$0xff]
  %v2980 = vld [vmem:[%s2 + $0x28] sm:$0xff]
  %v2981 = vld [vmem:[%s2 + $0x30] sm:$0xff]
  %v2982 = vld [vmem:[%s2 + $0x38] sm:$0xff]
  %v2983 = vld [vmem:[%s2 + $0x40] sm:$0xff]
  %v2984 = vld [vmem:[%s2 + $0x48] sm:$0xff]
  %v2985 = vld [vmem:[%s2 + $0x50] sm:$0xff]
  %v2986 = vld [vmem:[%s2 + $0x58] sm:$0xff]
  %v2987 = vld [vmem:[%s2 + $0x60] sm:$0xff]
  %v2988 = vld [vmem:[%s2 + $0x68] sm:$0xff]
  %v2989 = vld [vmem:[%s2 + $0x70] sm:$0xff]
  %v2990 = vld [vmem:[%s2 + $0x78] sm:$0xff]
  %v2991 = vld [vmem:[%s2 + $0x80] sm:$0xff]
  %v2992 = vld [vmem:[%s2 + $0x88] sm:$0xff]
  %v2993 = vld [vmem:[%s2 + $0x90] sm:$0xff]
  %v2994 = vld [vmem:[%s2 + $0x98] sm:$0xff]
  %v2995 = vld [vmem:[%s2 + $0xa0] sm:$0xff]
  %v2996 = vld [vmem:[%s2 + $0xa8] sm:$0xff]
  %v2997 = vld [vmem:[%s2 + $0xb0] sm:$0xff]
  %v2998 = vld [vmem:[%s2 + $0xb8] sm:$0xff]
  %v2999 = vld [vmem:[%s2 + $0xc0] sm:$0xff]
  %v3000 = vld [vmem:[%s2 + $0xc8] sm:$0xff]
  %v3001 = vld [vmem:[%s2 + $0xd0] sm:$0xff]
  %v3002 = vld [vmem:[%s2 + $0xd8] sm:$0xff]
  %v3003 = vld [vmem:[%s2 + $0xe0] sm:$0xff]
  %v3004 = vld [vmem:[%s2 + $0xe8] sm:$0xff]
  %v3005 = vld [vmem:[%s2 + $0xf0] sm:$0xff]
  %v3006 = vld [vmem:[%s2 + $0xf8] sm:$0xff]
  %v3039 = vunpack.c.l.b16 %v2975
  %v3040 = vunpack.c.h.b16 %v2975
  %v3041 = vunpack.c.l.b16 %v2976
  %v3042 = vunpack.c.h.b16 %v2976
  %v3043 = vunpack.c.l.b16 %v2977
  %v3044 = vunpack.c.h.b16 %v2977
  %v3045 = vunpack.c.l.b16 %v2978
  %v3046 = vunpack.c.h.b16 %v2978
  %v3047 = vunpack.c.l.b16 %v2979
  %v3048 = vunpack.c.h.b16 %v2979
  %v3049 = vunpack.c.l.b16 %v2980
  %v3050 = vunpack.c.h.b16 %v2980
  %v3051 = vunpack.c.l.b16 %v2981
  %v3052 = vunpack.c.h.b16 %v2981
  %v3053 = vunpack.c.l.b16 %v2982
  %v3054 = vunpack.c.h.b16 %v2982
  %v3055 = vunpack.c.l.b16 %v2983
  %v3056 = vunpack.c.h.b16 %v2983
  %v3057 = vunpack.c.l.b16 %v2984
  %v3058 = vunpack.c.h.b16 %v2984
  %v3059 = vunpack.c.l.b16 %v2985
  %v3060 = vunpack.c.h.b16 %v2985
  %v3061 = vunpack.c.l.b16 %v2986
  %v3062 = vunpack.c.h.b16 %v2986
  %v3063 = vunpack.c.l.b16 %v2987
  %v3064 = vunpack.c.h.b16 %v2987
  %v3065 = vunpack.c.l.b16 %v2988
  %v3066 = vunpack.c.h.b16 %v2988
  %v3067 = vunpack.c.l.b16 %v2989
  %v3068 = vunpack.c.h.b16 %v2989
  %v3069 = vunpack.c.l.b16 %v2990
  %v3070 = vunpack.c.h.b16 %v2990
  %v3071 = vunpack.c.l.b16 %v2991
  %v3072 = vunpack.c.h.b16 %v2991
  %v3073 = vunpack.c.l.b16 %v2992
  %v3074 = vunpack.c.h.b16 %v2992
  %v3075 = vunpack.c.l.b16 %v2993
  %v3076 = vunpack.c.h.b16 %v2993
  %v3077 = vunpack.c.l.b16 %v2994
  %v3078 = vunpack.c.h.b16 %v2994
  %v3079 = vunpack.c.l.b16 %v2995
  %v3080 = vunpack.c.h.b16 %v2995
  %v3081 = vunpack.c.l.b16 %v2996
  %v3082 = vunpack.c.h.b16 %v2996
  %v3083 = vunpack.c.l.b16 %v2997
  %v3084 = vunpack.c.h.b16 %v2997
  %v3085 = vunpack.c.l.b16 %v2998
  %v3086 = vunpack.c.h.b16 %v2998
  %v3087 = vunpack.c.l.b16 %v2999
  %v3088 = vunpack.c.h.b16 %v2999
  %v3089 = vunpack.c.l.b16 %v3000
  %v3090 = vunpack.c.h.b16 %v3000
  %v3091 = vunpack.c.l.b16 %v3001
  %v3092 = vunpack.c.h.b16 %v3001
  %v3093 = vunpack.c.l.b16 %v3002
  %v3094 = vunpack.c.h.b16 %v3002
  %v3095 = vunpack.c.l.b16 %v3003
  %v3096 = vunpack.c.h.b16 %v3003
  %v3097 = vunpack.c.l.b16 %v3004
  %v3098 = vunpack.c.h.b16 %v3004
  %v3099 = vunpack.c.l.b16 %v3005
  %v3100 = vunpack.c.h.b16 %v3005
  %v3101 = vunpack.c.l.b16 %v3006
  %v3102 = vunpack.c.h.b16 %v3006
  %v3103 = vpack.c.b16 %v3043, %v3039
  %v3104 = vpack.c.b16 %v3044, %v3040
  %v3105 = vpack.c.b16 %v3045, %v3041
  %v3106 = vpack.c.b16 %v3046, %v3042
  %v3107 = vpack.c.b16 %v3051, %v3047
  %v3108 = vpack.c.b16 %v3052, %v3048
  %v3109 = vpack.c.b16 %v3053, %v3049
  %v3110 = vpack.c.b16 %v3054, %v3050
  %v3111 = vpack.c.b16 %v3059, %v3055
  %v3112 = vpack.c.b16 %v3060, %v3056
  %v3113 = vpack.c.b16 %v3061, %v3057
  %v3114 = vpack.c.b16 %v3062, %v3058
  %v3115 = vpack.c.b16 %v3067, %v3063
  %v3116 = vpack.c.b16 %v3068, %v3064
  %v3117 = vpack.c.b16 %v3069, %v3065
  %v3118 = vpack.c.b16 %v3070, %v3066
  %v3119 = vpack.c.b16 %v3075, %v3071
  %v3120 = vpack.c.b16 %v3076, %v3072
  %v3121 = vpack.c.b16 %v3077, %v3073
  %v3122 = vpack.c.b16 %v3078, %v3074
  %v3123 = vpack.c.b16 %v3083, %v3079
  %v3124 = vpack.c.b16 %v3084, %v3080
  %v3125 = vpack.c.b16 %v3085, %v3081
  %v3126 = vpack.c.b16 %v3086, %v3082
  %v3127 = vpack.c.b16 %v3091, %v3087
  %v3128 = vpack.c.b16 %v3092, %v3088
  %v3129 = vpack.c.b16 %v3093, %v3089
  %v3130 = vpack.c.b16 %v3094, %v3090
  %v3131 = vpack.c.b16 %v3099, %v3095
  %v3132 = vpack.c.b16 %v3100, %v3096
  %v3133 = vpack.c.b16 %v3101, %v3097
  %v3134 = vpack.c.b16 %v3102, %v3098
  %3167 = vmatpush.bf16.msra.mxu0 %v3131
  %3168 = vmatpush.bf16.msra.mxu0 %v3127
  %3169 = vmatpush.bf16.msra.mxu0 %v3123
  %3170 = vmatpush.bf16.msra.mxu0 %v3119
  %3171 = vmatpush.bf16.msra.mxu0 %v3115
  %3172 = vmatpush.bf16.msra.mxu0 %v3111
  %3173 = vmatpush.bf16.msra.mxu0 %v3107
  %3174 = vmatpush.bf16.msra.mxu0 %v3103
  %3175 = vmatmul.bf16.gmra.mxu0 %v2974
  %v3176 = vpop.f32.mrf.mxu0
  %v3177 = vadd.f32 0.0, %v3176
  %v3178 = vpop.f32.mrf.mxu0
  %v3179 = vadd.f32 0.0, %v3178
  %3180 = vdwg.mxu0
  %3181 = vmatpush.bf16.msra.mxu0 %v3132
  %3182 = vmatpush.bf16.msra.mxu0 %v3128
  %3183 = vmatpush.bf16.msra.mxu0 %v3124
  %3184 = vmatpush.bf16.msra.mxu0 %v3120
  %3185 = vmatpush.bf16.msra.mxu0 %v3116
  %3186 = vmatpush.bf16.msra.mxu0 %v3112
  %3187 = vmatpush.bf16.msra.mxu0 %v3108
  %3188 = vmatpush.bf16.msra.mxu0 %v3104
  %3189 = vmatmul.bf16.gmra.mxu0 %v2974
  %v3190 = vpop.f32.mrf.mxu0
  %v3191 = vadd.f32 0.0, %v3190
  %v3192 = vpop.f32.mrf.mxu0
  %v3193 = vadd.f32 0.0, %v3192
  %3194 = vdwg.mxu0
  %3195 = vmatpush.bf16.msra.mxu0 %v3133
  %3196 = vmatpush.bf16.msra.mxu0 %v3129
  %3197 = vmatpush.bf16.msra.mxu0 %v3125
  %3198 = vmatpush.bf16.msra.mxu0 %v3121
  %3199 = vmatpush.bf16.msra.mxu0 %v3117
  %3200 = vmatpush.bf16.msra.mxu0 %v3113
  %3201 = vmatpush.bf16.msra.mxu0 %v3109
  %3202 = vmatpush.bf16.msra.mxu0 %v3105
  %3203 = vmatmul.bf16.gmra.mxu0 %v2974
  %v3204 = vpop.f32.mrf.mxu0
  %v3205 = vadd.f32 0.0, %v3204
  %v3206 = vpop.f32.mrf.mxu0
  %v3207 = vadd.f32 0.0, %v3206
  %3208 = vdwg.mxu0
  %3209 = vmatpush.bf16.msra.mxu0 %v3134
  %3210 = vmatpush.bf16.msra.mxu0 %v3130
  %3211 = vmatpush.bf16.msra.mxu0 %v3126
  %3212 = vmatpush.bf16.msra.mxu0 %v3122
  %3213 = vmatpush.bf16.msra.mxu0 %v3118
  %3214 = vmatpush.bf16.msra.mxu0 %v3114
  %3215 = vmatpush.bf16.msra.mxu0 %v3110
  %3216 = vmatpush.bf16.msra.mxu0 %v3106
  %3217 = vmatmul.bf16.gmra.mxu0 %v2974
  %v3218 = vpop.f32.mrf.mxu0
  %v3219 = vadd.f32 0.0, %v3218
  %v3220 = vpop.f32.mrf.mxu0
  %v3221 = vadd.f32 0.0, %v3220
  %3222 = vdwg.mxu0
  %v3223 = vadd.f32 %v2964, %v3177
  %v3224 = vadd.f32 %v2965, %v3191
  %v3225 = vadd.f32 %v2966, %v3205
  %v3226 = vadd.f32 %v2967, %v3219
  %v3227 = vadd.f32 %v2968, %v3179
  %v3228 = vadd.f32 %v2969, %v3193
  %v3229 = vadd.f32 %v2970, %v3207
  %v3230 = vadd.f32 %v2971, %v3221
  %v3231 = vxor.u32 %v3223, 2147483648
  %v3232 = vxor.u32 %v3227, 2147483648
  %v3233 = vmul.f32 %v3231, 1.442695
  %v3234 = vpow.pop %v3233
  %v3235 = vmul.f32 %v3232, 1.442695
  %v3236 = vpow.pop %v3235
  %v3237 = vadd.f32 %v3234, 1.0
  %v3238 = vadd.f32 %v3236, 1.0
  %v3239 = vrcp.pop %v3237
  %v3240 = vmul.f32 %v3237, %v3239
  %v3241 = vsub.f32 1.0, %v3240
  %v3242 = vmul.f32 %v3239, %v3241
  %v3243 = vadd.f32 %v3239, %v3242
  %vm3244 = vweird.f32 %v3237
  %vm3245 = vweird.f32 %v3239
  %vm3246 = vmor %vm3244, %vm3245
  %v3247 = vsel %vm3246, %v3239, %v3243
  %v3248 = vand.u32 2147483647, %v3237
  %vm3249 = vcmp.eq.f32.partialorder %v3248, 8.507059e+37
  %v3250 = vand.u32 %v3237, 2147483648
  %v3251 = vor.u32 1.1754944e-38, %v3250
  %v3252 = vsel %vm3249, %v3251, %v3247
  %v3253 = vmul.f32 1.0, %v3252
  %v3254 = vrcp.pop %v3238
  %v3255 = vmul.f32 %v3238, %v3254
  %v3256 = vsub.f32 1.0, %v3255
  %v3257 = vmul.f32 %v3254, %v3256
  %v3258 = vadd.f32 %v3254, %v3257
  %vm3259 = vweird.f32 %v3238
  %vm3260 = vweird.f32 %v3254
  %vm3261 = vmor %vm3259, %vm3260
  %v3262 = vsel %vm3261, %v3254, %v3258
  %v3263 = vand.u32 2147483647, %v3238
  %vm3264 = vcmp.eq.f32.partialorder %v3263, 8.507059e+37
  %v3265 = vand.u32 %v3238, 2147483648
  %v3266 = vor.u32 1.1754944e-38, %v3265
  %v3267 = vsel %vm3264, %v3266, %v3262
  %v3268 = vmul.f32 1.0, %v3267
  %v3269 = vxor.u32 %v3224, 2147483648
  %v3270 = vxor.u32 %v3228, 2147483648
  %v3271 = vmul.f32 %v3269, 1.442695
  %v3272 = vpow.pop %v3271
  %v3273 = vmul.f32 %v3270, 1.442695
  %v3274 = vpow.pop %v3273
  %v3275 = vadd.f32 %v3272, 1.0
  %v3276 = vadd.f32 %v3274, 1.0
  %v3277 = vrcp.pop %v3275
  %v3278 = vmul.f32 %v3275, %v3277
  %v3279 = vsub.f32 1.0, %v3278
  %v3280 = vmul.f32 %v3277, %v3279
  %v3281 = vadd.f32 %v3277, %v3280
  %vm3282 = vweird.f32 %v3275
  %vm3283 = vweird.f32 %v3277
  %vm3284 = vmor %vm3282, %vm3283
  %v3285 = vsel %vm3284, %v3277, %v3281
  %v3286 = vand.u32 2147483647, %v3275
  %vm3287 = vcmp.eq.f32.partialorder %v3286, 8.507059e+37
  %v3288 = vand.u32 %v3275, 2147483648
  %v3289 = vor.u32 1.1754944e-38, %v3288
  %v3290 = vsel %vm3287, %v3289, %v3285
  %v3291 = vmul.f32 1.0, %v3290
  %v3292 = vrcp.pop %v3276
  %v3293 = vmul.f32 %v3276, %v3292
  %v3294 = vsub.f32 1.0, %v3293
  %v3295 = vmul.f32 %v3292, %v3294
  %v3296 = vadd.f32 %v3292, %v3295
  %vm3297 = vweird.f32 %v3276
  %vm3298 = vweird.f32 %v3292
  %vm3299 = vmor %vm3297, %vm3298
  %v3300 = vsel %vm3299, %v3292, %v3296
  %v3301 = vand.u32 2147483647, %v3276
  %vm3302 = vcmp.eq.f32.partialorder %v3301, 8.507059e+37
  %v3303 = vand.u32 %v3276, 2147483648
  %v3304 = vor.u32 1.1754944e-38, %v3303
  %v3305 = vsel %vm3302, %v3304, %v3300
  %v3306 = vmul.f32 1.0, %v3305
  %v3307 = vtanh.pop %v3225
  %v3308 = vtanh.pop %v3229
  %v3309 = vxor.u32 %v3226, 2147483648
  %v3310 = vxor.u32 %v3230, 2147483648
  %v3311 = vmul.f32 %v3309, 1.442695
  %v3312 = vpow.pop %v3311
  %v3313 = vmul.f32 %v3310, 1.442695
  %v3314 = vpow.pop %v3313
  %v3315 = vadd.f32 %v3312, 1.0
  %v3316 = vadd.f32 %v3314, 1.0
  %v3317 = vrcp.pop %v3315
  %v3318 = vmul.f32 %v3315, %v3317
  %v3319 = vsub.f32 1.0, %v3318
  %v3320 = vmul.f32 %v3317, %v3319
  %v3321 = vadd.f32 %v3317, %v3320
  %vm3322 = vweird.f32 %v3315
  %vm3323 = vweird.f32 %v3317
  %vm3324 = vmor %vm3322, %vm3323
  %v3325 = vsel %vm3324, %v3317, %v3321
  %v3326 = vand.u32 2147483647, %v3315
  %vm3327 = vcmp.eq.f32.partialorder %v3326, 8.507059e+37
  %v3328 = vand.u32 %v3315, 2147483648
  %v3329 = vor.u32 1.1754944e-38, %v3328
  %v3330 = vsel %vm3327, %v3329, %v3325
  %v3331 = vmul.f32 1.0, %v3330
  %v3332 = vrcp.pop %v3316
  %v3333 = vmul.f32 %v3316, %v3332
  %v3334 = vsub.f32 1.0, %v3333
  %v3335 = vmul.f32 %v3332, %v3334
  %v3336 = vadd.f32 %v3332, %v3335
  %vm3337 = vweird.f32 %v3316
  %vm3338 = vweird.f32 %v3332
  %vm3339 = vmor %vm3337, %vm3338
  %v3340 = vsel %vm3339, %v3332, %v3336
  %v3341 = vand.u32 2147483647, %v3316
  %vm3342 = vcmp.eq.f32.partialorder %v3341, 8.507059e+37
  %v3343 = vand.u32 %v3316, 2147483648
  %v3344 = vor.u32 1.1754944e-38, %v3343
  %v3345 = vsel %vm3342, %v3344, %v3340
  %v3346 = vmul.f32 1.0, %v3345
  %v3347 = vld [vmem:[#allocation4] sm:$0xff]
  %v3348 = vld [vmem:[#allocation4 + $0x8] sm:$0xff]
  %v3349 = vmul.f32 %v3291, %v3347
  %v3350 = vmul.f32 %v3306, %v3348
  %v3351 = vmul.f32 %v3253, %v3307
  %v3352 = vmul.f32 %v3268, %v3308
  %v3353 = vadd.f32 %v3349, %v3351
  %v3354 = vadd.f32 %v3350, %v3352
  %v3355 = vtanh.pop %v3353
  %v3356 = vtanh.pop %v3354
  %v3357 = vmul.f32 %v3331, %v3355
  %v3358 = vmul.f32 %v3346, %v3356
  %3359 = vst [vmem:[#allocation4] sm:$0xff] %v3353
  %3360 = vst [vmem:[#allocation4 + $0x8] sm:$0xff] %v3354
  %3361 = vst [vmem:[#allocation3] sm:$0xff] %v3357
  %3362 = vst [vmem:[#allocation3 + $0x8] sm:$0xff] %v3358
  %v3363 = vld [vmem:[#allocation5] sm:$0xff]
  %v3364 = vld [vmem:[#allocation5 + $0x8] sm:$0xff]
  %v3365 = vadd.f32 %v3363, %v3357
  %v3366 = vadd.f32 %v3364, %v3358
  %3367 = vst [vmem:[#allocation5] sm:$0xff] %v3365
  %3368 = vst [vmem:[#allocation5 + $0x8] sm:$0xff] %v3366
  %v3369 = vld [vmem:[#allocation6] sm:$0xff]
  %v3370 = vld [vmem:[#allocation6 + $0x8] sm:$0xff]
  %v3371 = vmax.f32 %v3369, %v3357
  %v3372 = vmax.f32 %v3370, %v3358
  %3373 = vst [vmem:[#allocation6] sm:$0xff] %v3371
  %3374 = vst [vmem:[#allocation6 + $0x8] sm:$0xff] %v3372
  %v3375 = vld [vmem:[%s790] sm:$0xff]
  %v3376 = vld [vmem:[%s790 + $0x8] sm:$0xff]
  %v3377 = vld [vmem:[%s790 + $0x10] sm:$0xff]
  %v3378 = vld [vmem:[%s790 + $0x18] sm:$0xff]
  %v3379 = vld [vmem:[%s790 + $0x20] sm:$0xff]
  %v3380 = vld [vmem:[%s790 + $0x28] sm:$0xff]
  %v3381 = vld [vmem:[%s790 + $0x30] sm:$0xff]
  %v3382 = vld [vmem:[%s790 + $0x38] sm:$0xff]
  %v3383 = vld [vmem:[#allocation3] sm:$0xff]
  %v3384 = vld [vmem:[#allocation3 + $0x8] sm:$0xff]
  %v3385 = vpack.c.bf16 %v3384, %v3383
  %v3386 = vld [vmem:[%s2] sm:$0xff]
  %v3387 = vld [vmem:[%s2 + $0x8] sm:$0xff]
  %v3388 = vld [vmem:[%s2 + $0x10] sm:$0xff]
  %v3389 = vld [vmem:[%s2 + $0x18] sm:$0xff]
  %v3390 = vld [vmem:[%s2 + $0x20] sm:$0xff]
  %v3391 = vld [vmem:[%s2 + $0x28] sm:$0xff]
  %v3392 = vld [vmem:[%s2 + $0x30] sm:$0xff]
  %v3393 = vld [vmem:[%s2 + $0x38] sm:$0xff]
  %v3394 = vld [vmem:[%s2 + $0x40] sm:$0xff]
  %v3395 = vld [vmem:[%s2 + $0x48] sm:$0xff]
  %v3396 = vld [vmem:[%s2 + $0x50] sm:$0xff]
  %v3397 = vld [vmem:[%s2 + $0x58] sm:$0xff]
  %v3398 = vld [vmem:[%s2 + $0x60] sm:$0xff]
  %v3399 = vld [vmem:[%s2 + $0x68] sm:$0xff]
  %v3400 = vld [vmem:[%s2 + $0x70] sm:$0xff]
  %v3401 = vld [vmem:[%s2 + $0x78] sm:$0xff]
  %v3402 = vld [vmem:[%s2 + $0x80] sm:$0xff]
  %v3403 = vld [vmem:[%s2 + $0x88] sm:$0xff]
  %v3404 = vld [vmem:[%s2 + $0x90] sm:$0xff]
  %v3405 = vld [vmem:[%s2 + $0x98] sm:$0xff]
  %v3406 = vld [vmem:[%s2 + $0xa0] sm:$0xff]
  %v3407 = vld [vmem:[%s2 + $0xa8] sm:$0xff]
  %v3408 = vld [vmem:[%s2 + $0xb0] sm:$0xff]
  %v3409 = vld [vmem:[%s2 + $0xb8] sm:$0xff]
  %v3410 = vld [vmem:[%s2 + $0xc0] sm:$0xff]
  %v3411 = vld [vmem:[%s2 + $0xc8] sm:$0xff]
  %v3412 = vld [vmem:[%s2 + $0xd0] sm:$0xff]
  %v3413 = vld [vmem:[%s2 + $0xd8] sm:$0xff]
  %v3414 = vld [vmem:[%s2 + $0xe0] sm:$0xff]
  %v3415 = vld [vmem:[%s2 + $0xe8] sm:$0xff]
  %v3416 = vld [vmem:[%s2 + $0xf0] sm:$0xff]
  %v3417 = vld [vmem:[%s2 + $0xf8] sm:$0xff]
  %v3450 = vunpack.c.l.b16 %v3386
  %v3451 = vunpack.c.h.b16 %v3386
  %v3452 = vunpack.c.l.b16 %v3387
  %v3453 = vunpack.c.h.b16 %v3387
  %v3454 = vunpack.c.l.b16 %v3388
  %v3455 = vunpack.c.h.b16 %v3388
  %v3456 = vunpack.c.l.b16 %v3389
  %v3457 = vunpack.c.h.b16 %v3389
  %v3458 = vunpack.c.l.b16 %v3390
  %v3459 = vunpack.c.h.b16 %v3390
  %v3460 = vunpack.c.l.b16 %v3391
  %v3461 = vunpack.c.h.b16 %v3391
  %v3462 = vunpack.c.l.b16 %v3392
  %v3463 = vunpack.c.h.b16 %v3392
  %v3464 = vunpack.c.l.b16 %v3393
  %v3465 = vunpack.c.h.b16 %v3393
  %v3466 = vunpack.c.l.b16 %v3394
  %v3467 = vunpack.c.h.b16 %v3394
  %v3468 = vunpack.c.l.b16 %v3395
  %v3469 = vunpack.c.h.b16 %v3395
  %v3470 = vunpack.c.l.b16 %v3396
  %v3471 = vunpack.c.h.b16 %v3396
  %v3472 = vunpack.c.l.b16 %v3397
  %v3473 = vunpack.c.h.b16 %v3397
  %v3474 = vunpack.c.l.b16 %v3398
  %v3475 = vunpack.c.h.b16 %v3398
  %v3476 = vunpack.c.l.b16 %v3399
  %v3477 = vunpack.c.h.b16 %v3399
  %v3478 = vunpack.c.l.b16 %v3400
  %v3479 = vunpack.c.h.b16 %v3400
  %v3480 = vunpack.c.l.b16 %v3401
  %v3481 = vunpack.c.h.b16 %v3401
  %v3482 = vunpack.c.l.b16 %v3402
  %v3483 = vunpack.c.h.b16 %v3402
  %v3484 = vunpack.c.l.b16 %v3403
  %v3485 = vunpack.c.h.b16 %v3403
  %v3486 = vunpack.c.l.b16 %v3404
  %v3487 = vunpack.c.h.b16 %v3404
  %v3488 = vunpack.c.l.b16 %v3405
  %v3489 = vunpack.c.h.b16 %v3405
  %v3490 = vunpack.c.l.b16 %v3406
  %v3491 = vunpack.c.h.b16 %v3406
  %v3492 = vunpack.c.l.b16 %v3407
  %v3493 = vunpack.c.h.b16 %v3407
  %v3494 = vunpack.c.l.b16 %v3408
  %v3495 = vunpack.c.h.b16 %v3408
  %v3496 = vunpack.c.l.b16 %v3409
  %v3497 = vunpack.c.h.b16 %v3409
  %v3498 = vunpack.c.l.b16 %v3410
  %v3499 = vunpack.c.h.b16 %v3410
  %v3500 = vunpack.c.l.b16 %v3411
  %v3501 = vunpack.c.h.b16 %v3411
  %v3502 = vunpack.c.l.b16 %v3412
  %v3503 = vunpack.c.h.b16 %v3412
  %v3504 = vunpack.c.l.b16 %v3413
  %v3505 = vunpack.c.h.b16 %v3413
  %v3506 = vunpack.c.l.b16 %v3414
  %v3507 = vunpack.c.h.b16 %v3414
  %v3508 = vunpack.c.l.b16 %v3415
  %v3509 = vunpack.c.h.b16 %v3415
  %v3510 = vunpack.c.l.b16 %v3416
  %v3511 = vunpack.c.h.b16 %v3416
  %v3512 = vunpack.c.l.b16 %v3417
  %v3513 = vunpack.c.h.b16 %v3417
  %v3514 = vpack.c.b16 %v3454, %v3450
  %v3515 = vpack.c.b16 %v3455, %v3451
  %v3516 = vpack.c.b16 %v3456, %v3452
  %v3517 = vpack.c.b16 %v3457, %v3453
  %v3518 = vpack.c.b16 %v3462, %v3458
  %v3519 = vpack.c.b16 %v3463, %v3459
  %v3520 = vpack.c.b16 %v3464, %v3460
  %v3521 = vpack.c.b16 %v3465, %v3461
  %v3522 = vpack.c.b16 %v3470, %v3466
  %v3523 = vpack.c.b16 %v3471, %v3467
  %v3524 = vpack.c.b16 %v3472, %v3468
  %v3525 = vpack.c.b16 %v3473, %v3469
  %v3526 = vpack.c.b16 %v3478, %v3474
  %v3527 = vpack.c.b16 %v3479, %v3475
  %v3528 = vpack.c.b16 %v3480, %v3476
  %v3529 = vpack.c.b16 %v3481, %v3477
  %v3530 = vpack.c.b16 %v3486, %v3482
  %v3531 = vpack.c.b16 %v3487, %v3483
  %v3532 = vpack.c.b16 %v3488, %v3484
  %v3533 = vpack.c.b16 %v3489, %v3485
  %v3534 = vpack.c.b16 %v3494, %v3490
  %v3535 = vpack.c.b16 %v3495, %v3491
  %v3536 = vpack.c.b16 %v3496, %v3492
  %v3537 = vpack.c.b16 %v3497, %v3493
  %v3538 = vpack.c.b16 %v3502, %v3498
  %v3539 = vpack.c.b16 %v3503, %v3499
  %v3540 = vpack.c.b16 %v3504, %v3500
  %v3541 = vpack.c.b16 %v3505, %v3501
  %v3542 = vpack.c.b16 %v3510, %v3506
  %v3543 = vpack.c.b16 %v3511, %v3507
  %v3544 = vpack.c.b16 %v3512, %v3508
  %v3545 = vpack.c.b16 %v3513, %v3509
  %3578 = vmatpush.bf16.msra.mxu0 %v3542
  %3579 = vmatpush.bf16.msra.mxu0 %v3538
  %3580 = vmatpush.bf16.msra.mxu0 %v3534
  %3581 = vmatpush.bf16.msra.mxu0 %v3530
  %3582 = vmatpush.bf16.msra.mxu0 %v3526
  %3583 = vmatpush.bf16.msra.mxu0 %v3522
  %3584 = vmatpush.bf16.msra.mxu0 %v3518
  %3585 = vmatpush.bf16.msra.mxu0 %v3514
  %3586 = vmatmul.bf16.gmra.mxu0 %v3385
  %v3587 = vpop.f32.mrf.mxu0
  %v3588 = vadd.f32 0.0, %v3587
  %v3589 = vpop.f32.mrf.mxu0
  %v3590 = vadd.f32 0.0, %v3589
  %3591 = vdwg.mxu0
  %3592 = vmatpush.bf16.msra.mxu0 %v3543
  %3593 = vmatpush.bf16.msra.mxu0 %v3539
  %3594 = vmatpush.bf16.msra.mxu0 %v3535
  %3595 = vmatpush.bf16.msra.mxu0 %v3531
  %3596 = vmatpush.bf16.msra.mxu0 %v3527
  %3597 = vmatpush.bf16.msra.mxu0 %v3523
  %3598 = vmatpush.bf16.msra.mxu0 %v3519
  %3599 = vmatpush.bf16.msra.mxu0 %v3515
  %3600 = vmatmul.bf16.gmra.mxu0 %v3385
  %v3601 = vpop.f32.mrf.mxu0
  %v3602 = vadd.f32 0.0, %v3601
  %v3603 = vpop.f32.mrf.mxu0
  %v3604 = vadd.f32 0.0, %v3603
  %3605 = vdwg.mxu0
  %3606 = vmatpush.bf16.msra.mxu0 %v3544
  %3607 = vmatpush.bf16.msra.mxu0 %v3540
  %3608 = vmatpush.bf16.msra.mxu0 %v3536
  %3609 = vmatpush.bf16.msra.mxu0 %v3532
  %3610 = vmatpush.bf16.msra.mxu0 %v3528
  %3611 = vmatpush.bf16.msra.mxu0 %v3524
  %3612 = vmatpush.bf16.msra.mxu0 %v3520
  %3613 = vmatpush.bf16.msra.mxu0 %v3516
  %3614 = vmatmul.bf16.gmra.mxu0 %v3385
  %v3615 = vpop.f32.mrf.mxu0
  %v3616 = vadd.f32 0.0, %v3615
  %v3617 = vpop.f32.mrf.mxu0
  %v3618 = vadd.f32 0.0, %v3617
  %3619 = vdwg.mxu0
  %3620 = vmatpush.bf16.msra.mxu0 %v3545
  %3621 = vmatpush.bf16.msra.mxu0 %v3541
  %3622 = vmatpush.bf16.msra.mxu0 %v3537
  %3623 = vmatpush.bf16.msra.mxu0 %v3533
  %3624 = vmatpush.bf16.msra.mxu0 %v3529
  %3625 = vmatpush.bf16.msra.mxu0 %v3525
  %3626 = vmatpush.bf16.msra.mxu0 %v3521
  %3627 = vmatpush.bf16.msra.mxu0 %v3517
  %3628 = vmatmul.bf16.gmra.mxu0 %v3385
  %v3629 = vpop.f32.mrf.mxu0
  %v3630 = vadd.f32 0.0, %v3629
  %v3631 = vpop.f32.mrf.mxu0
  %v3632 = vadd.f32 0.0, %v3631
  %3633 = vdwg.mxu0
  %v3634 = vadd.f32 %v3375, %v3588
  %v3635 = vadd.f32 %v3376, %v3602
  %v3636 = vadd.f32 %v3377, %v3616
  %v3637 = vadd.f32 %v3378, %v3630
  %v3638 = vadd.f32 %v3379, %v3590
  %v3639 = vadd.f32 %v3380, %v3604
  %v3640 = vadd.f32 %v3381, %v3618
  %v3641 = vadd.f32 %v3382, %v3632
  %v3642 = vxor.u32 %v3634, 2147483648
  %v3643 = vxor.u32 %v3638, 2147483648
  %v3644 = vmul.f32 %v3642, 1.442695
  %v3645 = vpow.pop %v3644
  %v3646 = vmul.f32 %v3643, 1.442695
  %v3647 = vpow.pop %v3646
  %v3648 = vadd.f32 %v3645, 1.0
  %v3649 = vadd.f32 %v3647, 1.0
  %v3650 = vrcp.pop %v3648
  %v3651 = vmul.f32 %v3648, %v3650
  %v3652 = vsub.f32 1.0, %v3651
  %v3653 = vmul.f32 %v3650, %v3652
  %v3654 = vadd.f32 %v3650, %v3653
  %vm3655 = vweird.f32 %v3648
  %vm3656 = vweird.f32 %v3650
  %vm3657 = vmor %vm3655, %vm3656
  %v3658 = vsel %vm3657, %v3650, %v3654
  %v3659 = vand.u32 2147483647, %v3648
  %vm3660 = vcmp.eq.f32.partialorder %v3659, 8.507059e+37
  %v3661 = vand.u32 %v3648, 2147483648
  %v3662 = vor.u32 1.1754944e-38, %v3661
  %v3663 = vsel %vm3660, %v3662, %v3658
  %v3664 = vmul.f32 1.0, %v3663
  %v3665 = vrcp.pop %v3649
  %v3666 = vmul.f32 %v3649, %v3665
  %v3667 = vsub.f32 1.0, %v3666
  %v3668 = vmul.f32 %v3665, %v3667
  %v3669 = vadd.f32 %v3665, %v3668
  %vm3670 = vweird.f32 %v3649
  %vm3671 = vweird.f32 %v3665
  %vm3672 = vmor %vm3670, %vm3671
  %v3673 = vsel %vm3672, %v3665, %v3669
  %v3674 = vand.u32 2147483647, %v3649
  %vm3675 = vcmp.eq.f32.partialorder %v3674, 8.507059e+37
  %v3676 = vand.u32 %v3649, 2147483648
  %v3677 = vor.u32 1.1754944e-38, %v3676
  %v3678 = vsel %vm3675, %v3677, %v3673
  %v3679 = vmul.f32 1.0, %v3678
  %v3680 = vxor.u32 %v3635, 2147483648
  %v3681 = vxor.u32 %v3639, 2147483648
  %v3682 = vmul.f32 %v3680, 1.442695
  %v3683 = vpow.pop %v3682
  %v3684 = vmul.f32 %v3681, 1.442695
  %v3685 = vpow.pop %v3684
  %v3686 = vadd.f32 %v3683, 1.0
  %v3687 = vadd.f32 %v3685, 1.0
  %v3688 = vrcp.pop %v3686
  %v3689 = vmul.f32 %v3686, %v3688
  %v3690 = vsub.f32 1.0, %v3689
  %v3691 = vmul.f32 %v3688, %v3690
  %v3692 = vadd.f32 %v3688, %v3691
  %vm3693 = vweird.f32 %v3686
  %vm3694 = vweird.f32 %v3688
  %vm3695 = vmor %vm3693, %vm3694
  %v3696 = vsel %vm3695, %v3688, %v3692
  %v3697 = vand.u32 2147483647, %v3686
  %vm3698 = vcmp.eq.f32.partialorder %v3697, 8.507059e+37
  %v3699 = vand.u32 %v3686, 2147483648
  %v3700 = vor.u32 1.1754944e-38, %v3699
  %v3701 = vsel %vm3698, %v3700, %v3696
  %v3702 = vmul.f32 1.0, %v3701
  %v3703 = vrcp.pop %v3687
  %v3704 = vmul.f32 %v3687, %v3703
  %v3705 = vsub.f32 1.0, %v3704
  %v3706 = vmul.f32 %v3703, %v3705
  %v3707 = vadd.f32 %v3703, %v3706
  %vm3708 = vweird.f32 %v3687
  %vm3709 = vweird.f32 %v3703
  %vm3710 = vmor %vm3708, %vm3709
  %v3711 = vsel %vm3710, %v3703, %v3707
  %v3712 = vand.u32 2147483647, %v3687
  %vm3713 = vcmp.eq.f32.partialorder %v3712, 8.507059e+37
  %v3714 = vand.u32 %v3687, 2147483648
  %v3715 = vor.u32 1.1754944e-38, %v3714
  %v3716 = vsel %vm3713, %v3715, %v3711
  %v3717 = vmul.f32 1.0, %v3716
  %v3718 = vtanh.pop %v3636
  %v3719 = vtanh.pop %v3640
  %v3720 = vxor.u32 %v3637, 2147483648
  %v3721 = vxor.u32 %v3641, 2147483648
  %v3722 = vmul.f32 %v3720, 1.442695
  %v3723 = vpow.pop %v3722
  %v3724 = vmul.f32 %v3721, 1.442695
  %v3725 = vpow.pop %v3724
  %v3726 = vadd.f32 %v3723, 1.0
  %v3727 = vadd.f32 %v3725, 1.0
  %v3728 = vrcp.pop %v3726
  %v3729 = vmul.f32 %v3726, %v3728
  %v3730 = vsub.f32 1.0, %v3729
  %v3731 = vmul.f32 %v3728, %v3730
  %v3732 = vadd.f32 %v3728, %v3731
  %vm3733 = vweird.f32 %v3726
  %vm3734 = vweird.f32 %v3728
  %vm3735 = vmor %vm3733, %vm3734
  %v3736 = vsel %vm3735, %v3728, %v3732
  %v3737 = vand.u32 2147483647, %v3726
  %vm3738 = vcmp.eq.f32.partialorder %v3737, 8.507059e+37
  %v3739 = vand.u32 %v3726, 2147483648
  %v3740 = vor.u32 1.1754944e-38, %v3739
  %v3741 = vsel %vm3738, %v3740, %v3736
  %v3742 = vmul.f32 1.0, %v3741
  %v3743 = vrcp.pop %v3727
  %v3744 = vmul.f32 %v3727, %v3743
  %v3745 = vsub.f32 1.0, %v3744
  %v3746 = vmul.f32 %v3743, %v3745
  %v3747 = vadd.f32 %v3743, %v3746
  %vm3748 = vweird.f32 %v3727
  %vm3749 = vweird.f32 %v3743
  %vm3750 = vmor %vm3748, %vm3749
  %v3751 = vsel %vm3750, %v3743, %v3747
  %v3752 = vand.u32 2147483647, %v3727
  %vm3753 = vcmp.eq.f32.partialorder %v3752, 8.507059e+37
  %v3754 = vand.u32 %v3727, 2147483648
  %v3755 = vor.u32 1.1754944e-38, %v3754
  %v3756 = vsel %vm3753, %v3755, %v3751
  %v3757 = vmul.f32 1.0, %v3756
  %v3758 = vld [vmem:[#allocation4] sm:$0xff]
  %v3759 = vld [vmem:[#allocation4 + $0x8] sm:$0xff]
  %v3760 = vmul.f32 %v3702, %v3758
  %v3761 = vmul.f32 %v3717, %v3759
  %v3762 = vmul.f32 %v3664, %v3718
  %v3763 = vmul.f32 %v3679, %v3719
  %v3764 = vadd.f32 %v3760, %v3762
  %v3765 = vadd.f32 %v3761, %v3763
  %v3766 = vtanh.pop %v3764
  %v3767 = vtanh.pop %v3765
  %v3768 = vmul.f32 %v3742, %v3766
  %v3769 = vmul.f32 %v3757, %v3767
  %3770 = vst [vmem:[#allocation4] sm:$0xff] %v3764
  %3771 = vst [vmem:[#allocation4 + $0x8] sm:$0xff] %v3765
  %3772 = vst [vmem:[#allocation3] sm:$0xff] %v3768
  %3773 = vst [vmem:[#allocation3 + $0x8] sm:$0xff] %v3769
  %v3774 = vld [vmem:[#allocation5] sm:$0xff]
  %v3775 = vld [vmem:[#allocation5 + $0x8] sm:$0xff]
  %v3776 = vadd.f32 %v3774, %v3768
  %v3777 = vadd.f32 %v3775, %v3769
  %3778 = vst [vmem:[#allocation5] sm:$0xff] %v3776
  %3779 = vst [vmem:[#allocation5 + $0x8] sm:$0xff] %v3777
  %v3780 = vld [vmem:[#allocation6] sm:$0xff]
  %v3781 = vld [vmem:[#allocation6 + $0x8] sm:$0xff]
  %v3782 = vmax.f32 %v3780, %v3768
  %v3783 = vmax.f32 %v3781, %v3769
  %3784 = vst [vmem:[#allocation6] sm:$0xff] %v3782
  %3785 = vst [vmem:[#allocation6 + $0x8] sm:$0xff] %v3783
  %v3786 = vld [vmem:[%s900] sm:$0xff]
  %v3787 = vld [vmem:[%s900 + $0x8] sm:$0xff]
  %v3788 = vld [vmem:[%s900 + $0x10] sm:$0xff]
  %v3789 = vld [vmem:[%s900 + $0x18] sm:$0xff]
  %v3790 = vld [vmem:[%s900 + $0x20] sm:$0xff]
  %v3791 = vld [vmem:[%s900 + $0x28] sm:$0xff]
  %v3792 = vld [vmem:[%s900 + $0x30] sm:$0xff]
  %v3793 = vld [vmem:[%s900 + $0x38] sm:$0xff]
  %v3794 = vld [vmem:[#allocation3] sm:$0xff]
  %v3795 = vld [vmem:[#allocation3 + $0x8] sm:$0xff]
  %v3796 = vpack.c.bf16 %v3795, %v3794
  %v3797 = vld [vmem:[%s2] sm:$0xff]
  %v3798 = vld [vmem:[%s2 + $0x8] sm:$0xff]
  %v3799 = vld [vmem:[%s2 + $0x10] sm:$0xff]
  %v3800 = vld [vmem:[%s2 + $0x18] sm:$0xff]
  %v3801 = vld [vmem:[%s2 + $0x20] sm:$0xff]
  %v3802 = vld [vmem:[%s2 + $0x28] sm:$0xff]
  %v3803 = vld [vmem:[%s2 + $0x30] sm:$0xff]
  %v3804 = vld [vmem:[%s2 + $0x38] sm:$0xff]
  %v3805 = vld [vmem:[%s2 + $0x40] sm:$0xff]
  %v3806 = vld [vmem:[%s2 + $0x48] sm:$0xff]
  %v3807 = vld [vmem:[%s2 + $0x50] sm:$0xff]
  %v3808 = vld [vmem:[%s2 + $0x58] sm:$0xff]
  %v3809 = vld [vmem:[%s2 + $0x60] sm:$0xff]
  %v3810 = vld [vmem:[%s2 + $0x68] sm:$0xff]
  %v3811 = vld [vmem:[%s2 + $0x70] sm:$0xff]
  %v3812 = vld [vmem:[%s2 + $0x78] sm:$0xff]
  %v3813 = vld [vmem:[%s2 + $0x80] sm:$0xff]
  %v3814 = vld [vmem:[%s2 + $0x88] sm:$0xff]
  %v3815 = vld [vmem:[%s2 + $0x90] sm:$0xff]
  %v3816 = vld [vmem:[%s2 + $0x98] sm:$0xff]
  %v3817 = vld [vmem:[%s2 + $0xa0] sm:$0xff]
  %v3818 = vld [vmem:[%s2 + $0xa8] sm:$0xff]
  %v3819 = vld [vmem:[%s2 + $0xb0] sm:$0xff]
  %v3820 = vld [vmem:[%s2 + $0xb8] sm:$0xff]
  %v3821 = vld [vmem:[%s2 + $0xc0] sm:$0xff]
  %v3822 = vld [vmem:[%s2 + $0xc8] sm:$0xff]
  %v3823 = vld [vmem:[%s2 + $0xd0] sm:$0xff]
  %v3824 = vld [vmem:[%s2 + $0xd8] sm:$0xff]
  %v3825 = vld [vmem:[%s2 + $0xe0] sm:$0xff]
  %v3826 = vld [vmem:[%s2 + $0xe8] sm:$0xff]
  %v3827 = vld [vmem:[%s2 + $0xf0] sm:$0xff]
  %v3828 = vld [vmem:[%s2 + $0xf8] sm:$0xff]
  %v3861 = vunpack.c.l.b16 %v3797
  %v3862 = vunpack.c.h.b16 %v3797
  %v3863 = vunpack.c.l.b16 %v3798
  %v3864 = vunpack.c.h.b16 %v3798
  %v3865 = vunpack.c.l.b16 %v3799
  %v3866 = vunpack.c.h.b16 %v3799
  %v3867 = vunpack.c.l.b16 %v3800
  %v3868 = vunpack.c.h.b16 %v3800
  %v3869 = vunpack.c.l.b16 %v3801
  %v3870 = vunpack.c.h.b16 %v3801
  %v3871 = vunpack.c.l.b16 %v3802
  %v3872 = vunpack.c.h.b16 %v3802
  %v3873 = vunpack.c.l.b16 %v3803
  %v3874 = vunpack.c.h.b16 %v3803
  %v3875 = vunpack.c.l.b16 %v3804
  %v3876 = vunpack.c.h.b16 %v3804
  %v3877 = vunpack.c.l.b16 %v3805
  %v3878 = vunpack.c.h.b16 %v3805
  %v3879 = vunpack.c.l.b16 %v3806
  %v3880 = vunpack.c.h.b16 %v3806
  %v3881 = vunpack.c.l.b16 %v3807
  %v3882 = vunpack.c.h.b16 %v3807
  %v3883 = vunpack.c.l.b16 %v3808
  %v3884 = vunpack.c.h.b16 %v3808
  %v3885 = vunpack.c.l.b16 %v3809
  %v3886 = vunpack.c.h.b16 %v3809
  %v3887 = vunpack.c.l.b16 %v3810
  %v3888 = vunpack.c.h.b16 %v3810
  %v3889 = vunpack.c.l.b16 %v3811
  %v3890 = vunpack.c.h.b16 %v3811
  %v3891 = vunpack.c.l.b16 %v3812
  %v3892 = vunpack.c.h.b16 %v3812
  %v3893 = vunpack.c.l.b16 %v3813
  %v3894 = vunpack.c.h.b16 %v3813
  %v3895 = vunpack.c.l.b16 %v3814
  %v3896 = vunpack.c.h.b16 %v3814
  %v3897 = vunpack.c.l.b16 %v3815
  %v3898 = vunpack.c.h.b16 %v3815
  %v3899 = vunpack.c.l.b16 %v3816
  %v3900 = vunpack.c.h.b16 %v3816
  %v3901 = vunpack.c.l.b16 %v3817
  %v3902 = vunpack.c.h.b16 %v3817
  %v3903 = vunpack.c.l.b16 %v3818
  %v3904 = vunpack.c.h.b16 %v3818
  %v3905 = vunpack.c.l.b16 %v3819
  %v3906 = vunpack.c.h.b16 %v3819
  %v3907 = vunpack.c.l.b16 %v3820
  %v3908 = vunpack.c.h.b16 %v3820
  %v3909 = vunpack.c.l.b16 %v3821
  %v3910 = vunpack.c.h.b16 %v3821
  %v3911 = vunpack.c.l.b16 %v3822
  %v3912 = vunpack.c.h.b16 %v3822
  %v3913 = vunpack.c.l.b16 %v3823
  %v3914 = vunpack.c.h.b16 %v3823
  %v3915 = vunpack.c.l.b16 %v3824
  %v3916 = vunpack.c.h.b16 %v3824
  %v3917 = vunpack.c.l.b16 %v3825
  %v3918 = vunpack.c.h.b16 %v3825
  %v3919 = vunpack.c.l.b16 %v3826
  %v3920 = vunpack.c.h.b16 %v3826
  %v3921 = vunpack.c.l.b16 %v3827
  %v3922 = vunpack.c.h.b16 %v3827
  %v3923 = vunpack.c.l.b16 %v3828
  %v3924 = vunpack.c.h.b16 %v3828
  %v3925 = vpack.c.b16 %v3865, %v3861
  %v3926 = vpack.c.b16 %v3866, %v3862
  %v3927 = vpack.c.b16 %v3867, %v3863
  %v3928 = vpack.c.b16 %v3868, %v3864
  %v3929 = vpack.c.b16 %v3873, %v3869
  %v3930 = vpack.c.b16 %v3874, %v3870
  %v3931 = vpack.c.b16 %v3875, %v3871
  %v3932 = vpack.c.b16 %v3876, %v3872
  %v3933 = vpack.c.b16 %v3881, %v3877
  %v3934 = vpack.c.b16 %v3882, %v3878
  %v3935 = vpack.c.b16 %v3883, %v3879
  %v3936 = vpack.c.b16 %v3884, %v3880
  %v3937 = vpack.c.b16 %v3889, %v3885
  %v3938 = vpack.c.b16 %v3890, %v3886
  %v3939 = vpack.c.b16 %v3891, %v3887
  %v3940 = vpack.c.b16 %v3892, %v3888
  %v3941 = vpack.c.b16 %v3897, %v3893
  %v3942 = vpack.c.b16 %v3898, %v3894
  %v3943 = vpack.c.b16 %v3899, %v3895
  %v3944 = vpack.c.b16 %v3900, %v3896
  %v3945 = vpack.c.b16 %v3905, %v3901
  %v3946 = vpack.c.b16 %v3906, %v3902
  %v3947 = vpack.c.b16 %v3907, %v3903
  %v3948 = vpack.c.b16 %v3908, %v3904
  %v3949 = vpack.c.b16 %v3913, %v3909
  %v3950 = vpack.c.b16 %v3914, %v3910
  %v3951 = vpack.c.b16 %v3915, %v3911
  %v3952 = vpack.c.b16 %v3916, %v3912
  %v3953 = vpack.c.b16 %v3921, %v3917
  %v3954 = vpack.c.b16 %v3922, %v3918
  %v3955 = vpack.c.b16 %v3923, %v3919
  %v3956 = vpack.c.b16 %v3924, %v3920
  %3989 = vmatpush.bf16.msra.mxu0 %v3953
  %3990 = vmatpush.bf16.msra.mxu0 %v3949
  %3991 = vmatpush.bf16.msra.mxu0 %v3945
  %3992 = vmatpush.bf16.msra.mxu0 %v3941
  %3993 = vmatpush.bf16.msra.mxu0 %v3937
  %3994 = vmatpush.bf16.msra.mxu0 %v3933
  %3995 = vmatpush.bf16.msra.mxu0 %v3929
  %3996 = vmatpush.bf16.msra.mxu0 %v3925
  %3997 = vmatmul.bf16.gmra.mxu0 %v3796
  %v3998 = vpop.f32.mrf.mxu0
  %v3999 = vadd.f32 0.0, %v3998
  %v4000 = vpop.f32.mrf.mxu0
  %v4001 = vadd.f32 0.0, %v4000
  %4002 = vdwg.mxu0
  %4003 = vmatpush.bf16.msra.mxu0 %v3954
  %4004 = vmatpush.bf16.msra.mxu0 %v3950
  %4005 = vmatpush.bf16.msra.mxu0 %v3946
  %4006 = vmatpush.bf16.msra.mxu0 %v3942
  %4007 = vmatpush.bf16.msra.mxu0 %v3938
  %4008 = vmatpush.bf16.msra.mxu0 %v3934
  %4009 = vmatpush.bf16.msra.mxu0 %v3930
  %4010 = vmatpush.bf16.msra.mxu0 %v3926
  %4011 = vmatmul.bf16.gmra.mxu0 %v3796
  %v4012 = vpop.f32.mrf.mxu0
  %v4013 = vadd.f32 0.0, %v4012
  %v4014 = vpop.f32.mrf.mxu0
  %v4015 = vadd.f32 0.0, %v4014
  %4016 = vdwg.mxu0
  %4017 = vmatpush.bf16.msra.mxu0 %v3955
  %4018 = vmatpush.bf16.msra.mxu0 %v3951
  %4019 = vmatpush.bf16.msra.mxu0 %v3947
  %4020 = vmatpush.bf16.msra.mxu0 %v3943
  %4021 = vmatpush.bf16.msra.mxu0 %v3939
  %4022 = vmatpush.bf16.msra.mxu0 %v3935
  %4023 = vmatpush.bf16.msra.mxu0 %v3931
  %4024 = vmatpush.bf16.msra.mxu0 %v3927
  %4025 = vmatmul.bf16.gmra.mxu0 %v3796
  %v4026 = vpop.f32.mrf.mxu0
  %v4027 = vadd.f32 0.0, %v4026
  %v4028 = vpop.f32.mrf.mxu0
  %v4029 = vadd.f32 0.0, %v4028
  %4030 = vdwg.mxu0
  %4031 = vmatpush.bf16.msra.mxu0 %v3956
  %4032 = vmatpush.bf16.msra.mxu0 %v3952
  %4033 = vmatpush.bf16.msra.mxu0 %v3948
  %4034 = vmatpush.bf16.msra.mxu0 %v3944
  %4035 = vmatpush.bf16.msra.mxu0 %v3940
  %4036 = vmatpush.bf16.msra.mxu0 %v3936
  %4037 = vmatpush.bf16.msra.mxu0 %v3932
  %4038 = vmatpush.bf16.msra.mxu0 %v3928
  %4039 = vmatmul.bf16.gmra.mxu0 %v3796
  %v4040 = vpop.f32.mrf.mxu0
  %v4041 = vadd.f32 0.0, %v4040
  %v4042 = vpop.f32.mrf.mxu0
  %v4043 = vadd.f32 0.0, %v4042
  %4044 = vdwg.mxu0
  %v4045 = vadd.f32 %v3786, %v3999
  %v4046 = vadd.f32 %v3787, %v4013
  %v4047 = vadd.f32 %v3788, %v4027
  %v4048 = vadd.f32 %v3789, %v4041
  %v4049 = vadd.f32 %v3790, %v4001
  %v4050 = vadd.f32 %v3791, %v4015
  %v4051 = vadd.f32 %v3792, %v4029
  %v4052 = vadd.f32 %v3793, %v4043
  %v4053 = vxor.u32 %v4045, 2147483648
  %v4054 = vxor.u32 %v4049, 2147483648
  %v4055 = vmul.f32 %v4053, 1.442695
  %v4056 = vpow.pop %v4055
  %v4057 = vmul.f32 %v4054, 1.442695
  %v4058 = vpow.pop %v4057
  %v4059 = vadd.f32 %v4056, 1.0
  %v4060 = vadd.f32 %v4058, 1.0
  %v4061 = vrcp.pop %v4059
  %v4062 = vmul.f32 %v4059, %v4061
  %v4063 = vsub.f32 1.0, %v4062
  %v4064 = vmul.f32 %v4061, %v4063
  %v4065 = vadd.f32 %v4061, %v4064
  %vm4066 = vweird.f32 %v4059
  %vm4067 = vweird.f32 %v4061
  %vm4068 = vmor %vm4066, %vm4067
  %v4069 = vsel %vm4068, %v4061, %v4065
  %v4070 = vand.u32 2147483647, %v4059
  %vm4071 = vcmp.eq.f32.partialorder %v4070, 8.507059e+37
  %v4072 = vand.u32 %v4059, 2147483648
  %v4073 = vor.u32 1.1754944e-38, %v4072
  %v4074 = vsel %vm4071, %v4073, %v4069
  %v4075 = vmul.f32 1.0, %v4074
  %v4076 = vrcp.pop %v4060
  %v4077 = vmul.f32 %v4060, %v4076
  %v4078 = vsub.f32 1.0, %v4077
  %v4079 = vmul.f32 %v4076, %v4078
  %v4080 = vadd.f32 %v4076, %v4079
  %vm4081 = vweird.f32 %v4060
  %vm4082 = vweird.f32 %v4076
  %vm4083 = vmor %vm4081, %vm4082
  %v4084 = vsel %vm4083, %v4076, %v4080
  %v4085 = vand.u32 2147483647, %v4060
  %vm4086 = vcmp.eq.f32.partialorder %v4085, 8.507059e+37
  %v4087 = vand.u32 %v4060, 2147483648
  %v4088 = vor.u32 1.1754944e-38, %v4087
  %v4089 = vsel %vm4086, %v4088, %v4084
  %v4090 = vmul.f32 1.0, %v4089
  %v4091 = vxor.u32 %v4046, 2147483648
  %v4092 = vxor.u32 %v4050, 2147483648
  %v4093 = vmul.f32 %v4091, 1.442695
  %v4094 = vpow.pop %v4093
  %v4095 = vmul.f32 %v4092, 1.442695
  %v4096 = vpow.pop %v4095
  %v4097 = vadd.f32 %v4094, 1.0
  %v4098 = vadd.f32 %v4096, 1.0
  %v4099 = vrcp.pop %v4097
  %v4100 = vmul.f32 %v4097, %v4099
  %v4101 = vsub.f32 1.0, %v4100
  %v4102 = vmul.f32 %v4099, %v4101
  %v4103 = vadd.f32 %v4099, %v4102
  %vm4104 = vweird.f32 %v4097
  %vm4105 = vweird.f32 %v4099
  %vm4106 = vmor %vm4104, %vm4105
  %v4107 = vsel %vm4106, %v4099, %v4103
  %v4108 = vand.u32 2147483647, %v4097
  %vm4109 = vcmp.eq.f32.partialorder %v4108, 8.507059e+37
  %v4110 = vand.u32 %v4097, 2147483648
  %v4111 = vor.u32 1.1754944e-38, %v4110
  %v4112 = vsel %vm4109, %v4111, %v4107
  %v4113 = vmul.f32 1.0, %v4112
  %v4114 = vrcp.pop %v4098
  %v4115 = vmul.f32 %v4098, %v4114
  %v4116 = vsub.f32 1.0, %v4115
  %v4117 = vmul.f32 %v4114, %v4116
  %v4118 = vadd.f32 %v4114, %v4117
  %vm4119 = vweird.f32 %v4098
  %vm4120 = vweird.f32 %v4114
  %vm4121 = vmor %vm4119, %vm4120
  %v4122 = vsel %vm4121, %v4114, %v4118
  %v4123 = vand.u32 2147483647, %v4098
  %vm4124 = vcmp.eq.f32.partialorder %v4123, 8.507059e+37
  %v4125 = vand.u32 %v4098, 2147483648
  %v4126 = vor.u32 1.1754944e-38, %v4125
  %v4127 = vsel %vm4124, %v4126, %v4122
  %v4128 = vmul.f32 1.0, %v4127
  %v4129 = vtanh.pop %v4047
  %v4130 = vtanh.pop %v4051
  %v4131 = vxor.u32 %v4048, 2147483648
  %v4132 = vxor.u32 %v4052, 2147483648
  %v4133 = vmul.f32 %v4131, 1.442695
  %v4134 = vpow.pop %v4133
  %v4135 = vmul.f32 %v4132, 1.442695
  %v4136 = vpow.pop %v4135
  %v4137 = vadd.f32 %v4134, 1.0
  %v4138 = vadd.f32 %v4136, 1.0
  %v4139 = vrcp.pop %v4137
  %v4140 = vmul.f32 %v4137, %v4139
  %v4141 = vsub.f32 1.0, %v4140
  %v4142 = vmul.f32 %v4139, %v4141
  %v4143 = vadd.f32 %v4139, %v4142
  %vm4144 = vweird.f32 %v4137
  %vm4145 = vweird.f32 %v4139
  %vm4146 = vmor %vm4144, %vm4145
  %v4147 = vsel %vm4146, %v4139, %v4143
  %v4148 = vand.u32 2147483647, %v4137
  %vm4149 = vcmp.eq.f32.partialorder %v4148, 8.507059e+37
  %v4150 = vand.u32 %v4137, 2147483648
  %v4151 = vor.u32 1.1754944e-38, %v4150
  %v4152 = vsel %vm4149, %v4151, %v4147
  %v4153 = vmul.f32 1.0, %v4152
  %v4154 = vrcp.pop %v4138
  %v4155 = vmul.f32 %v4138, %v4154
  %v4156 = vsub.f32 1.0, %v4155
  %v4157 = vmul.f32 %v4154, %v4156
  %v4158 = vadd.f32 %v4154, %v4157
  %vm4159 = vweird.f32 %v4138
  %vm4160 = vweird.f32 %v4154
  %vm4161 = vmor %vm4159, %vm4160
  %v4162 = vsel %vm4161, %v4154, %v4158
  %v4163 = vand.u32 2147483647, %v4138
  %vm4164 = vcmp.eq.f32.partialorder %v4163, 8.507059e+37
  %v4165 = vand.u32 %v4138, 2147483648
  %v4166 = vor.u32 1.1754944e-38, %v4165
  %v4167 = vsel %vm4164, %v4166, %v4162
  %v4168 = vmul.f32 1.0, %v4167
  %v4169 = vld [vmem:[#allocation4] sm:$0xff]
  %v4170 = vld [vmem:[#allocation4 + $0x8] sm:$0xff]
  %v4171 = vmul.f32 %v4113, %v4169
  %v4172 = vmul.f32 %v4128, %v4170
  %v4173 = vmul.f32 %v4075, %v4129
  %v4174 = vmul.f32 %v4090, %v4130
  %v4175 = vadd.f32 %v4171, %v4173
  %v4176 = vadd.f32 %v4172, %v4174
  %v4177 = vtanh.pop %v4175
  %v4178 = vtanh.pop %v4176
  %v4179 = vmul.f32 %v4153, %v4177
  %v4180 = vmul.f32 %v4168, %v4178
  %4181 = vst [vmem:[#allocation4] sm:$0xff] %v4175
  %4182 = vst [vmem:[#allocation4 + $0x8] sm:$0xff] %v4176
  %4183 = vst [vmem:[#allocation3] sm:$0xff] %v4179
  %4184 = vst [vmem:[#allocation3 + $0x8] sm:$0xff] %v4180
  %v4185 = vld [vmem:[#allocation5] sm:$0xff]
  %v4186 = vld [vmem:[#allocation5 + $0x8] sm:$0xff]
  %v4187 = vadd.f32 %v4185, %v4179
  %v4188 = vadd.f32 %v4186, %v4180
  %4189 = vst [vmem:[#allocation5] sm:$0xff] %v4187
  %4190 = vst [vmem:[#allocation5 + $0x8] sm:$0xff] %v4188
  %v4191 = vld [vmem:[#allocation6] sm:$0xff]
  %v4192 = vld [vmem:[#allocation6 + $0x8] sm:$0xff]
  %v4193 = vmax.f32 %v4191, %v4179
  %v4194 = vmax.f32 %v4192, %v4180
  %4195 = vst [vmem:[#allocation6] sm:$0xff] %v4193
  %4196 = vst [vmem:[#allocation6 + $0x8] sm:$0xff] %v4194
  // Predicated region
  $region22: #{forward.4} parent=0 // pred_check
    %p4197 = pneg %p18
  $region23: #{forward.4} parent=0 // pred_check_branch
    %4199 = sbr.rel (%p4197) target = $region25
  $region24: #{forward.4} parent=0 // pred_region
    %v4200 = vld [vmem:[#allocation5] sm:$0xff]
    %v4201 = vld [vmem:[#allocation5 + $0x8] sm:$0xff]
    %v4202 = vmul.f32 %v4200, 0.125
    %v4203 = vmul.f32 %v4201, 0.125
    %4204 = vst [vmem:[%s4] sm:$0xff] %v4202
    %4205 = vst [vmem:[%s4 + $0x10] sm:$0xff] %v4203
    %v4206 = vld [vmem:[#allocation6] sm:$0xff]
    %v4207 = vld [vmem:[#allocation6 + $0x8] sm:$0xff]
    %4208 = vst [vmem:[%s4 + $0x8] sm:$0xff] %v4206
    %4209 = vst [vmem:[%s4 + $0x18] sm:$0xff] %v4207
  $region25: #{forward.4} parent=0 // pred_fallthru
    _
  // Predicated region
  $region26: #{forward.4} parent=0 // pred_check
    _
  $region27: #{forward.4} parent=0 // pred_check_branch
    %4211 = sbr.rel (0) target = $region29
  $region28: #{forward.4} parent=0 // pred_region
    _
  $region29: #{forward.4} parent=0 // pred_fallthru
    _
  // Predicated region
  $region30: #{forward.4} parent=0 // pred_check
    _
  $region31: #{forward.4} parent=0 // pred_check_branch
    %4213 = sbr.rel (0) target = $region33
  $region32: #{forward.4} parent=0 // pred_region
    _
  $region33: #{forward.4} parent=0 // pred_fallthru
    _

</llo_original>
